<compile_context>
chip_gen: v6e
topology: v6e:2x2x1
jax: 0.10.0
libtpu: 0.0.40
codegen_flags: <defaults>
</compile_context>

<pallas_src>
import math
import numpy as np
import jax
import jax.numpy as jnp
from jax import lax
from jax.experimental import pallas as pl
from jax.experimental.pallas import tpu as pltpu

F32 = jnp.float32


# --------------------------------------------------------------------------
# Stage 1: per-(b,t) TCN (both conv layers folded to dense matmuls) +
#          kernel^T projection + dim_reduce.  Grid over BT, "parallel".
# --------------------------------------------------------------------------

def _tcn_dimreduce_kernel(x_ref, a_ref, w1_ref, sh1_ref, w2_ref, sh2_ref,
                          kT_ref, kp_ref, kpT_ref, out_ref):
    # conv1 (+BN+ReLU): im2col/stride and BN scale folded into w1exp at init.
    h1 = jnp.maximum(
        jnp.dot(x_ref[...], w1_ref[...], preferred_element_type=jnp.float32)
        + sh1_ref[...], 0.0)                                    # (V, L1*8)
    # conv2 (+BN+ReLU): same folding.
    h2 = jnp.maximum(
        jnp.dot(h1, w2_ref[...], preferred_element_type=jnp.float32)
        + sh2_ref[...], 0.0)                                    # (V, L2*16)
    # feature_t = K^T @ tcn(feature_t)
    feat = jnp.dot(kT_ref[...], h2, preferred_element_type=jnp.float32)   # (R, F)
    # dim_reduce: relu(K)^T @ (A @ relu(K))
    af = jnp.dot(a_ref[...], kp_ref[...], preferred_element_type=jnp.float32)   # (V, R)
    ared = jnp.dot(kpT_ref[...], af, preferred_element_type=jnp.float32)        # (R, R)
    # Single lane-packed store: [feat | ared]  -> (R, F + R)
    out_ref[...] = jnp.concatenate([feat, ared], axis=1)


def tcn_dimreduce(x2d, a2d, kT, kp, kpT, p, *, BT, V, T, R):
    fdim = p['w2exp'].shape[1]
    return pl.pallas_call(
        _tcn_dimreduce_kernel,
        out_shape=jax.ShapeDtypeStruct((BT * R, fdim + R), F32),
        grid=(BT,),
        in_specs=[
            pl.BlockSpec((V, T), lambda i: (i, 0)),
            pl.BlockSpec((V, V), lambda i: (i, 0)),
            pl.BlockSpec(p['w1exp'].shape, lambda i: (0, 0)),
            pl.BlockSpec(p['shift1f'].shape, lambda i: (0, 0)),
            pl.BlockSpec(p['w2exp'].shape, lambda i: (0, 0)),
            pl.BlockSpec(p['shift2f'].shape, lambda i: (0, 0)),
            pl.BlockSpec(kT.shape, lambda i: (0, 0)),
            pl.BlockSpec(kp.shape, lambda i: (0, 0)),
            pl.BlockSpec(kpT.shape, lambda i: (0, 0)),
        ],
        out_specs=pl.BlockSpec((R, fdim + R), lambda i: (i, 0)),
        compiler_params=pltpu.CompilerParams(
            dimension_semantics=("parallel",)),
    )(x2d, a2d, p['w1exp'], p['shift1f'], p['w2exp'], p['shift2f'], kT, kp, kpT)


# --------------------------------------------------------------------------
# Stages 2 & 3: fused GCN + LSTM chain.  Whole per-batch feature slab is
# VMEM-resident; the time loop runs INSIDE the kernel; h/c are loop carries.
# --------------------------------------------------------------------------

def _make_gcn_lstm_kernel(n_steps, R, Fdim, O, step_row_fn):
    def kernel(fa_ref, h0_ref, c0_ref, gkf_ref, gkh_ref, wg_ref, bg_ref,
               h_out_ref):
        s = pl.program_id(1)          # skip index (0 for the main chain)
        gkf = gkf_ref[...]
        gkh = gkh_ref[...]
        wg = wg_ref[...]
        bg = bg_ref[...]

        def step(j, carry):
            h, c = carry
            row = pl.multiple_of(step_row_fn(s, j), R)
            fa = fa_ref[pl.ds(row, R), :]                        # (R, F+R)
            feat = fa[:, :Fdim]
            ared = fa[:, Fdim:Fdim + R]
            # GCN: concat([feat, h]) @ gcn_k split into two dots (no concat).
            xw = (jnp.dot(feat, gkf, preferred_element_type=jnp.float32)
                  + jnp.dot(h, gkh, preferred_element_type=jnp.float32))
            axw = jnp.dot(ared, xw, preferred_element_type=jnp.float32)
            y = jnp.maximum(axw, 0.0)
            col_mean = jnp.mean(y, axis=0, keepdims=True) + 1e-6
            yn = y * pl.reciprocal(col_mean, approx=True)
            g = jnp.maximum(yn, 0.0) + jnp.log1p(jnp.exp(-jnp.abs(yn)))  # softplus
            gates = jnp.dot(g, wg, preferred_element_type=jnp.float32) + bg
            it = jax.nn.sigmoid(gates[:, 0 * O:1 * O])
            ft = jax.nn.sigmoid(gates[:, 1 * O:2 * O])
            ot = jax.nn.sigmoid(gates[:, 2 * O:3 * O])
            ut = jnp.maximum(gates[:, 3 * O:4 * O], 0.0)
            c_new = ft * c + it * ut
            h_new = ot * jnp.tanh(c_new)
            return h_new, c_new

        h_fin, _ = lax.fori_loop(0, n_steps, step,
                                 (h0_ref[...], c0_ref[...]), unroll=True)
        h_out_ref[...] = h_fin                                   # single store

    return kernel


def run_gcn_lstm_chain(fa, h0_flat, c0_flat, gkf, gkh, wg, bg, *,
                       n_outer, n_inner, n_steps, T_seq, R, Fdim, O,
                       step_row_fn):
    n_chains = n_outer * n_inner
    kernel = _make_gcn_lstm_kernel(n_steps, R, Fdim, O, step_row_fn)
    return pl.pallas_call(
        kernel,
        out_shape=jax.ShapeDtypeStruct((n_chains * R, O), F32),
        grid=(n_outer, n_inner),
        in_specs=[
            pl.BlockSpec((T_seq * R, Fdim + R), lambda b, s: (b, 0)),
            pl.BlockSpec((R, O), lambda b, s: (b * n_inner + s, 0)),
            pl.BlockSpec((R, O), lambda b, s: (b * n_inner + s, 0)),
            pl.BlockSpec(gkf.shape, lambda b, s: (0, 0)),
            pl.BlockSpec(gkh.shape, lambda b, s: (0, 0)),
            pl.BlockSpec(wg.shape, lambda b, s: (0, 0)),
            pl.BlockSpec(bg.shape, lambda b, s: (0, 0)),
        ],
        out_specs=pl.BlockSpec((R, O), lambda b, s: (b * n_inner + s, 0)),
        compiler_params=pltpu.CompilerParams(
            dimension_semantics=("parallel", "parallel")),
    )(fa, h0_flat, c0_flat, gkf, gkh, wg, bg)


# --------------------------------------------------------------------------
# Stage 4: final FC.  The (B,skip,R,O)->(B,R,skip*O) permute of the skip
# states is done via the in_spec + static in-kernel slices (no XLA transpose);
# the fc weight is split so there is no concat of [h_t, h_skip].
# --------------------------------------------------------------------------

def _make_fc_kernel(skip, R, O):
    def kernel(h_ref, hs_ref, wh_ref, ws_ref, b_ref, o_ref):
        acc = (jnp.dot(h_ref[...], wh_ref[...], preferred_element_type=jnp.float32)
               + b_ref[...])
        for s in range(skip):
            acc = acc + jnp.dot(hs_ref[pl.ds(s * R, R), :],
                                ws_ref[pl.ds(s * O, O), :],
                                preferred_element_type=jnp.float32)
        o_ref[...] = acc
    return kernel


def fc_layer(h_main, h_skip_fin, w_h, w_s, b, *, B, skip, R, O):
    return pl.pallas_call(
        _make_fc_kernel(skip, R, O),
        out_shape=jax.ShapeDtypeStruct((B * R, O), F32),
        grid=(B,),
        in_specs=[
            pl.BlockSpec((R, O), lambda i: (i, 0)),
            pl.BlockSpec((skip * R, O), lambda i: (i, 0)),
            pl.BlockSpec(w_h.shape, lambda i: (0, 0)),
            pl.BlockSpec(w_s.shape, lambda i: (0, 0)),
            pl.BlockSpec(b.shape, lambda i: (0, 0)),
        ],
        out_specs=pl.BlockSpec((R, O), lambda i: (i, 0)),
        compiler_params=pltpu.CompilerParams(
            dimension_semantics=("parallel",)),
    )(h_main, h_skip_fin, w_h, w_s, b)


# --------------------------------------------------------------------------
# Layer forward
# --------------------------------------------------------------------------

def layer_forward(X, A, h, c, h_skip, c_skip, p, *, skip):
    B, T_seq, V, T = X.shape
    R = p['kernel'].shape[1]
    O = h.shape[-1]
    Fdim = p['w2exp'].shape[1]
    BT = B * T_seq

    # Hoisted once per forward (tiny; also reused by the loss).
    kT = p['kernel'].T                                           # (R, V)
    kp = jnp.maximum(p['kernel'], 0.0)                           # relu(K) (V, R)
    kpT = kp.T                                                   # (R, V)

    x2d = X.reshape(BT * V, T)
    a2d = A.reshape(BT * V, V)

    # Stage 1: TCN + projection + dim_reduce for all timesteps, grid over BT.
    fa = tcn_dimreduce(x2d, a2d, kT, kp, kpT, p, BT=BT, V=V, T=T, R=R)

    # Stage 2: main GCN-LSTM recurrence (time loop inside the kernel).
    h0 = h.reshape(B * R, O)
    c0 = c.reshape(B * R, O)
    h_main = run_gcn_lstm_chain(
        fa, h0, c0, p['gkf'], p['gkh'], p['Wg'], p['bg'],
        n_outer=B, n_inner=1, n_steps=T_seq, T_seq=T_seq, R=R, Fdim=Fdim, O=O,
        step_row_fn=lambda s, j: j * R)

    # Stage 3: skip GCN-LSTM recurrence (strided timesteps sliced in-kernel).
    num_p = T_seq // skip
    offset = T_seq - num_p * skip
    hs0 = h_skip.reshape(B * skip * R, O)
    cs0 = c_skip.reshape(B * skip * R, O)
    h_skip_fin = run_gcn_lstm_chain(
        fa, hs0, cs0, p['gkf'], p['gkh'], p['Wg_skip'], p['bg_skip'],
        n_outer=B, n_inner=skip, n_steps=num_p, T_seq=T_seq, R=R, Fdim=Fdim,
        O=O, step_row_fn=lambda s, j: (offset + s + j * skip) * R)

    # Stage 4: FC (the PyTorch view/permute/view of h_skip is folded into the
    # in_spec + static in-kernel slices; fc weight split so no concat).
    y = fc_layer(h_main, h_skip_fin, p['fc_w_h'], p['fc_w_s'], p['fc_b'],
                 B=B, skip=skip, R=R, O=O)
    y = y.reshape(B, R, O)
    # nn.Dropout(p=0.5): identity in eval mode.

    # dim_reduce regularization losses (depend only on `kernel`; appended once
    # per timestep in the PyTorch code) -- scalar glue, plain JAX.
    G = kpT @ kp
    dg = jnp.diag(G)
    ortho = 0.2 * jnp.sum(jnp.square(G - jnp.diag(dg)))
    var_loss = 0.3 * jnp.var(dg, ddof=1)
    neg = 0.1 * jnp.sum(jnp.maximum(1e-6 - p['kernel'], 0.0))
    l1 = 0.05 * jnp.sum(jnp.abs(kp))
    loss = T_seq * (ortho + var_loss + neg + l1)
    return y, loss


# --------------------------------------------------------------------------
# Parameter initialization (uniform(-1/sqrt(256), +1/sqrt(256)) for everything,
# mirroring Layer.reset_weigths) + folding of conv/BN/im2col into dense weights.
# --------------------------------------------------------------------------

def init_params(key, V, R, T, H, O, skip):
    stdv = 1.0 / math.sqrt(256)
    keys = list(jax.random.split(key, 32))
    it = iter(keys)

    def u(shape):
        return jax.random.uniform(next(it), shape, F32, minval=-stdv, maxval=stdv)

    K1 = K2 = 7
    L1 = (T - K1) // 2 + 1
    L2 = (L1 - K2) // 2 + 1
    Fdim = 16 * L2

    kernel = u((V, R))
    w1, b1, g1, be1 = u((8, 1, 7)), u((8,)), u((8,)), u((8,))
    w2, b2, g2, be2 = u((16, 8, 7)), u((16,)), u((16,)), u((16,))
    gcn_k = u((Fdim + O, H))
    Wi, Wf, Wo, Wc = u((H, O)), u((H, O)), u((H, O)), u((H, O))
    bi, bf, bo, bc = u((O,)), u((O,)), u((O,)), u((O,))
    Wis, Wfs, Wos, Wcs = u((H, O)), u((H, O)), u((H, O)), u((H, O))
    bis, bfs, bos, bcs = u((O,)), u((O,)), u((O,)), u((O,))
    fc_w, fc_b = u(((skip + 1) * O, O)), u((O,))

    # Eval-mode BatchNorm1d (running mean=0, var=1, eps=1e-5) + conv bias:
    # fold the scale into the conv weights, keep only the shift as an add.
    eps = 1e-5
    s1 = g1 / jnp.sqrt(1.0 + eps)
    s2 = g2 / jnp.sqrt(1.0 + eps)
    sh1 = b1 * s1 + be1
    sh2 = b2 * s2 + be2

    # Fold conv1's im2col + stride into a (T, L1*8) weight: col index = l*8 + c.
    S1 = np.zeros((T, L1, K1), np.float32)
    for l in range(L1):
        for k in range(K1):
            S1[2 * l + k, l, k] = 1.0
    w1exp = jnp.einsum('tlk,ck->tlc', jnp.asarray(S1), w1[:, 0, :]).reshape(T, L1 * 8)
    w1exp = w1exp * jnp.tile(s1, L1).reshape(1, L1 * 8)          # BN scale folded
    shift1f = jnp.tile(sh1, L1).reshape(1, L1 * 8)

    # Fold conv2's im2col + stride into a (L1*8, L2*16) weight:
    # row = j*8 + c, col = l*16 + o, nonzero iff j = 2l + k.
    S2 = np.zeros((L1, L2, K2), np.float32)
    for l in range(L2):
        for k in range(K2):
            S2[2 * l + k, l, k] = 1.0
    w2exp = jnp.einsum('jlk,ock->jclo', jnp.asarray(S2), w2).reshape(L1 * 8, L2 * 16)
    w2exp = w2exp * jnp.tile(s2, L2).reshape(1, L2 * 16)         # BN scale folded
    shift2f = jnp.tile(sh2, L2).reshape(1, L2 * 16)

    # GCN kernel: split into feature / hidden parts; permute the feature rows
    # from PyTorch's channel-major flatten (o*L2 + l) to our position-major
    # layout (l*16 + o) so the numerics match exactly without transposing feats.
    perm = np.array([o * L2 + l for l in range(L2) for o in range(16)], np.int32)
    gkf = gcn_k[:Fdim, :][perm, :]
    gkh = gcn_k[Fdim:, :]

    return dict(
        kernel=kernel,
        w1exp=w1exp, shift1f=shift1f,
        w2exp=w2exp, shift2f=shift2f,
        gkf=gkf, gkh=gkh,
        Wg=jnp.concatenate([Wi, Wf, Wo, Wc], axis=1),            # (H, 4O)
        bg=jnp.concatenate([bi, bf, bo, bc]).reshape(1, 4 * O),
        Wg_skip=jnp.concatenate([Wis, Wfs, Wos, Wcs], axis=1),
        bg_skip=jnp.concatenate([bis, bfs, bos, bcs]).reshape(1, 4 * O),
        fc_w_h=fc_w[:O, :],                                      # (O, O)
        fc_w_s=fc_w[O:, :],                                      # (skip*O, O)
        fc_b=fc_b.reshape(1, O),
    )


# --------------------------------------------------------------------------

if __name__ == "__main__":
    # Small shapes consistent with the module:
    #   B=2, seq=4, num_node=16, T=33  ->  tcn feature dim F = 16*L2 = 64
    #   num_reduce=8, hidden=32, out=16, skip=2
    B, T_seq, V, T = 2, 4, 16, 33
    R, H, O, skip = 8, 32, 16, 2

    key = jax.random.PRNGKey(0)
    k_data, k_params = jax.random.split(key)
    kx, ka, kh, kc, khs, kcs = jax.random.split(k_data, 6)
    X = jax.random.normal(kx, (B, T_seq, V, T), F32)
    A = jax.random.normal(ka, (B, T_seq, V, V), F32)
    h = jax.random.normal(kh, (B, R, O), F32)
    c = jax.random.normal(kc, (B, R, O), F32)
    h_skip = jax.random.normal(khs, (B * skip, R, O), F32)
    c_skip = jax.random.normal(kcs, (B * skip, R, O), F32)

    params = init_params(k_params, V, R, T, H, O, skip)

    fwd = jax.jit(layer_forward, static_argnames=("skip",))
    y, loss = fwd(X, A, h, c, h_skip, c_skip, params, skip=skip)
    jax.block_until_ready((y, loss))
    assert y.shape == (B, R, O)
    assert bool(jnp.all(jnp.isfinite(y))) and bool(jnp.isfinite(loss))
    print("KERNEL_OK")
</pallas_src>

<mosaic_0001>
module attributes {stable_mosaic.version = 11 : i64} {
  func.func @kernel(%arg0: i32, %arg1: memref<8x16xf32, #tpu.memory_space<vmem>>, %arg2: memref<16x16xf32, #tpu.memory_space<vmem>>, %arg3: memref<16x16xf32, #tpu.memory_space<vmem>>, %arg4: memref<32x16xf32, #tpu.memory_space<vmem>>, %arg5: memref<1x16xf32, #tpu.memory_space<vmem>>, %arg6: memref<8x16xf32, #tpu.memory_space<vmem>>) attributes {dimension_semantics = [#tpu.dimension_semantics<parallel>], iteration_bounds = array<i64: 2>, scalar_prefetch = 0 : i64, scratch_operands = 0 : i64, tpu.core_type = #tpu.core_type<tc>, window_params = [{transform_indices = @transform_0, window_bounds = array<i64: 8, 16>}, {transform_indices = @transform_1, window_bounds = array<i64: 16, 16>}, {pipeline_mode = #tpu.pipeline_mode<synchronous>, transform_indices = @transform_2, window_bounds = array<i64: 16, 16>}, {pipeline_mode = #tpu.pipeline_mode<synchronous>, transform_indices = @transform_3, window_bounds = array<i64: 32, 16>}, {pipeline_mode = #tpu.pipeline_mode<synchronous>, transform_indices = @transform_4, window_bounds = array<i64: 1, 16>}, {transform_indices = @transform_5, window_bounds = array<i64: 8, 16>}]} {
    %c0 = arith.constant 0 : index
    %c0_0 = arith.constant 0 : index
    %0 = vector.load %arg1[%c0, %c0_0] : memref<8x16xf32, #tpu.memory_space<vmem>>, vector<8x16xf32>
    %c0_1 = arith.constant 0 : index
    %c0_2 = arith.constant 0 : index
    %1 = vector.load %arg3[%c0_1, %c0_2] : memref<16x16xf32, #tpu.memory_space<vmem>>, vector<16x16xf32>
    %cst = arith.constant dense<0.000000e+00> : vector<8x16xf32>
    %2 = tpu.matmul %0, %1, %cst {dimension_numbers = #tpu.dot_dimension_numbers<[1], [0], [0], [1], [0, 0, 1, 1], [], []>} : vector<8x16xf32>, vector<16x16xf32>, vector<8x16xf32> -> vector<8x16xf32>
    %c0_3 = arith.constant 0 : index
    %c0_4 = arith.constant 0 : index
    %3 = vector.load %arg5[%c0_3, %c0_4] : memref<1x16xf32, #tpu.memory_space<vmem>>, vector<1x16xf32>
    %4 = vector.broadcast %3 : vector<1x16xf32> to vector<8x16xf32>
    %5 = arith.addf %2, %4 : vector<8x16xf32>
    %c0_5 = arith.constant 0 : index
    %c0_6 = arith.constant 0 : index
    %6 = vector.load %arg2[%c0_5, %c0_6] : memref<16x16xf32, #tpu.memory_space<vmem>>, vector<8x16xf32>
    %c0_7 = arith.constant 0 : index
    %c0_8 = arith.constant 0 : index
    %7 = vector.load %arg4[%c0_7, %c0_8] : memref<32x16xf32, #tpu.memory_space<vmem>>, vector<16x16xf32>
    %cst_9 = arith.constant dense<0.000000e+00> : vector<8x16xf32>
    %8 = tpu.matmul %6, %7, %cst_9 {dimension_numbers = #tpu.dot_dimension_numbers<[1], [0], [0], [1], [0, 0, 1, 1], [], []>} : vector<8x16xf32>, vector<16x16xf32>, vector<8x16xf32> -> vector<8x16xf32>
    %9 = arith.addf %5, %8 : vector<8x16xf32>
    %c8 = arith.constant 8 : index
    %c0_10 = arith.constant 0 : index
    %10 = vector.load %arg2[%c8, %c0_10] : memref<16x16xf32, #tpu.memory_space<vmem>>, vector<8x16xf32>
    %c16 = arith.constant 16 : index
    %c0_11 = arith.constant 0 : index
    %11 = vector.load %arg4[%c16, %c0_11] : memref<32x16xf32, #tpu.memory_space<vmem>>, vector<16x16xf32>
    %cst_12 = arith.constant dense<0.000000e+00> : vector<8x16xf32>
    %12 = tpu.matmul %10, %11, %cst_12 {dimension_numbers = #tpu.dot_dimension_numbers<[1], [0], [0], [1], [0, 0, 1, 1], [], []>} : vector<8x16xf32>, vector<16x16xf32>, vector<8x16xf32> -> vector<8x16xf32>
    %13 = arith.addf %9, %12 : vector<8x16xf32>
    %c0_13 = arith.constant 0 : index
    %c0_14 = arith.constant 0 : index
    %14 = vector.load %arg6[%c0_13, %c0_14] : memref<8x16xf32, #tpu.memory_space<vmem>>, vector<8x16xf32>
    tpu.vector_store %arg6[%c0_13, %c0_14], %13 {strides = array<i32>} : memref<8x16xf32, #tpu.memory_space<vmem>>, vector<8x16xf32>,
    return
  }
  func.func @transform_0(%arg0: i32) -> (i32, i32) {
    %c0_i32 = arith.constant 0 : i32
    %c0_i32_0 = arith.constant 0 : i32
    return %arg0, %c0_i32 : i32, i32
  }
  func.func @transform_1(%arg0: i32) -> (i32, i32) {
    %c0_i32 = arith.constant 0 : i32
    %c0_i32_0 = arith.constant 0 : i32
    return %arg0, %c0_i32 : i32, i32
  }
  func.func @transform_2(%arg0: i32) -> (i32, i32) {
    %c0_i32 = arith.constant 0 : i32
    %c0_i32_0 = arith.constant 0 : i32
    %c0_i32_1 = arith.constant 0 : i32
    return %c0_i32, %c0_i32_0 : i32, i32
  }
  func.func @transform_3(%arg0: i32) -> (i32, i32) {
    %c0_i32 = arith.constant 0 : i32
    %c0_i32_0 = arith.constant 0 : i32
    %c0_i32_1 = arith.constant 0 : i32
    return %c0_i32, %c0_i32_0 : i32, i32
  }
  func.func @transform_4(%arg0: i32) -> (i32, i32) {
    %c0_i32 = arith.constant 0 : i32
    %c0_i32_0 = arith.constant 0 : i32
    %c0_i32_1 = arith.constant 0 : i32
    return %c0_i32, %c0_i32_0 : i32, i32
  }
  func.func @transform_5(%arg0: i32) -> (i32, i32) {
    %c0_i32 = arith.constant 0 : i32
    %c0_i32_0 = arith.constant 0 : i32
    return %arg0, %c0_i32 : i32, i32
  }
}

module attributes {stable_mosaic.version = 11 : i64} {
  func.func @_tcn_dimreduce_kernel(%arg0: i32, %arg1: memref<16x33xf32, #tpu.memory_space<vmem>>, %arg2: memref<16x16xf32, #tpu.memory_space<vmem>>, %arg3: memref<33x112xf32, #tpu.memory_space<vmem>>, %arg4: memref<1x112xf32, #tpu.memory_space<vmem>>, %arg5: memref<112x64xf32, #tpu.memory_space<vmem>>, %arg6: memref<1x64xf32, #tpu.memory_space<vmem>>, %arg7: memref<8x16xf32, #tpu.memory_space<vmem>>, %arg8: memref<16x8xf32, #tpu.memory_space<vmem>>, %arg9: memref<8x16xf32, #tpu.memory_space<vmem>>, %arg10: memref<8x72xf32, #tpu.memory_space<vmem>>) attributes {dimension_semantics = [#tpu.dimension_semantics<parallel>], iteration_bounds = array<i64: 8>, scalar_prefetch = 0 : i64, scratch_operands = 0 : i64, tpu.core_type = #tpu.core_type<tc>, window_params = [{transform_indices = @transform_0, window_bounds = array<i64: 16, 33>}, {transform_indices = @transform_1, window_bounds = array<i64: 16, 16>}, {pipeline_mode = #tpu.pipeline_mode<synchronous>, transform_indices = @transform_2, window_bounds = array<i64: 33, 112>}, {pipeline_mode = #tpu.pipeline_mode<synchronous>, transform_indices = @transform_3, window_bounds = array<i64: 1, 112>}, {pipeline_mode = #tpu.pipeline_mode<synchronous>, transform_indices = @transform_4, window_bounds = array<i64: 112, 64>}, {pipeline_mode = #tpu.pipeline_mode<synchronous>, transform_indices = @transform_5, window_bounds = array<i64: 1, 64>}, {pipeline_mode = #tpu.pipeline_mode<synchronous>, transform_indices = @transform_6, window_bounds = array<i64: 8, 16>}, {pipeline_mode = #tpu.pipeline_mode<synchronous>, transform_indices = @transform_7, window_bounds = array<i64: 16, 8>}, {pipeline_mode = #tpu.pipeline_mode<synchronous>, transform_indices = @transform_8, window_bounds = array<i64: 8, 16>}, {transform_indices = @transform_9, window_bounds = array<i64: 8, 72>}]} {
    %c0 = arith.constant 0 : index
    %c0_0 = arith.constant 0 : index
    %0 = vector.load %arg1[%c0, %c0_0] : memref<16x33xf32, #tpu.memory_space<vmem>>, vector<16x33xf32>
    %c0_1 = arith.constant 0 : index
    %c0_2 = arith.constant 0 : index
    %1 = vector.load %arg3[%c0_1, %c0_2] : memref<33x112xf32, #tpu.memory_space<vmem>>, vector<33x112xf32>
    %cst = arith.constant dense<0.000000e+00> : vector<16x112xf32>
    %2 = tpu.matmul %0, %1, %cst {dimension_numbers = #tpu.dot_dimension_numbers<[1], [0], [0], [1], [0, 0, 1, 1], [], []>} : vector<16x33xf32>, vector<33x112xf32>, vector<16x112xf32> -> vector<16x112xf32>
    %c0_3 = arith.constant 0 : index
    %c0_4 = arith.constant 0 : index
    %3 = vector.load %arg4[%c0_3, %c0_4] : memref<1x112xf32, #tpu.memory_space<vmem>>, vector<1x112xf32>
    %4 = vector.broadcast %3 : vector<1x112xf32> to vector<16x112xf32>
    %5 = arith.addf %2, %4 : vector<16x112xf32>
    %cst_5 = arith.constant 0.000000e+00 : f32
    %6 = vector.broadcast %cst_5 : f32 to vector<16x112xf32>
    %7 = arith.maximumf %5, %6 : vector<16x112xf32>
    %c0_6 = arith.constant 0 : index
    %c0_7 = arith.constant 0 : index
    %8 = vector.load %arg5[%c0_6, %c0_7] : memref<112x64xf32, #tpu.memory_space<vmem>>, vector<112x64xf32>
    %cst_8 = arith.constant dense<0.000000e+00> : vector<16x64xf32>
    %9 = tpu.matmul %7, %8, %cst_8 {dimension_numbers = #tpu.dot_dimension_numbers<[1], [0], [0], [1], [0, 0, 1, 1], [], []>} : vector<16x112xf32>, vector<112x64xf32>, vector<16x64xf32> -> vector<16x64xf32>
    %c0_9 = arith.constant 0 : index
    %c0_10 = arith.constant 0 : index
    %10 = vector.load %arg6[%c0_9, %c0_10] : memref<1x64xf32, #tpu.memory_space<vmem>>, vector<1x64xf32>
    %11 = vector.broadcast %10 : vector<1x64xf32> to vector<16x64xf32>
    %12 = arith.addf %9, %11 : vector<16x64xf32>
    %cst_11 = arith.constant 0.000000e+00 : f32
    %13 = vector.broadcast %cst_11 : f32 to vector<16x64xf32>
    %14 = arith.maximumf %12, %13 : vector<16x64xf32>
    %c0_12 = arith.constant 0 : index
    %c0_13 = arith.constant 0 : index
    %15 = vector.load %arg7[%c0_12, %c0_13] : memref<8x16xf32, #tpu.memory_space<vmem>>, vector<8x16xf32>
    %cst_14 = arith.constant dense<0.000000e+00> : vector<8x64xf32>
    %16 = tpu.matmul %15, %14, %cst_14 {dimension_numbers = #tpu.dot_dimension_numbers<[1], [0], [0], [1], [0, 0, 1, 1], [], []>} : vector<8x16xf32>, vector<16x64xf32>, vector<8x64xf32> -> vector<8x64xf32>
    %c0_15 = arith.constant 0 : index
    %c0_16 = arith.constant 0 : index
    %17 = vector.load %arg2[%c0_15, %c0_16] : memref<16x16xf32, #tpu.memory_space<vmem>>, vector<16x16xf32>
    %c0_17 = arith.constant 0 : index
    %c0_18 = arith.constant 0 : index
    %18 = vector.load %arg8[%c0_17, %c0_18] : memref<16x8xf32, #tpu.memory_space<vmem>>, vector<16x8xf32>
    %cst_19 = arith.constant dense<0.000000e+00> : vector<16x8xf32>
    %19 = tpu.matmul %17, %18, %cst_19 {dimension_numbers = #tpu.dot_dimension_numbers<[1], [0], [0], [1], [0, 0, 1, 1], [], []>} : vector<16x16xf32>, vector<16x8xf32>, vector<16x8xf32> -> vector<16x8xf32>
    %c0_20 = arith.constant 0 : index
    %c0_21 = arith.constant 0 : index
    %20 = vector.load %arg9[%c0_20, %c0_21] : memref<8x16xf32, #tpu.memory_space<vmem>>, vector<8x16xf32>
    %cst_22 = arith.constant dense<0.000000e+00> : vector<8x8xf32>
    %21 = tpu.matmul %20, %19, %cst_22 {dimension_numbers = #tpu.dot_dimension_numbers<[1], [0], [0], [1], [0, 0, 1, 1], [], []>} : vector<8x16xf32>, vector<16x8xf32>, vector<8x8xf32> -> vector<8x8xf32>
    %22 = tpu.concatenate %16, %21 in 1 : vector<8x64xf32>, vector<8x8xf32> -> vector<8x72xf32>
    %c0_23 = arith.constant 0 : index
    %c0_24 = arith.constant 0 : index
    %23 = vector.load %arg10[%c0_23, %c0_24] : memref<8x72xf32, #tpu.memory_space<vmem>>, vector<8x72xf32>
    tpu.vector_store %arg10[%c0_23, %c0_24], %22 {strides = array<i32>} : memref<8x72xf32, #tpu.memory_space<vmem>>, vector<8x72xf32>,
    return
  }
  func.func @transform_0(%arg0: i32) -> (i32, i32) {
    %c0_i32 = arith.constant 0 : i32
    %c0_i32_0 = arith.constant 0 : i32
    return %arg0, %c0_i32 : i32, i32
  }
  func.func @transform_1(%arg0: i32) -> (i32, i32) {
    %c0_i32 = arith.constant 0 : i32
    %c0_i32_0 = arith.constant 0 : i32
    return %arg0, %c0_i32 : i32, i32
  }
  func.func @transform_2(%arg0: i32) -> (i32, i32) {
    %c0_i32 = arith.constant 0 : i32
    %c0_i32_0 = arith.constant 0 : i32
    %c0_i32_1 = arith.constant 0 : i32
    return %c0_i32, %c0_i32_0 : i32, i32
  }
  func.func @transform_3(%arg0: i32) -> (i32, i32) {
    %c0_i32 = arith.constant 0 : i32
    %c0_i32_0 = arith.constant 0 : i32
    %c0_i32_1 = arith.constant 0 : i32
    return %c0_i32, %c0_i32_0 : i32, i32
  }
  func.func @transform_4(%arg0: i32) -> (i32, i32) {
    %c0_i32 = arith.constant 0 : i32
    %c0_i32_0 = arith.constant 0 : i32
    %c0_i32_1 = arith.constant 0 : i32
    return %c0_i32, %c0_i32_0 : i32, i32
  }
  func.func @transform_5(%arg0: i32) -> (i32, i32) {
    %c0_i32 = arith.constant 0 : i32
    %c0_i32_0 = arith.constant 0 : i32
    %c0_i32_1 = arith.constant 0 : i32
    return %c0_i32, %c0_i32_0 : i32, i32
  }
  func.func @transform_6(%arg0: i32) -> (i32, i32) {
    %c0_i32 = arith.constant 0 : i32
    %c0_i32_0 = arith.constant 0 : i32
    %c0_i32_1 = arith.constant 0 : i32
    return %c0_i32, %c0_i32_0 : i32, i32
  }
  func.func @transform_7(%arg0: i32) -> (i32, i32) {
    %c0_i32 = arith.constant 0 : i32
    %c0_i32_0 = arith.constant 0 : i32
    %c0_i32_1 = arith.constant 0 : i32
    return %c0_i32, %c0_i32_0 : i32, i32
  }
  func.func @transform_8(%arg0: i32) -> (i32, i32) {
    %c0_i32 = arith.constant 0 : i32
    %c0_i32_0 = arith.constant 0 : i32
    %c0_i32_1 = arith.constant 0 : i32
    return %c0_i32, %c0_i32_0 : i32, i32
  }
  func.func @transform_9(%arg0: i32) -> (i32, i32) {
    %c0_i32 = arith.constant 0 : i32
    %c0_i32_0 = arith.constant 0 : i32
    return %arg0, %c0_i32 : i32, i32
  }
}

module attributes {stable_mosaic.version = 11 : i64} {
  func.func @kernel(%arg0: i32, %arg1: i32, %arg2: memref<32x72xf32, #tpu.memory_space<vmem>>, %arg3: memref<8x16xf32, #tpu.memory_space<vmem>>, %arg4: memref<8x16xf32, #tpu.memory_space<vmem>>, %arg5: memref<64x32xf32, #tpu.memory_space<vmem>>, %arg6: memref<16x32xf32, #tpu.memory_space<vmem>>, %arg7: memref<32x64xf32, #tpu.memory_space<vmem>>, %arg8: memref<1x64xf32, #tpu.memory_space<vmem>>, %arg9: memref<8x16xf32, #tpu.memory_space<vmem>>) attributes {dimension_semantics = [#tpu.dimension_semantics<parallel>, #tpu.dimension_semantics<parallel>], iteration_bounds = array<i64: 2, 2>, scalar_prefetch = 0 : i64, scratch_operands = 0 : i64, tpu.core_type = #tpu.core_type<tc>, window_params = [{transform_indices = @transform_0, window_bounds = array<i64: 32, 72>}, {transform_indices = @transform_1, window_bounds = array<i64: 8, 16>}, {transform_indices = @transform_2, window_bounds = array<i64: 8, 16>}, {pipeline_mode = #tpu.pipeline_mode<synchronous>, transform_indices = @transform_3, window_bounds = array<i64: 64, 32>}, {pipeline_mode = #tpu.pipeline_mode<synchronous>, transform_indices = @transform_4, window_bounds = array<i64: 16, 32>}, {pipeline_mode = #tpu.pipeline_mode<synchronous>, transform_indices = @transform_5, window_bounds = array<i64: 32, 64>}, {pipeline_mode = #tpu.pipeline_mode<synchronous>, transform_indices = @transform_6, window_bounds = array<i64: 1, 64>}, {transform_indices = @transform_7, window_bounds = array<i64: 8, 16>}]} {
    %c0 = arith.constant 0 : index
    %c0_0 = arith.constant 0 : index
    %0 = vector.load %arg5[%c0, %c0_0] : memref<64x32xf32, #tpu.memory_space<vmem>>, vector<64x32xf32>
    %c0_1 = arith.constant 0 : index
    %c0_2 = arith.constant 0 : index
    %1 = vector.load %arg6[%c0_1, %c0_2] : memref<16x32xf32, #tpu.memory_space<vmem>>, vector<16x32xf32>
    %c0_3 = arith.constant 0 : index
    %c0_4 = arith.constant 0 : index
    %2 = vector.load %arg7[%c0_3, %c0_4] : memref<32x64xf32, #tpu.memory_space<vmem>>, vector<32x64xf32>
    %c0_5 = arith.constant 0 : index
    %c0_6 = arith.constant 0 : index
    %3 = vector.load %arg8[%c0_5, %c0_6] : memref<1x64xf32, #tpu.memory_space<vmem>>, vector<1x64xf32>
    %c0_7 = arith.constant 0 : index
    %c0_8 = arith.constant 0 : index
    %4 = vector.load %arg3[%c0_7, %c0_8] : memref<8x16xf32, #tpu.memory_space<vmem>>, vector<8x16xf32>
    %c0_9 = arith.constant 0 : index
    %c0_10 = arith.constant 0 : index
    %5 = vector.load %arg4[%c0_9, %c0_10] : memref<8x16xf32, #tpu.memory_space<vmem>>, vector<8x16xf32>
    %c0_i32 = arith.constant 0 : i32
    %c0_i32_11 = arith.constant 0 : i32
    %6 = arith.addi %c0_i32_11, %arg1 : i32
    %c2_i32 = arith.constant 2 : i32
    %7 = arith.muli %c0_i32, %c2_i32 : i32
    %8 = arith.addi %6, %7 : i32
    %c8_i32 = arith.constant 8 : i32
    %9 = arith.muli %8, %c8_i32 : i32
    %10 = tpu.assume_multiple %9, 8 : i32
    %11 = arith.index_cast %10 : i32 to index
    %c0_12 = arith.constant 0 : index
    %12 = vector.load %arg2[%11, %c0_12] : memref<32x72xf32, #tpu.memory_space<vmem>>, vector<8x72xf32>
    %13 = vector.extract_strided_slice %12 {offsets = [0, 0], sizes = [8, 64], strides = [1, 1]} : vector<8x72xf32> to vector<8x64xf32>
    %14 = vector.extract_strided_slice %12 {offsets = [0, 64], sizes = [8, 8], strides = [1, 1]} : vector<8x72xf32> to vector<8x8xf32>
    %cst = arith.constant dense<0.000000e+00> : vector<8x32xf32>
    %15 = tpu.matmul %13, %0, %cst {dimension_numbers = #tpu.dot_dimension_numbers<[1], [0], [0], [1], [0, 0, 1, 1], [], []>} : vector<8x64xf32>, vector<64x32xf32>, vector<8x32xf32> -> vector<8x32xf32>
    %cst_13 = arith.constant dense<0.000000e+00> : vector<8x32xf32>
    %16 = tpu.matmul %4, %1, %cst_13 {dimension_numbers = #tpu.dot_dimension_numbers<[1], [0], [0], [1], [0, 0, 1, 1], [], []>} : vector<8x16xf32>, vector<16x32xf32>, vector<8x32xf32> -> vector<8x32xf32>
    %17 = arith.addf %15, %16 : vector<8x32xf32>
    %cst_14 = arith.constant dense<0.000000e+00> : vector<8x32xf32>
    %18 = tpu.matmul %14, %17, %cst_14 {dimension_numbers = #tpu.dot_dimension_numbers<[1], [0], [0], [1], [0, 0, 1, 1], [], []>} : vector<8x8xf32>, vector<8x32xf32>, vector<8x32xf32> -> vector<8x32xf32>
    %cst_15 = arith.constant 0.000000e+00 : f32
    %19 = vector.broadcast %cst_15 : f32 to vector<8x32xf32>
    %20 = arith.maximumf %18, %19 : vector<8x32xf32>
    %cst_16 = arith.constant dense<0.000000e+00> : vector<32xf32>
    %21 = vector.multi_reduction <add>, %20, %cst_16 [0] : vector<8x32xf32> to vector<32xf32>
    %22 = vector.shape_cast %21 : vector<32xf32> to vector<1x32xf32>
    %cst_17 = arith.constant 8.000000e+00 : f32
    %23 = vector.broadcast %cst_17 : f32 to vector<1x32xf32>
    %24 = arith.divf %22, %23 : vector<1x32xf32>
    %cst_18 = arith.constant 9.99999997E-7 : f32
    %25 = vector.broadcast %cst_18 : f32 to vector<1x32xf32>
    %26 = arith.addf %24, %25 : vector<1x32xf32>
    %27 = tpu.reciprocal %26 {approx = true} : vector<1x32xf32> -> vector<1x32xf32>
    %28 = vector.broadcast %27 : vector<1x32xf32> to vector<8x32xf32>
    %29 = arith.mulf %20, %28 : vector<8x32xf32>
    %cst_19 = arith.constant 0.000000e+00 : f32
    %30 = vector.broadcast %cst_19 : f32 to vector<8x32xf32>
    %31 = arith.maximumf %29, %30 : vector<8x32xf32>
    %32 = math.absf %29 : vector<8x32xf32>
    %cst_20 = arith.constant 0.000000e+00 : f32
    %33 = vector.broadcast %cst_20 : f32 to vector<8x32xf32>
    %34 = arith.subf %33, %32 : vector<8x32xf32>
    %35 = math.exp %34 : vector<8x32xf32>
    %36 = math.log1p %35 : vector<8x32xf32>
    %37 = arith.addf %31, %36 : vector<8x32xf32>
    %cst_21 = arith.constant dense<0.000000e+00> : vector<8x64xf32>
    %38 = tpu.matmul %37, %2, %cst_21 {dimension_numbers = #tpu.dot_dimension_numbers<[1], [0], [0], [1], [0, 0, 1, 1], [], []>} : vector<8x32xf32>, vector<32x64xf32>, vector<8x64xf32> -> vector<8x64xf32>
    %39 = vector.broadcast %3 : vector<1x64xf32> to vector<8x64xf32>
    %40 = arith.addf %38, %39 : vector<8x64xf32>
    %41 = vector.extract_strided_slice %40 {offsets = [0, 0], sizes = [8, 16], strides = [1, 1]} : vector<8x64xf32> to vector<8x16xf32>
    %42 = arith.negf %41 : vector<8x16xf32>
    %43 = math.exp %42 : vector<8x16xf32>
    %cst_22 = arith.constant 1.000000e+00 : f32
    %44 = vector.broadcast %cst_22 : f32 to vector<8x16xf32>
    %45 = arith.addf %44, %43 : vector<8x16xf32>
    %46 = arith.divf %44, %45 : vector<8x16xf32>
    %47 = vector.extract_strided_slice %40 {offsets = [0, 16], sizes = [8, 16], strides = [1, 1]} : vector<8x64xf32> to vector<8x16xf32>
    %48 = arith.negf %47 : vector<8x16xf32>
    %49 = math.exp %48 : vector<8x16xf32>
    %cst_23 = arith.constant 1.000000e+00 : f32
    %50 = vector.broadcast %cst_23 : f32 to vector<8x16xf32>
    %51 = arith.addf %50, %49 : vector<8x16xf32>
    %52 = arith.divf %50, %51 : vector<8x16xf32>
    %53 = vector.extract_strided_slice %40 {offsets = [0, 32], sizes = [8, 16], strides = [1, 1]} : vector<8x64xf32> to vector<8x16xf32>
    %54 = arith.negf %53 : vector<8x16xf32>
    %55 = math.exp %54 : vector<8x16xf32>
    %cst_24 = arith.constant 1.000000e+00 : f32
    %56 = vector.broadcast %cst_24 : f32 to vector<8x16xf32>
    %57 = arith.addf %56, %55 : vector<8x16xf32>
    %58 = arith.divf %56, %57 : vector<8x16xf32>
    %59 = vector.extract_strided_slice %40 {offsets = [0, 48], sizes = [8, 16], strides = [1, 1]} : vector<8x64xf32> to vector<8x16xf32>
    %cst_25 = arith.constant 0.000000e+00 : f32
    %60 = vector.broadcast %cst_25 : f32 to vector<8x16xf32>
    %61 = arith.maximumf %59, %60 : vector<8x16xf32>
    %62 = arith.mulf %52, %5 : vector<8x16xf32>
    %63 = arith.mulf %46, %61 : vector<8x16xf32>
    %64 = arith.addf %62, %63 : vector<8x16xf32>
    %65 = math.tanh %64 : vector<8x16xf32>
    %66 = arith.mulf %58, %65 : vector<8x16xf32>
    %c1_i32 = arith.constant 1 : i32
    %c0_i32_26 = arith.constant 0 : i32
    %67 = arith.addi %c0_i32_26, %arg1 : i32
    %c2_i32_27 = arith.constant 2 : i32
    %68 = arith.muli %c1_i32, %c2_i32_27 : i32
    %69 = arith.addi %67, %68 : i32
    %c8_i32_28 = arith.constant 8 : i32
    %70 = arith.muli %69, %c8_i32_28 : i32
    %71 = tpu.assume_multiple %70, 8 : i32
    %72 = arith.index_cast %71 : i32 to index
    %c0_29 = arith.constant 0 : index
    %73 = vector.load %arg2[%72, %c0_29] : memref<32x72xf32, #tpu.memory_space<vmem>>, vector<8x72xf32>
    %74 = vector.extract_strided_slice %73 {offsets = [0, 0], sizes = [8, 64], strides = [1, 1]} : vector<8x72xf32> to vector<8x64xf32>
    %75 = vector.extract_strided_slice %73 {offsets = [0, 64], sizes = [8, 8], strides = [1, 1]} : vector<8x72xf32> to vector<8x8xf32>
    %cst_30 = arith.constant dense<0.000000e+00> : vector<8x32xf32>
    %76 = tpu.matmul %74, %0, %cst_30 {dimension_numbers = #tpu.dot_dimension_numbers<[1], [0], [0], [1], [0, 0, 1, 1], [], []>} : vector<8x64xf32>, vector<64x32xf32>, vector<8x32xf32> -> vector<8x32xf32>
    %cst_31 = arith.constant dense<0.000000e+00> : vector<8x32xf32>
    %77 = tpu.matmul %66, %1, %cst_31 {dimension_numbers = #tpu.dot_dimension_numbers<[1], [0], [0], [1], [0, 0, 1, 1], [], []>} : vector<8x16xf32>, vector<16x32xf32>, vector<8x32xf32> -> vector<8x32xf32>
    %78 = arith.addf %76, %77 : vector<8x32xf32>
    %cst_32 = arith.constant dense<0.000000e+00> : vector<8x32xf32>
    %79 = tpu.matmul %75, %78, %cst_32 {dimension_numbers = #tpu.dot_dimension_numbers<[1], [0], [0], [1], [0, 0, 1, 1], [], []>} : vector<8x8xf32>, vector<8x32xf32>, vector<8x32xf32> -> vector<8x32xf32>
    %cst_33 = arith.constant 0.000000e+00 : f32
    %80 = vector.broadcast %cst_33 : f32 to vector<8x32xf32>
    %81 = arith.maximumf %79, %80 : vector<8x32xf32>
    %cst_34 = arith.constant dense<0.000000e+00> : vector<32xf32>
    %82 = vector.multi_reduction <add>, %81, %cst_34 [0] : vector<8x32xf32> to vector<32xf32>
    %83 = vector.shape_cast %82 : vector<32xf32> to vector<1x32xf32>
    %cst_35 = arith.constant 8.000000e+00 : f32
    %84 = vector.broadcast %cst_35 : f32 to vector<1x32xf32>
    %85 = arith.divf %83, %84 : vector<1x32xf32>
    %cst_36 = arith.constant 9.99999997E-7 : f32
    %86 = vector.broadcast %cst_36 : f32 to vector<1x32xf32>
    %87 = arith.addf %85, %86 : vector<1x32xf32>
    %88 = tpu.reciprocal %87 {approx = true} : vector<1x32xf32> -> vector<1x32xf32>
    %89 = vector.broadcast %88 : vector<1x32xf32> to vector<8x32xf32>
    %90 = arith.mulf %81, %89 : vector<8x32xf32>
    %cst_37 = arith.constant 0.000000e+00 : f32
    %91 = vector.broadcast %cst_37 : f32 to vector<8x32xf32>
    %92 = arith.maximumf %90, %91 : vector<8x32xf32>
    %93 = math.absf %90 : vector<8x32xf32>
    %cst_38 = arith.constant 0.000000e+00 : f32
    %94 = vector.broadcast %cst_38 : f32 to vector<8x32xf32>
    %95 = arith.subf %94, %93 : vector<8x32xf32>
    %96 = math.exp %95 : vector<8x32xf32>
    %97 = math.log1p %96 : vector<8x32xf32>
    %98 = arith.addf %92, %97 : vector<8x32xf32>
    %cst_39 = arith.constant dense<0.000000e+00> : vector<8x64xf32>
    %99 = tpu.matmul %98, %2, %cst_39 {dimension_numbers = #tpu.dot_dimension_numbers<[1], [0], [0], [1], [0, 0, 1, 1], [], []>} : vector<8x32xf32>, vector<32x64xf32>, vector<8x64xf32> -> vector<8x64xf32>
    %100 = vector.broadcast %3 : vector<1x64xf32> to vector<8x64xf32>
    %101 = arith.addf %99, %100 : vector<8x64xf32>
    %102 = vector.extract_strided_slice %101 {offsets = [0, 0], sizes = [8, 16], strides = [1, 1]} : vector<8x64xf32> to vector<8x16xf32>
    %103 = arith.negf %102 : vector<8x16xf32>
    %104 = math.exp %103 : vector<8x16xf32>
    %cst_40 = arith.constant 1.000000e+00 : f32
    %105 = vector.broadcast %cst_40 : f32 to vector<8x16xf32>
    %106 = arith.addf %105, %104 : vector<8x16xf32>
    %107 = arith.divf %105, %106 : vector<8x16xf32>
    %108 = vector.extract_strided_slice %101 {offsets = [0, 16], sizes = [8, 16], strides = [1, 1]} : vector<8x64xf32> to vector<8x16xf32>
    %109 = arith.negf %108 : vector<8x16xf32>
    %110 = math.exp %109 : vector<8x16xf32>
    %cst_41 = arith.constant 1.000000e+00 : f32
    %111 = vector.broadcast %cst_41 : f32 to vector<8x16xf32>
    %112 = arith.addf %111, %110 : vector<8x16xf32>
    %113 = arith.divf %111, %112 : vector<8x16xf32>
    %114 = vector.extract_strided_slice %101 {offsets = [0, 32], sizes = [8, 16], strides = [1, 1]} : vector<8x64xf32> to vector<8x16xf32>
    %115 = arith.negf %114 : vector<8x16xf32>
    %116 = math.exp %115 : vector<8x16xf32>
    %cst_42 = arith.constant 1.000000e+00 : f32
    %117 = vector.broadcast %cst_42 : f32 to vector<8x16xf32>
    %118 = arith.addf %117, %116 : vector<8x16xf32>
    %119 = arith.divf %117, %118 : vector<8x16xf32>
    %120 = vector.extract_strided_slice %101 {offsets = [0, 48], sizes = [8, 16], strides = [1, 1]} : vector<8x64xf32> to vector<8x16xf32>
    %cst_43 = arith.constant 0.000000e+00 : f32
    %121 = vector.broadcast %cst_43 : f32 to vector<8x16xf32>
    %122 = arith.maximumf %120, %121 : vector<8x16xf32>
    %123 = arith.mulf %113, %64 : vector<8x16xf32>
    %124 = arith.mulf %107, %122 : vector<8x16xf32>
    %125 = arith.addf %123, %124 : vector<8x16xf32>
    %126 = math.tanh %125 : vector<8x16xf32>
    %127 = arith.mulf %119, %126 : vector<8x16xf32>
    %c2_i32_44 = arith.constant 2 : i32
    %c0_45 = arith.constant 0 : index
    %c0_46 = arith.constant 0 : index
    %128 = vector.load %arg9[%c0_45, %c0_46] : memref<8x16xf32, #tpu.memory_space<vmem>>, vector<8x16xf32>
    tpu.vector_store %arg9[%c0_45, %c0_46], %127 {strides = array<i32>} : memref<8x16xf32, #tpu.memory_space<vmem>>, vector<8x16xf32>,
    return
  }
  func.func @transform_0(%arg0: i32, %arg1: i32) -> (i32, i32) {
    %c0_i32 = arith.constant 0 : i32
    %c0_i32_0 = arith.constant 0 : i32
    return %arg0, %c0_i32 : i32, i32
  }
  func.func @transform_1(%arg0: i32, %arg1: i32) -> (i32, i32) {
    %c2_i32 = arith.constant 2 : i32
    %0 = arith.muli %arg0, %c2_i32 : i32
    %1 = arith.addi %0, %arg1 : i32
    %c0_i32 = arith.constant 0 : i32
    %c0_i32_0 = arith.constant 0 : i32
    return %1, %c0_i32 : i32, i32
  }
  func.func @transform_2(%arg0: i32, %arg1: i32) -> (i32, i32) {
    %c2_i32 = arith.constant 2 : i32
    %0 = arith.muli %arg0, %c2_i32 : i32
    %1 = arith.addi %0, %arg1 : i32
    %c0_i32 = arith.constant 0 : i32
    %c0_i32_0 = arith.constant 0 : i32
    return %1, %c0_i32 : i32, i32
  }
  func.func @transform_3(%arg0: i32, %arg1: i32) -> (i32, i32) {
    %c0_i32 = arith.constant 0 : i32
    %c0_i32_0 = arith.constant 0 : i32
    %c0_i32_1 = arith.constant 0 : i32
    return %c0_i32, %c0_i32_0 : i32, i32
  }
  func.func @transform_4(%arg0: i32, %arg1: i32) -> (i32, i32) {
    %c0_i32 = arith.constant 0 : i32
    %c0_i32_0 = arith.constant 0 : i32
    %c0_i32_1 = arith.constant 0 : i32
    return %c0_i32, %c0_i32_0 : i32, i32
  }
  func.func @transform_5(%arg0: i32, %arg1: i32) -> (i32, i32) {
    %c0_i32 = arith.constant 0 : i32
    %c0_i32_0 = arith.constant 0 : i32
    %c0_i32_1 = arith.constant 0 : i32
    return %c0_i32, %c0_i32_0 : i32, i32
  }
  func.func @transform_6(%arg0: i32, %arg1: i32) -> (i32, i32) {
    %c0_i32 = arith.constant 0 : i32
    %c0_i32_0 = arith.constant 0 : i32
    %c0_i32_1 = arith.constant 0 : i32
    return %c0_i32, %c0_i32_0 : i32, i32
  }
  func.func @transform_7(%arg0: i32, %arg1: i32) -> (i32, i32) {
    %c2_i32 = arith.constant 2 : i32
    %0 = arith.muli %arg0, %c2_i32 : i32
    %1 = arith.addi %0, %arg1 : i32
    %c0_i32 = arith.constant 0 : i32
    %c0_i32_0 = arith.constant 0 : i32
    return %1, %c0_i32 : i32, i32
  }
}

module attributes {stable_mosaic.version = 11 : i64} {
  func.func @kernel(%arg0: i32, %arg1: i32, %arg2: memref<32x72xf32, #tpu.memory_space<vmem>>, %arg3: memref<8x16xf32, #tpu.memory_space<vmem>>, %arg4: memref<8x16xf32, #tpu.memory_space<vmem>>, %arg5: memref<64x32xf32, #tpu.memory_space<vmem>>, %arg6: memref<16x32xf32, #tpu.memory_space<vmem>>, %arg7: memref<32x64xf32, #tpu.memory_space<vmem>>, %arg8: memref<1x64xf32, #tpu.memory_space<vmem>>, %arg9: memref<8x16xf32, #tpu.memory_space<vmem>>) attributes {dimension_semantics = [#tpu.dimension_semantics<parallel>, #tpu.dimension_semantics<parallel>], iteration_bounds = array<i64: 2, 1>, scalar_prefetch = 0 : i64, scratch_operands = 0 : i64, tpu.core_type = #tpu.core_type<tc>, window_params = [{transform_indices = @transform_0, window_bounds = array<i64: 32, 72>}, {transform_indices = @transform_1, window_bounds = array<i64: 8, 16>}, {transform_indices = @transform_2, window_bounds = array<i64: 8, 16>}, {pipeline_mode = #tpu.pipeline_mode<synchronous>, transform_indices = @transform_3, window_bounds = array<i64: 64, 32>}, {pipeline_mode = #tpu.pipeline_mode<synchronous>, transform_indices = @transform_4, window_bounds = array<i64: 16, 32>}, {pipeline_mode = #tpu.pipeline_mode<synchronous>, transform_indices = @transform_5, window_bounds = array<i64: 32, 64>}, {pipeline_mode = #tpu.pipeline_mode<synchronous>, transform_indices = @transform_6, window_bounds = array<i64: 1, 64>}, {transform_indices = @transform_7, window_bounds = array<i64: 8, 16>}]} {
    %c0 = arith.constant 0 : index
    %c0_0 = arith.constant 0 : index
    %0 = vector.load %arg5[%c0, %c0_0] : memref<64x32xf32, #tpu.memory_space<vmem>>, vector<64x32xf32>
    %c0_1 = arith.constant 0 : index
    %c0_2 = arith.constant 0 : index
    %1 = vector.load %arg6[%c0_1, %c0_2] : memref<16x32xf32, #tpu.memory_space<vmem>>, vector<16x32xf32>
    %c0_3 = arith.constant 0 : index
    %c0_4 = arith.constant 0 : index
    %2 = vector.load %arg7[%c0_3, %c0_4] : memref<32x64xf32, #tpu.memory_space<vmem>>, vector<32x64xf32>
    %c0_5 = arith.constant 0 : index
    %c0_6 = arith.constant 0 : index
    %3 = vector.load %arg8[%c0_5, %c0_6] : memref<1x64xf32, #tpu.memory_space<vmem>>, vector<1x64xf32>
    %c0_7 = arith.constant 0 : index
    %c0_8 = arith.constant 0 : index
    %4 = vector.load %arg3[%c0_7, %c0_8] : memref<8x16xf32, #tpu.memory_space<vmem>>, vector<8x16xf32>
    %c0_9 = arith.constant 0 : index
    %c0_10 = arith.constant 0 : index
    %5 = vector.load %arg4[%c0_9, %c0_10] : memref<8x16xf32, #tpu.memory_space<vmem>>, vector<8x16xf32>
    %c0_i32 = arith.constant 0 : i32
    %c8_i32 = arith.constant 8 : i32
    %6 = arith.muli %c0_i32, %c8_i32 : i32
    %7 = tpu.assume_multiple %6, 8 : i32
    %8 = arith.index_cast %7 : i32 to index
    %c0_11 = arith.constant 0 : index
    %9 = vector.load %arg2[%8, %c0_11] : memref<32x72xf32, #tpu.memory_space<vmem>>, vector<8x72xf32>
    %10 = vector.extract_strided_slice %9 {offsets = [0, 0], sizes = [8, 64], strides = [1, 1]} : vector<8x72xf32> to vector<8x64xf32>
    %11 = vector.extract_strided_slice %9 {offsets = [0, 64], sizes = [8, 8], strides = [1, 1]} : vector<8x72xf32> to vector<8x8xf32>
    %cst = arith.constant dense<0.000000e+00> : vector<8x32xf32>
    %12 = tpu.matmul %10, %0, %cst {dimension_numbers = #tpu.dot_dimension_numbers<[1], [0], [0], [1], [0, 0, 1, 1], [], []>} : vector<8x64xf32>, vector<64x32xf32>, vector<8x32xf32> -> vector<8x32xf32>
    %cst_12 = arith.constant dense<0.000000e+00> : vector<8x32xf32>
    %13 = tpu.matmul %4, %1, %cst_12 {dimension_numbers = #tpu.dot_dimension_numbers<[1], [0], [0], [1], [0, 0, 1, 1], [], []>} : vector<8x16xf32>, vector<16x32xf32>, vector<8x32xf32> -> vector<8x32xf32>
    %14 = arith.addf %12, %13 : vector<8x32xf32>
    %cst_13 = arith.constant dense<0.000000e+00> : vector<8x32xf32>
    %15 = tpu.matmul %11, %14, %cst_13 {dimension_numbers = #tpu.dot_dimension_numbers<[1], [0], [0], [1], [0, 0, 1, 1], [], []>} : vector<8x8xf32>, vector<8x32xf32>, vector<8x32xf32> -> vector<8x32xf32>
    %cst_14 = arith.constant 0.000000e+00 : f32
    %16 = vector.broadcast %cst_14 : f32 to vector<8x32xf32>
    %17 = arith.maximumf %15, %16 : vector<8x32xf32>
    %cst_15 = arith.constant dense<0.000000e+00> : vector<32xf32>
    %18 = vector.multi_reduction <add>, %17, %cst_15 [0] : vector<8x32xf32> to vector<32xf32>
    %19 = vector.shape_cast %18 : vector<32xf32> to vector<1x32xf32>
    %cst_16 = arith.constant 8.000000e+00 : f32
    %20 = vector.broadcast %cst_16 : f32 to vector<1x32xf32>
    %21 = arith.divf %19, %20 : vector<1x32xf32>
    %cst_17 = arith.constant 9.99999997E-7 : f32
    %22 = vector.broadcast %cst_17 : f32 to vector<1x32xf32>
    %23 = arith.addf %21, %22 : vector<1x32xf32>
    %24 = tpu.reciprocal %23 {approx = true} : vector<1x32xf32> -> vector<1x32xf32>
    %25 = vector.broadcast %24 : vector<1x32xf32> to vector<8x32xf32>
    %26 = arith.mulf %17, %25 : vector<8x32xf32>
    %cst_18 = arith.constant 0.000000e+00 : f32
    %27 = vector.broadcast %cst_18 : f32 to vector<8x32xf32>
    %28 = arith.maximumf %26, %27 : vector<8x32xf32>
    %29 = math.absf %26 : vector<8x32xf32>
    %cst_19 = arith.constant 0.000000e+00 : f32
    %30 = vector.broadcast %cst_19 : f32 to vector<8x32xf32>
    %31 = arith.subf %30, %29 : vector<8x32xf32>
    %32 = math.exp %31 : vector<8x32xf32>
    %33 = math.log1p %32 : vector<8x32xf32>
    %34 = arith.addf %28, %33 : vector<8x32xf32>
    %cst_20 = arith.constant dense<0.000000e+00> : vector<8x64xf32>
    %35 = tpu.matmul %34, %2, %cst_20 {dimension_numbers = #tpu.dot_dimension_numbers<[1], [0], [0], [1], [0, 0, 1, 1], [], []>} : vector<8x32xf32>, vector<32x64xf32>, vector<8x64xf32> -> vector<8x64xf32>
    %36 = vector.broadcast %3 : vector<1x64xf32> to vector<8x64xf32>
    %37 = arith.addf %35, %36 : vector<8x64xf32>
    %38 = vector.extract_strided_slice %37 {offsets = [0, 0], sizes = [8, 16], strides = [1, 1]} : vector<8x64xf32> to vector<8x16xf32>
    %39 = arith.negf %38 : vector<8x16xf32>
    %40 = math.exp %39 : vector<8x16xf32>
    %cst_21 = arith.constant 1.000000e+00 : f32
    %41 = vector.broadcast %cst_21 : f32 to vector<8x16xf32>
    %42 = arith.addf %41, %40 : vector<8x16xf32>
    %43 = arith.divf %41, %42 : vector<8x16xf32>
    %44 = vector.extract_strided_slice %37 {offsets = [0, 16], sizes = [8, 16], strides = [1, 1]} : vector<8x64xf32> to vector<8x16xf32>
    %45 = arith.negf %44 : vector<8x16xf32>
    %46 = math.exp %45 : vector<8x16xf32>
    %cst_22 = arith.constant 1.000000e+00 : f32
    %47 = vector.broadcast %cst_22 : f32 to vector<8x16xf32>
    %48 = arith.addf %47, %46 : vector<8x16xf32>
    %49 = arith.divf %47, %48 : vector<8x16xf32>
    %50 = vector.extract_strided_slice %37 {offsets = [0, 32], sizes = [8, 16], strides = [1, 1]} : vector<8x64xf32> to vector<8x16xf32>
    %51 = arith.negf %50 : vector<8x16xf32>
    %52 = math.exp %51 : vector<8x16xf32>
    %cst_23 = arith.constant 1.000000e+00 : f32
    %53 = vector.broadcast %cst_23 : f32 to vector<8x16xf32>
    %54 = arith.addf %53, %52 : vector<8x16xf32>
    %55 = arith.divf %53, %54 : vector<8x16xf32>
    %56 = vector.extract_strided_slice %37 {offsets = [0, 48], sizes = [8, 16], strides = [1, 1]} : vector<8x64xf32> to vector<8x16xf32>
    %cst_24 = arith.constant 0.000000e+00 : f32
    %57 = vector.broadcast %cst_24 : f32 to vector<8x16xf32>
    %58 = arith.maximumf %56, %57 : vector<8x16xf32>
    %59 = arith.mulf %49, %5 : vector<8x16xf32>
    %60 = arith.mulf %43, %58 : vector<8x16xf32>
    %61 = arith.addf %59, %60 : vector<8x16xf32>
    %62 = math.tanh %61 : vector<8x16xf32>
    %63 = arith.mulf %55, %62 : vector<8x16xf32>
    %c1_i32 = arith.constant 1 : i32
    %c8_i32_25 = arith.constant 8 : i32
    %64 = arith.muli %c1_i32, %c8_i32_25 : i32
    %65 = tpu.assume_multiple %64, 8 : i32
    %66 = arith.index_cast %65 : i32 to index
    %c0_26 = arith.constant 0 : index
    %67 = vector.load %arg2[%66, %c0_26] : memref<32x72xf32, #tpu.memory_space<vmem>>, vector<8x72xf32>
    %68 = vector.extract_strided_slice %67 {offsets = [0, 0], sizes = [8, 64], strides = [1, 1]} : vector<8x72xf32> to vector<8x64xf32>
    %69 = vector.extract_strided_slice %67 {offsets = [0, 64], sizes = [8, 8], strides = [1, 1]} : vector<8x72xf32> to vector<8x8xf32>
    %cst_27 = arith.constant dense<0.000000e+00> : vector<8x32xf32>
    %70 = tpu.matmul %68, %0, %cst_27 {dimension_numbers = #tpu.dot_dimension_numbers<[1], [0], [0], [1], [0, 0, 1, 1], [], []>} : vector<8x64xf32>, vector<64x32xf32>, vector<8x32xf32> -> vector<8x32xf32>
    %cst_28 = arith.constant dense<0.000000e+00> : vector<8x32xf32>
    %71 = tpu.matmul %63, %1, %cst_28 {dimension_numbers = #tpu.dot_dimension_numbers<[1], [0], [0], [1], [0, 0, 1, 1], [], []>} : vector<8x16xf32>, vector<16x32xf32>, vector<8x32xf32> -> vector<8x32xf32>
    %72 = arith.addf %70, %71 : vector<8x32xf32>
    %cst_29 = arith.constant dense<0.000000e+00> : vector<8x32xf32>
    %73 = tpu.matmul %69, %72, %cst_29 {dimension_numbers = #tpu.dot_dimension_numbers<[1], [0], [0], [1], [0, 0, 1, 1], [], []>} : vector<8x8xf32>, vector<8x32xf32>, vector<8x32xf32> -> vector<8x32xf32>
    %cst_30 = arith.constant 0.000000e+00 : f32
    %74 = vector.broadcast %cst_30 : f32 to vector<8x32xf32>
    %75 = arith.maximumf %73, %74 : vector<8x32xf32>
    %cst_31 = arith.constant dense<0.000000e+00> : vector<32xf32>
    %76 = vector.multi_reduction <add>, %75, %cst_31 [0] : vector<8x32xf32> to vector<32xf32>
    %77 = vector.shape_cast %76 : vector<32xf32> to vector<1x32xf32>
    %cst_32 = arith.constant 8.000000e+00 : f32
    %78 = vector.broadcast %cst_32 : f32 to vector<1x32xf32>
    %79 = arith.divf %77, %78 : vector<1x32xf32>
    %cst_33 = arith.constant 9.99999997E-7 : f32
    %80 = vector.broadcast %cst_33 : f32 to vector<1x32xf32>
    %81 = arith.addf %79, %80 : vector<1x32xf32>
    %82 = tpu.reciprocal %81 {approx = true} : vector<1x32xf32> -> vector<1x32xf32>
    %83 = vector.broadcast %82 : vector<1x32xf32> to vector<8x32xf32>
    %84 = arith.mulf %75, %83 : vector<8x32xf32>
    %cst_34 = arith.constant 0.000000e+00 : f32
    %85 = vector.broadcast %cst_34 : f32 to vector<8x32xf32>
    %86 = arith.maximumf %84, %85 : vector<8x32xf32>
    %87 = math.absf %84 : vector<8x32xf32>
    %cst_35 = arith.constant 0.000000e+00 : f32
    %88 = vector.broadcast %cst_35 : f32 to vector<8x32xf32>
    %89 = arith.subf %88, %87 : vector<8x32xf32>
    %90 = math.exp %89 : vector<8x32xf32>
    %91 = math.log1p %90 : vector<8x32xf32>
    %92 = arith.addf %86, %91 : vector<8x32xf32>
    %cst_36 = arith.constant dense<0.000000e+00> : vector<8x64xf32>
    %93 = tpu.matmul %92, %2, %cst_36 {dimension_numbers = #tpu.dot_dimension_numbers<[1], [0], [0], [1], [0, 0, 1, 1], [], []>} : vector<8x32xf32>, vector<32x64xf32>, vector<8x64xf32> -> vector<8x64xf32>
    %94 = vector.broadcast %3 : vector<1x64xf32> to vector<8x64xf32>
    %95 = arith.addf %93, %94 : vector<8x64xf32>
    %96 = vector.extract_strided_slice %95 {offsets = [0, 0], sizes = [8, 16], strides = [1, 1]} : vector<8x64xf32> to vector<8x16xf32>
    %97 = arith.negf %96 : vector<8x16xf32>
    %98 = math.exp %97 : vector<8x16xf32>
    %cst_37 = arith.constant 1.000000e+00 : f32
    %99 = vector.broadcast %cst_37 : f32 to vector<8x16xf32>
    %100 = arith.addf %99, %98 : vector<8x16xf32>
    %101 = arith.divf %99, %100 : vector<8x16xf32>
    %102 = vector.extract_strided_slice %95 {offsets = [0, 16], sizes = [8, 16], strides = [1, 1]} : vector<8x64xf32> to vector<8x16xf32>
    %103 = arith.negf %102 : vector<8x16xf32>
    %104 = math.exp %103 : vector<8x16xf32>
    %cst_38 = arith.constant 1.000000e+00 : f32
    %105 = vector.broadcast %cst_38 : f32 to vector<8x16xf32>
    %106 = arith.addf %105, %104 : vector<8x16xf32>
    %107 = arith.divf %105, %106 : vector<8x16xf32>
    %108 = vector.extract_strided_slice %95 {offsets = [0, 32], sizes = [8, 16], strides = [1, 1]} : vector<8x64xf32> to vector<8x16xf32>
    %109 = arith.negf %108 : vector<8x16xf32>
    %110 = math.exp %109 : vector<8x16xf32>
    %cst_39 = arith.constant 1.000000e+00 : f32
    %111 = vector.broadcast %cst_39 : f32 to vector<8x16xf32>
    %112 = arith.addf %111, %110 : vector<8x16xf32>
    %113 = arith.divf %111, %112 : vector<8x16xf32>
    %114 = vector.extract_strided_slice %95 {offsets = [0, 48], sizes = [8, 16], strides = [1, 1]} : vector<8x64xf32> to vector<8x16xf32>
    %cst_40 = arith.constant 0.000000e+00 : f32
    %115 = vector.broadcast %cst_40 : f32 to vector<8x16xf32>
    %116 = arith.maximumf %114, %115 : vector<8x16xf32>
    %117 = arith.mulf %107, %61 : vector<8x16xf32>
    %118 = arith.mulf %101, %116 : vector<8x16xf32>
    %119 = arith.addf %117, %118 : vector<8x16xf32>
    %120 = math.tanh %119 : vector<8x16xf32>
    %121 = arith.mulf %113, %120 : vector<8x16xf32>
    %c2_i32 = arith.constant 2 : i32
    %c8_i32_41 = arith.constant 8 : i32
    %122 = arith.muli %c2_i32, %c8_i32_41 : i32
    %123 = tpu.assume_multiple %122, 8 : i32
    %124 = arith.index_cast %123 : i32 to index
    %c0_42 = arith.constant 0 : index
    %125 = vector.load %arg2[%124, %c0_42] : memref<32x72xf32, #tpu.memory_space<vmem>>, vector<8x72xf32>
    %126 = vector.extract_strided_slice %125 {offsets = [0, 0], sizes = [8, 64], strides = [1, 1]} : vector<8x72xf32> to vector<8x64xf32>
    %127 = vector.extract_strided_slice %125 {offsets = [0, 64], sizes = [8, 8], strides = [1, 1]} : vector<8x72xf32> to vector<8x8xf32>
    %cst_43 = arith.constant dense<0.000000e+00> : vector<8x32xf32>
    %128 = tpu.matmul %126, %0, %cst_43 {dimension_numbers = #tpu.dot_dimension_numbers<[1], [0], [0], [1], [0, 0, 1, 1], [], []>} : vector<8x64xf32>, vector<64x32xf32>, vector<8x32xf32> -> vector<8x32xf32>
    %cst_44 = arith.constant dense<0.000000e+00> : vector<8x32xf32>
    %129 = tpu.matmul %121, %1, %cst_44 {dimension_numbers = #tpu.dot_dimension_numbers<[1], [0], [0], [1], [0, 0, 1, 1], [], []>} : vector<8x16xf32>, vector<16x32xf32>, vector<8x32xf32> -> vector<8x32xf32>
    %130 = arith.addf %128, %129 : vector<8x32xf32>
    %cst_45 = arith.constant dense<0.000000e+00> : vector<8x32xf32>
    %131 = tpu.matmul %127, %130, %cst_45 {dimension_numbers = #tpu.dot_dimension_numbers<[1], [0], [0], [1], [0, 0, 1, 1], [], []>} : vector<8x8xf32>, vector<8x32xf32>, vector<8x32xf32> -> vector<8x32xf32>
    %cst_46 = arith.constant 0.000000e+00 : f32
    %132 = vector.broadcast %cst_46 : f32 to vector<8x32xf32>
    %133 = arith.maximumf %131, %132 : vector<8x32xf32>
    %cst_47 = arith.constant dense<0.000000e+00> : vector<32xf32>
    %134 = vector.multi_reduction <add>, %133, %cst_47 [0] : vector<8x32xf32> to vector<32xf32>
    %135 = vector.shape_cast %134 : vector<32xf32> to vector<1x32xf32>
    %cst_48 = arith.constant 8.000000e+00 : f32
    %136 = vector.broadcast %cst_48 : f32 to vector<1x32xf32>
    %137 = arith.divf %135, %136 : vector<1x32xf32>
    %cst_49 = arith.constant 9.99999997E-7 : f32
    %138 = vector.broadcast %cst_49 : f32 to vector<1x32xf32>
    %139 = arith.addf %137, %138 : vector<1x32xf32>
    %140 = tpu.reciprocal %139 {approx = true} : vector<1x32xf32> -> vector<1x32xf32>
    %141 = vector.broadcast %140 : vector<1x32xf32> to vector<8x32xf32>
    %142 = arith.mulf %133, %141 : vector<8x32xf32>
    %cst_50 = arith.constant 0.000000e+00 : f32
    %143 = vector.broadcast %cst_50 : f32 to vector<8x32xf32>
    %144 = arith.maximumf %142, %143 : vector<8x32xf32>
    %145 = math.absf %142 : vector<8x32xf32>
    %cst_51 = arith.constant 0.000000e+00 : f32
    %146 = vector.broadcast %cst_51 : f32 to vector<8x32xf32>
    %147 = arith.subf %146, %145 : vector<8x32xf32>
    %148 = math.exp %147 : vector<8x32xf32>
    %149 = math.log1p %148 : vector<8x32xf32>
    %150 = arith.addf %144, %149 : vector<8x32xf32>
    %cst_52 = arith.constant dense<0.000000e+00> : vector<8x64xf32>
    %151 = tpu.matmul %150, %2, %cst_52 {dimension_numbers = #tpu.dot_dimension_numbers<[1], [0], [0], [1], [0, 0, 1, 1], [], []>} : vector<8x32xf32>, vector<32x64xf32>, vector<8x64xf32> -> vector<8x64xf32>
    %152 = vector.broadcast %3 : vector<1x64xf32> to vector<8x64xf32>
    %153 = arith.addf %151, %152 : vector<8x64xf32>
    %154 = vector.extract_strided_slice %153 {offsets = [0, 0], sizes = [8, 16], strides = [1, 1]} : vector<8x64xf32> to vector<8x16xf32>
    %155 = arith.negf %154 : vector<8x16xf32>
    %156 = math.exp %155 : vector<8x16xf32>
    %cst_53 = arith.constant 1.000000e+00 : f32
    %157 = vector.broadcast %cst_53 : f32 to vector<8x16xf32>
    %158 = arith.addf %157, %156 : vector<8x16xf32>
    %159 = arith.divf %157, %158 : vector<8x16xf32>
    %160 = vector.extract_strided_slice %153 {offsets = [0, 16], sizes = [8, 16], strides = [1, 1]} : vector<8x64xf32> to vector<8x16xf32>
    %161 = arith.negf %160 : vector<8x16xf32>
    %162 = math.exp %161 : vector<8x16xf32>
    %cst_54 = arith.constant 1.000000e+00 : f32
    %163 = vector.broadcast %cst_54 : f32 to vector<8x16xf32>
    %164 = arith.addf %163, %162 : vector<8x16xf32>
    %165 = arith.divf %163, %164 : vector<8x16xf32>
    %166 = vector.extract_strided_slice %153 {offsets = [0, 32], sizes = [8, 16], strides = [1, 1]} : vector<8x64xf32> to vector<8x16xf32>
    %167 = arith.negf %166 : vector<8x16xf32>
    %168 = math.exp %167 : vector<8x16xf32>
    %cst_55 = arith.constant 1.000000e+00 : f32
    %169 = vector.broadcast %cst_55 : f32 to vector<8x16xf32>
    %170 = arith.addf %169, %168 : vector<8x16xf32>
    %171 = arith.divf %169, %170 : vector<8x16xf32>
    %172 = vector.extract_strided_slice %153 {offsets = [0, 48], sizes = [8, 16], strides = [1, 1]} : vector<8x64xf32> to vector<8x16xf32>
    %cst_56 = arith.constant 0.000000e+00 : f32
    %173 = vector.broadcast %cst_56 : f32 to vector<8x16xf32>
    %174 = arith.maximumf %172, %173 : vector<8x16xf32>
    %175 = arith.mulf %165, %119 : vector<8x16xf32>
    %176 = arith.mulf %159, %174 : vector<8x16xf32>
    %177 = arith.addf %175, %176 : vector<8x16xf32>
    %178 = math.tanh %177 : vector<8x16xf32>
    %179 = arith.mulf %171, %178 : vector<8x16xf32>
    %c3_i32 = arith.constant 3 : i32
    %c8_i32_57 = arith.constant 8 : i32
    %180 = arith.muli %c3_i32, %c8_i32_57 : i32
    %181 = tpu.assume_multiple %180, 8 : i32
    %182 = arith.index_cast %181 : i32 to index
    %c0_58 = arith.constant 0 : index
    %183 = vector.load %arg2[%182, %c0_58] : memref<32x72xf32, #tpu.memory_space<vmem>>, vector<8x72xf32>
    %184 = vector.extract_strided_slice %183 {offsets = [0, 0], sizes = [8, 64], strides = [1, 1]} : vector<8x72xf32> to vector<8x64xf32>
    %185 = vector.extract_strided_slice %183 {offsets = [0, 64], sizes = [8, 8], strides = [1, 1]} : vector<8x72xf32> to vector<8x8xf32>
    %cst_59 = arith.constant dense<0.000000e+00> : vector<8x32xf32>
    %186 = tpu.matmul %184, %0, %cst_59 {dimension_numbers = #tpu.dot_dimension_numbers<[1], [0], [0], [1], [0, 0, 1, 1], [], []>} : vector<8x64xf32>, vector<64x32xf32>, vector<8x32xf32> -> vector<8x32xf32>
    %cst_60 = arith.constant dense<0.000000e+00> : vector<8x32xf32>
    %187 = tpu.matmul %179, %1, %cst_60 {dimension_numbers = #tpu.dot_dimension_numbers<[1], [0], [0], [1], [0, 0, 1, 1], [], []>} : vector<8x16xf32>, vector<16x32xf32>, vector<8x32xf32> -> vector<8x32xf32>
    %188 = arith.addf %186, %187 : vector<8x32xf32>
    %cst_61 = arith.constant dense<0.000000e+00> : vector<8x32xf32>
    %189 = tpu.matmul %185, %188, %cst_61 {dimension_numbers = #tpu.dot_dimension_numbers<[1], [0], [0], [1], [0, 0, 1, 1], [], []>} : vector<8x8xf32>, vector<8x32xf32>, vector<8x32xf32> -> vector<8x32xf32>
    %cst_62 = arith.constant 0.000000e+00 : f32
    %190 = vector.broadcast %cst_62 : f32 to vector<8x32xf32>
    %191 = arith.maximumf %189, %190 : vector<8x32xf32>
    %cst_63 = arith.constant dense<0.000000e+00> : vector<32xf32>
    %192 = vector.multi_reduction <add>, %191, %cst_63 [0] : vector<8x32xf32> to vector<32xf32>
    %193 = vector.shape_cast %192 : vector<32xf32> to vector<1x32xf32>
    %cst_64 = arith.constant 8.000000e+00 : f32
    %194 = vector.broadcast %cst_64 : f32 to vector<1x32xf32>
    %195 = arith.divf %193, %194 : vector<1x32xf32>
    %cst_65 = arith.constant 9.99999997E-7 : f32
    %196 = vector.broadcast %cst_65 : f32 to vector<1x32xf32>
    %197 = arith.addf %195, %196 : vector<1x32xf32>
    %198 = tpu.reciprocal %197 {approx = true} : vector<1x32xf32> -> vector<1x32xf32>
    %199 = vector.broadcast %198 : vector<1x32xf32> to vector<8x32xf32>
    %200 = arith.mulf %191, %199 : vector<8x32xf32>
    %cst_66 = arith.constant 0.000000e+00 : f32
    %201 = vector.broadcast %cst_66 : f32 to vector<8x32xf32>
    %202 = arith.maximumf %200, %201 : vector<8x32xf32>
    %203 = math.absf %200 : vector<8x32xf32>
    %cst_67 = arith.constant 0.000000e+00 : f32
    %204 = vector.broadcast %cst_67 : f32 to vector<8x32xf32>
    %205 = arith.subf %204, %203 : vector<8x32xf32>
    %206 = math.exp %205 : vector<8x32xf32>
    %207 = math.log1p %206 : vector<8x32xf32>
    %208 = arith.addf %202, %207 : vector<8x32xf32>
    %cst_68 = arith.constant dense<0.000000e+00> : vector<8x64xf32>
    %209 = tpu.matmul %208, %2, %cst_68 {dimension_numbers = #tpu.dot_dimension_numbers<[1], [0], [0], [1], [0, 0, 1, 1], [], []>} : vector<8x32xf32>, vector<32x64xf32>, vector<8x64xf32> -> vector<8x64xf32>
    %210 = vector.broadcast %3 : vector<1x64xf32> to vector<8x64xf32>
    %211 = arith.addf %209, %210 : vector<8x64xf32>
    %212 = vector.extract_strided_slice %211 {offsets = [0, 0], sizes = [8, 16], strides = [1, 1]} : vector<8x64xf32> to vector<8x16xf32>
    %213 = arith.negf %212 : vector<8x16xf32>
    %214 = math.exp %213 : vector<8x16xf32>
    %cst_69 = arith.constant 1.000000e+00 : f32
    %215 = vector.broadcast %cst_69 : f32 to vector<8x16xf32>
    %216 = arith.addf %215, %214 : vector<8x16xf32>
    %217 = arith.divf %215, %216 : vector<8x16xf32>
    %218 = vector.extract_strided_slice %211 {offsets = [0, 16], sizes = [8, 16], strides = [1, 1]} : vector<8x64xf32> to vector<8x16xf32>
    %219 = arith.negf %218 : vector<8x16xf32>
    %220 = math.exp %219 : vector<8x16xf32>
    %cst_70 = arith.constant 1.000000e+00 : f32
    %221 = vector.broadcast %cst_70 : f32 to vector<8x16xf32>
    %222 = arith.addf %221, %220 : vector<8x16xf32>
    %223 = arith.divf %221, %222 : vector<8x16xf32>
    %224 = vector.extract_strided_slice %211 {offsets = [0, 32], sizes = [8, 16], strides = [1, 1]} : vector<8x64xf32> to vector<8x16xf32>
    %225 = arith.negf %224 : vector<8x16xf32>
    %226 = math.exp %225 : vector<8x16xf32>
    %cst_71 = arith.constant 1.000000e+00 : f32
    %227 = vector.broadcast %cst_71 : f32 to vector<8x16xf32>
    %228 = arith.addf %227, %226 : vector<8x16xf32>
    %229 = arith.divf %227, %228 : vector<8x16xf32>
    %230 = vector.extract_strided_slice %211 {offsets = [0, 48], sizes = [8, 16], strides = [1, 1]} : vector<8x64xf32> to vector<8x16xf32>
    %cst_72 = arith.constant 0.000000e+00 : f32
    %231 = vector.broadcast %cst_72 : f32 to vector<8x16xf32>
    %232 = arith.maximumf %230, %231 : vector<8x16xf32>
    %233 = arith.mulf %223, %177 : vector<8x16xf32>
    %234 = arith.mulf %217, %232 : vector<8x16xf32>
    %235 = arith.addf %233, %234 : vector<8x16xf32>
    %236 = math.tanh %235 : vector<8x16xf32>
    %237 = arith.mulf %229, %236 : vector<8x16xf32>
    %c4_i32 = arith.constant 4 : i32
    %c0_73 = arith.constant 0 : index
    %c0_74 = arith.constant 0 : index
    %238 = vector.load %arg9[%c0_73, %c0_74] : memref<8x16xf32, #tpu.memory_space<vmem>>, vector<8x16xf32>
    tpu.vector_store %arg9[%c0_73, %c0_74], %237 {strides = array<i32>} : memref<8x16xf32, #tpu.memory_space<vmem>>, vector<8x16xf32>,
    return
  }
  func.func @transform_0(%arg0: i32, %arg1: i32) -> (i32, i32) {
    %c0_i32 = arith.constant 0 : i32
    %c0_i32_0 = arith.constant 0 : i32
    return %arg0, %c0_i32 : i32, i32
  }
  func.func @transform_1(%arg0: i32, %arg1: i32) -> (i32, i32) {
    %c1_i32 = arith.constant 1 : i32
    %0 = arith.muli %arg0, %c1_i32 : i32
    %1 = arith.addi %0, %arg1 : i32
    %c0_i32 = arith.constant 0 : i32
    %c0_i32_0 = arith.constant 0 : i32
    return %1, %c0_i32 : i32, i32
  }
  func.func @transform_2(%arg0: i32, %arg1: i32) -> (i32, i32) {
    %c1_i32 = arith.constant 1 : i32
    %0 = arith.muli %arg0, %c1_i32 : i32
    %1 = arith.addi %0, %arg1 : i32
    %c0_i32 = arith.constant 0 : i32
    %c0_i32_0 = arith.constant 0 : i32
    return %1, %c0_i32 : i32, i32
  }
  func.func @transform_3(%arg0: i32, %arg1: i32) -> (i32, i32) {
    %c0_i32 = arith.constant 0 : i32
    %c0_i32_0 = arith.constant 0 : i32
    %c0_i32_1 = arith.constant 0 : i32
    return %c0_i32, %c0_i32_0 : i32, i32
  }
  func.func @transform_4(%arg0: i32, %arg1: i32) -> (i32, i32) {
    %c0_i32 = arith.constant 0 : i32
    %c0_i32_0 = arith.constant 0 : i32
    %c0_i32_1 = arith.constant 0 : i32
    return %c0_i32, %c0_i32_0 : i32, i32
  }
  func.func @transform_5(%arg0: i32, %arg1: i32) -> (i32, i32) {
    %c0_i32 = arith.constant 0 : i32
    %c0_i32_0 = arith.constant 0 : i32
    %c0_i32_1 = arith.constant 0 : i32
    return %c0_i32, %c0_i32_0 : i32, i32
  }
  func.func @transform_6(%arg0: i32, %arg1: i32) -> (i32, i32) {
    %c0_i32 = arith.constant 0 : i32
    %c0_i32_0 = arith.constant 0 : i32
    %c0_i32_1 = arith.constant 0 : i32
    return %c0_i32, %c0_i32_0 : i32, i32
  }
  func.func @transform_7(%arg0: i32, %arg1: i32) -> (i32, i32) {
    %c1_i32 = arith.constant 1 : i32
    %0 = arith.muli %arg0, %c1_i32 : i32
    %1 = arith.addi %0, %arg1 : i32
    %c0_i32 = arith.constant 0 : i32
    %c0_i32_0 = arith.constant 0 : i32
    return %1, %c0_i32 : i32, i32
  }
}

</mosaic_0001>

<llo_original>
// kernel: layer_forward.7
$region0: #{layer_forward.7}
  #allocation0 [shape = 'u32[]', space=smem, size = 0x4, offset = 0x4, fixed_abs, tag = 'smem constant byte address 0x4 - core index']
  #allocation1 [shape = 'u32[144,128]{1,0:T(1,128)}', space=vmem, size = 0x12000, scoped, tag = 'internal scratch']
  %s0 = inlined_call_operand.vmem [shape: f32[16,16], index: 0, kind: input, shape index: {}]
  %s1 = inlined_call_operand.vmem [shape: f32[32,16], index: 1, kind: input, shape index: {}]
  %s2 = inlined_call_operand.vmem [shape: f32[16,16], index: 2, kind: input, shape index: {}]
  %s3 = inlined_call_operand.vmem [shape: f32[32,16], index: 3, kind: input, shape index: {}]
  %s4 = inlined_call_operand.vmem [shape: f32[1,16], index: 4, kind: input, shape index: {}]
  %s5 = inlined_call_operand.hbm [shape: f32[16,16], index: 5, kind: output, shape index: {}]
  %s6 = sld [smem:[#allocation0]]
  $region53: #{layer_forward.7} parent=0
    _
  %s8 = ssub.s32 1, %s6
  %s9 = scalar_select 0, %s8, %s6
  $region1: #{layer_forward.7} parent=0
    #allocation2 [shape = 'u8[8192]{0}', space=vmem, size = 0x2000, scoped, tag = 'output window, operand 0']
    #allocation3 [shape = 's32[2]{0}', space=sflag, size = 0x8, scoped, tag = 'scoped memory for layer_forward.7']
    %10 = vsyncpa [#allocation3], 0
    %s11 = scalar_lea.sflag [#allocation3], 1
    %12 = vsyncpa %s11, 0
    loop: start=0, step=1, limit=4
    $region2: #{layer_forward.7} parent=1 // loop_pre_header
      _
    $region3: #{layer_forward.7} parent=1 // loop_header
      %s14 = sphi 0, %s18
      %p15 = scmp.ge.s32.totalorder %s14, 4
      %s24 = sphi 0, %s26
      %s27 = sphi 0, %s24
      %s28 = sphi 0, %s27
      %s44 = sphi 0, %s28
      %s50 = sphi 0, %s52
      %s53 = sphi 0, %s50
      %s54 = sphi 0, %s53
      %s70 = sphi 0, %s54
      %s74 = sphi 0, %s74
      %s76 = sphi 0, %s74
      %s77 = sphi 0, %s76
      %s91 = sphi 0, %s77
      %s95 = sphi 0, %s95
      %s97 = sphi 0, %s95
      %s98 = sphi 0, %s97
      %s112 = sphi 0, %s98
      %s116 = sphi 0, %s116
      %s118 = sphi 0, %s116
      %s119 = sphi 0, %s118
      %s133 = sphi 0, %s119
      %s139 = sphi 0, %s141
      %s142 = sphi 0, %s139
      %s143 = sphi 0, %s142
      %s159 = sphi 0, %s143
    $region4: #{layer_forward.7} parent=1 // loop_header_branch
      %17 = sbr.rel (%p15) target = $region8
    $region5: #{layer_forward.7} parent=1 // loop_body
      %s19 = ssub.s32 %s14, 1
      %s20 = ssub.s32 %s14, 2
      %s21 = sadd.s32 %s14, 1
      %s22 = ssub.s32 %s14, %s21
      %p23 = scmp.eq.s32.totalorder %s22, 0
      %s25 = sadd.s32 %s24, 1
      %s26 = scalar_select %p23, %s24, %s25
      %p29 = pneg %p23
      %p30 = scmp.eq.s32.totalorder %s14, 1
      %p31 = por %p29, %p30
      %p32 = scmp.ne.s32.totalorder %s24, %s27
      %p33 = scmp.eq.s32.totalorder %s14, 0
      %p34 = por %p32, %p33
      %p35 = scmp.ne.s32.totalorder %s24, %s27
      %p36 = scmp.eq.s32.totalorder %s19, 1
      %p37 = por %p35, %p36
      %p38 = scmp.ne.s32.totalorder %s27, %s28
      %p39 = scmp.eq.s32.totalorder %s19, 0
      %p40 = por %p38, %p39
      %p41 = scmp.ne.s32.totalorder %s27, %s28
      %p42 = scmp.eq.s32.totalorder %s20, 1
      %p43 = por %p41, %p42
      %p45 = scmp.ne.s32.totalorder %s28, %s44
      %p46 = scmp.eq.s32.totalorder %s20, 0
      %p47 = por %p45, %p46
      %s48 = ssub.s32 %s14, %s21
      %p49 = scmp.eq.s32.totalorder %s48, 0
      %s51 = sadd.s32 %s50, 1
      %s52 = scalar_select %p49, %s50, %s51
      %p55 = pneg %p49
      %p56 = scmp.eq.s32.totalorder %s14, 1
      %p57 = por %p55, %p56
      %p58 = scmp.ne.s32.totalorder %s50, %s53
      %p59 = scmp.eq.s32.totalorder %s14, 0
      %p60 = por %p58, %p59
      %p61 = scmp.ne.s32.totalorder %s50, %s53
      %p62 = scmp.eq.s32.totalorder %s19, 1
      %p63 = por %p61, %p62
      %p64 = scmp.ne.s32.totalorder %s53, %s54
      %p65 = scmp.eq.s32.totalorder %s19, 0
      %p66 = por %p64, %p65
      %p67 = scmp.ne.s32.totalorder %s53, %s54
      %p68 = scmp.eq.s32.totalorder %s20, 1
      %p69 = por %p67, %p68
      %p71 = scmp.ne.s32.totalorder %s54, %s70
      %p72 = scmp.eq.s32.totalorder %s20, 0
      %p73 = por %p71, %p72
      %s75 = sadd.s32 %s74, 1
      %p78 = scmp.eq.s32.totalorder %s14, 1
      %p79 = scmp.ne.s32.totalorder %s74, %s76
      %p80 = scmp.eq.s32.totalorder %s14, 0
      %p81 = por %p79, %p80
      %p82 = scmp.ne.s32.totalorder %s74, %s76
      %p83 = scmp.eq.s32.totalorder %s19, 1
      %p84 = por %p82, %p83
      %p85 = scmp.ne.s32.totalorder %s76, %s77
      %p86 = scmp.eq.s32.totalorder %s19, 0
      %p87 = por %p85, %p86
      %p88 = scmp.ne.s32.totalorder %s76, %s77
      %p89 = scmp.eq.s32.totalorder %s20, 1
      %p90 = por %p88, %p89
      %p92 = scmp.ne.s32.totalorder %s77, %s91
      %p93 = scmp.eq.s32.totalorder %s20, 0
      %p94 = por %p92, %p93
      %s96 = sadd.s32 %s95, 1
      %p99 = scmp.eq.s32.totalorder %s14, 1
      %p100 = scmp.ne.s32.totalorder %s95, %s97
      %p101 = scmp.eq.s32.totalorder %s14, 0
      %p102 = por %p100, %p101
      %p103 = scmp.ne.s32.totalorder %s95, %s97
      %p104 = scmp.eq.s32.totalorder %s19, 1
      %p105 = por %p103, %p104
      %p106 = scmp.ne.s32.totalorder %s97, %s98
      %p107 = scmp.eq.s32.totalorder %s19, 0
      %p108 = por %p106, %p107
      %p109 = scmp.ne.s32.totalorder %s97, %s98
      %p110 = scmp.eq.s32.totalorder %s20, 1
      %p111 = por %p109, %p110
      %p113 = scmp.ne.s32.totalorder %s98, %s112
      %p114 = scmp.eq.s32.totalorder %s20, 0
      %p115 = por %p113, %p114
      %s117 = sadd.s32 %s116, 1
      %p120 = scmp.eq.s32.totalorder %s14, 1
      %p121 = scmp.ne.s32.totalorder %s116, %s118
      %p122 = scmp.eq.s32.totalorder %s14, 0
      %p123 = por %p121, %p122
      %p124 = scmp.ne.s32.totalorder %s116, %s118
      %p125 = scmp.eq.s32.totalorder %s19, 1
      %p126 = por %p124, %p125
      %p127 = scmp.ne.s32.totalorder %s118, %s119
      %p128 = scmp.eq.s32.totalorder %s19, 0
      %p129 = por %p127, %p128
      %p130 = scmp.ne.s32.totalorder %s118, %s119
      %p131 = scmp.eq.s32.totalorder %s20, 1
      %p132 = por %p130, %p131
      %p134 = scmp.ne.s32.totalorder %s119, %s133
      %p135 = scmp.eq.s32.totalorder %s20, 0
      %p136 = por %p134, %p135
      %s137 = ssub.s32 %s14, %s21
      %p138 = scmp.eq.s32.totalorder %s137, 0
      %s140 = sadd.s32 %s139, 1
      %s141 = scalar_select %p138, %s139, %s140
      %p144 = pneg %p138
      %p145 = scmp.eq.s32.totalorder %s14, 1
      %p146 = por %p144, %p145
      %p147 = scmp.ne.s32.totalorder %s139, %s142
      %p148 = scmp.eq.s32.totalorder %s14, 0
      %p149 = por %p147, %p148
      %p150 = scmp.ne.s32.totalorder %s139, %s142
      %p151 = scmp.eq.s32.totalorder %s19, 1
      %p152 = por %p150, %p151
      %p153 = scmp.ne.s32.totalorder %s142, %s143
      %p154 = scmp.eq.s32.totalorder %s19, 0
      %p155 = por %p153, %p154
      %p156 = scmp.ne.s32.totalorder %s142, %s143
      %p157 = scmp.eq.s32.totalorder %s20, 1
      %p158 = por %p156, %p157
      %p160 = scmp.ne.s32.totalorder %s143, %s159
      %p161 = scmp.eq.s32.totalorder %s20, 0
      %p162 = por %p160, %p161
      %p163 = scmp.le.s32.totalorder 1, %s14
      %p164 = scmp.lt.s32.totalorder %s14, 3
      %p165 = pnand %p163, %p164
      %p166 = pneg %p165
      // Predicated region
      $region9: #{layer_forward.7} parent=5 // pred_check
        _
      $region10: #{layer_forward.7} parent=5 // pred_check_branch
        %168 = sbr.rel (%p165) target = $region12
      $region11: #{layer_forward.7} parent=5 // pred_region
        %s169 = ssub.s32 %s14, 1
        // Predicated region
        $region13: #{layer_forward.7} parent=11 // pred_check
          %p170 = pneg %p87
        $region14: #{layer_forward.7} parent=11 // pred_check_branch
          %172 = sbr.rel (%p170) target = $region16
        $region15: #{layer_forward.7} parent=11 // pred_region
          _
        $region16: #{layer_forward.7} parent=11 // pred_fallthru
          _
        // Predicated region
        $region17: #{layer_forward.7} parent=11 // pred_check
          %p173 = pneg %p108
        $region18: #{layer_forward.7} parent=11 // pred_check_branch
          %175 = sbr.rel (%p173) target = $region20
        $region19: #{layer_forward.7} parent=11 // pred_region
          _
        $region20: #{layer_forward.7} parent=11 // pred_fallthru
          _
        // Predicated region
        $region21: #{layer_forward.7} parent=11 // pred_check
          %p176 = pneg %p129
        $region22: #{layer_forward.7} parent=11 // pred_check_branch
          %178 = sbr.rel (%p176) target = $region24
        $region23: #{layer_forward.7} parent=11 // pred_region
          _
        $region24: #{layer_forward.7} parent=11 // pred_fallthru
          _
      $region12: #{layer_forward.7} parent=5 // pred_fallthru
        _
      %p179 = scmp.lt.s32.totalorder %s14, 2
      // Predicated region
      $region25: #{layer_forward.7} parent=5 // pred_check
        %p180 = pneg %p179
      $region26: #{layer_forward.7} parent=5 // pred_check_branch
        %182 = sbr.rel (%p180) target = $region28
      $region27: #{layer_forward.7} parent=5 // pred_region
        // Predicated region
        $region29: #{layer_forward.7} parent=27 // pred_check
          %p183 = pneg %p34
        $region30: #{layer_forward.7} parent=27 // pred_check_branch
          %185 = sbr.rel (%p183) target = $region32
        $region31: #{layer_forward.7} parent=27 // pred_region
          %p186 = scmp.lt.s32.totalorder %s14, 1
          %s187 = scalar_select %p186, %s14, 1
          %s188 = smul.addr %s187, 8
          %s189 = scalar_lea.vmem %s0, %s188
        $region32: #{layer_forward.7} parent=27 // pred_fallthru
          _
        // Predicated region
        $region33: #{layer_forward.7} parent=27 // pred_check
          %p190 = pneg %p60
        $region34: #{layer_forward.7} parent=27 // pred_check_branch
          %192 = sbr.rel (%p190) target = $region36
        $region35: #{layer_forward.7} parent=27 // pred_region
          %s193 = smul.u32 2, %s14
          %p194 = scmp.lt.s32.totalorder %s193, 3
          %s195 = scalar_select %p194, %s193, 3
          %s196 = smul.addr %s195, 8
          %s197 = scalar_lea.vmem %s1, %s196
          %s198 = smul.u32 2, %s14
        $region36: #{layer_forward.7} parent=27 // pred_fallthru
          _
      $region28: #{layer_forward.7} parent=5 // pred_fallthru
        _
      %p199 = scmp.le.s32.totalorder 1, %s14
      %p200 = scmp.lt.s32.totalorder %s14, 3
      %p201 = pnand %p199, %p200
      %p202 = pneg %p201
      // Predicated region
      $region37: #{layer_forward.7} parent=5 // pred_check
        _
      $region38: #{layer_forward.7} parent=5 // pred_check_branch
        %204 = sbr.rel (%p201) target = $region40
      $region39: #{layer_forward.7} parent=5 // pred_region
        %s205 = ssub.s32 %s14, 1
        %p206 = scmp.lt.s32.totalorder %s19, 1
        %s207 = scalar_select %p206, %s19, 1
        %s208 = smul.addr %s207, 8
        %s209 = scalar_lea.vmem %s0, %s208
        %p210 = pneg %p40
        %p211 = pneg %p37
        %s212 = smul.u32 2, %s19
        %p213 = scmp.lt.s32.totalorder %s212, 3
        %s214 = scalar_select %p213, %s212, 3
        %s215 = smul.addr %s214, 8
        %s216 = scalar_lea.vmem %s1, %s215
        %p217 = pneg %p66
        %p218 = pneg %p63
        %p219 = pneg %p87
        %p220 = pneg %p84
        %p221 = pneg %p108
        %p222 = pneg %p105
        %p223 = pneg %p129
        %p224 = pneg %p126
        %p225 = pneg %p155
        %p226 = pneg %p152
        %s227 = sand.u32 %s142, 1
        %s228 = scalar_lea.sflag [#allocation3], %s227
        %s229 = sand.u32 %s142, 1
        %s230 = smul.addr %s229, 8
        %s231 = scalar_lea.vmem [#allocation2], %s230
        %p232 = scmp.lt.s32.totalorder %s19, 1
        %s233 = scalar_select %p232, %s19, 1
        %s234 = smul.addr %s233, 8
        %s235 = scalar_lea.vmem %s0, %s234
        %s236 = smul.u32 2, %s19
        %p237 = scmp.lt.s32.totalorder %s236, 3
        %s238 = scalar_select %p237, %s236, 3
        %s239 = smul.addr %s238, 8
        %s240 = scalar_lea.vmem %s1, %s239
        %s241 = smul.u32 2, %s19
        %v242 = vld [vmem:[%s235] sm:$0xff]
        %v243 = vld [vmem:[%s2] sm:$0xff]
        %v244 = vld [vmem:[%s2 + $0x8] sm:$0xff]
        %v245 = vld [vmem:[%s4] sm:$0x1]
        %v247 = vlaneseq
        %v248 = vshrl.u32 %v247, 7
        %v249 = vsub.s32 0, %v248
        %v250 = vrot.slane %v245, %v249
        %vm252 = vcmask 130048
        %v254 = vsel %vm252, %v242, 0
        %256 = vmatprep.subr.mxu0 0.0
        %257 = vmatpush1.msra.mxu0 0.0
        %258 = vmatprep.subr.mxu0 0.0
        %259 = vmatpush1.msra.mxu0 0.0
        %260 = vmatprep.subr.mxu0 0.0
        %261 = vmatpush1.msra.mxu0 0.0
        %262 = vmatprep.subr.mxu0 0.0
        %263 = vmatpush1.msra.mxu0 0.0
        %264 = vmatprep.subr.mxu0 0.0
        %265 = vmatpush1.msra.mxu0 0.0
        %266 = vmatprep.subr.mxu0 0.0
        %267 = vmatpush1.msra.mxu0 0.0
        %268 = vmatprep.subr.mxu0 0.0
        %269 = vmatpush1.msra.mxu0 0.0
        %270 = vmatprep.subr.mxu0 0.0
        %271 = vmatpush1.msra.mxu0 0.0
        %272 = vmatprep.subr.mxu0 0.0
        %273 = vmatpush1.msra.mxu0 0.0
        %274 = vmatprep.subr.mxu0 0.0
        %275 = vmatpush1.msra.mxu0 0.0
        %276 = vmatprep.subr.mxu0 0.0
        %277 = vmatpush1.msra.mxu0 0.0
        %278 = vmatprep.subr.mxu0 0.0
        %279 = vmatpush1.msra.mxu0 0.0
        %280 = vmatprep.subr.mxu0 0.0
        %281 = vmatpush1.msra.mxu0 0.0
        %282 = vmatprep.subr.mxu0 0.0
        %283 = vmatpush1.msra.mxu0 0.0
        %284 = vmatprep.subr.mxu0 0.0
        %285 = vmatpush1.msra.mxu0 %v244
        %286 = vmatprep.subr.mxu0 0.0
        %287 = vmatpush1.msra.mxu0 %v243
        %288 = vmatprep.subr.mxu0 0.0
        %289 = vmatpush2.msra.mxu0 0.0
        %290 = vmatprep.subr.mxu0 0.0
        %291 = vmatpush2.msra.mxu0 0.0
        %292 = vmatprep.subr.mxu0 0.0
        %293 = vmatpush2.msra.mxu0 0.0
        %294 = vmatprep.subr.mxu0 0.0
        %295 = vmatpush2.msra.mxu0 0.0
        %296 = vmatprep.subr.mxu0 0.0
        %297 = vmatpush2.msra.mxu0 0.0
        %298 = vmatprep.subr.mxu0 0.0
        %299 = vmatpush2.msra.mxu0 0.0
        %300 = vmatprep.subr.mxu0 0.0
        %301 = vmatpush2.msra.mxu0 0.0
        %302 = vmatprep.subr.mxu0 0.0
        %303 = vmatpush2.msra.mxu0 0.0
        %304 = vmatprep.subr.mxu0 0.0
        %305 = vmatpush2.msra.mxu0 0.0
        %306 = vmatprep.subr.mxu0 0.0
        %307 = vmatpush2.msra.mxu0 0.0
        %308 = vmatprep.subr.mxu0 0.0
        %309 = vmatpush2.msra.mxu0 0.0
        %310 = vmatprep.subr.mxu0 0.0
        %311 = vmatpush2.msra.mxu0 0.0
        %312 = vmatprep.subr.mxu0 0.0
        %313 = vmatpush2.msra.mxu0 0.0
        %314 = vmatprep.subr.mxu0 0.0
        %315 = vmatpush2.msra.mxu0 0.0
        %316 = vmatprep.subr.mxu0 0.0
        %317 = vmatpush2.msra.mxu0 0.0
        %318 = vmatprep.subr.mxu0 0.0
        %319 = vmatpush2.msra.mxu0 0.0
        %320 = vmatprep.mubr.f32.mxu0 0.0
        %321 = vmatmul.mubr.f32.gmra.mxu0 %v254
        %v322 = vpop.f32.mrf.mxu0
        %v323 = vadd.f32 %v250, %v322
        %v324 = vpop.f32.mrf.mxu0
        %325 = vdwg.mxu0
        %v326 = vld [vmem:[%s240] sm:$0xff]
        %v327 = vld [vmem:[%s3] sm:$0xff]
        %v328 = vld [vmem:[%s3 + $0x8] sm:$0xff]
        %v330 = vsel %vm252, %v326, 0
        %332 = vmatprep.subr.mxu0 0.0
        %333 = vmatpush1.msra.mxu0 0.0
        %334 = vmatprep.subr.mxu0 0.0
        %335 = vmatpush1.msra.mxu0 0.0
        %336 = vmatprep.subr.mxu0 0.0
        %337 = vmatpush1.msra.mxu0 0.0
        %338 = vmatprep.subr.mxu0 0.0
        %339 = vmatpush1.msra.mxu0 0.0
        %340 = vmatprep.subr.mxu0 0.0
        %341 = vmatpush1.msra.mxu0 0.0
        %342 = vmatprep.subr.mxu0 0.0
        %343 = vmatpush1.msra.mxu0 0.0
        %344 = vmatprep.subr.mxu0 0.0
        %345 = vmatpush1.msra.mxu0 0.0
        %346 = vmatprep.subr.mxu0 0.0
        %347 = vmatpush1.msra.mxu0 0.0
        %348 = vmatprep.subr.mxu0 0.0
        %349 = vmatpush1.msra.mxu0 0.0
        %350 = vmatprep.subr.mxu0 0.0
        %351 = vmatpush1.msra.mxu0 0.0
        %352 = vmatprep.subr.mxu0 0.0
        %353 = vmatpush1.msra.mxu0 0.0
        %354 = vmatprep.subr.mxu0 0.0
        %355 = vmatpush1.msra.mxu0 0.0
        %356 = vmatprep.subr.mxu0 0.0
        %357 = vmatpush1.msra.mxu0 0.0
        %358 = vmatprep.subr.mxu0 0.0
        %359 = vmatpush1.msra.mxu0 0.0
        %360 = vmatprep.subr.mxu0 0.0
        %361 = vmatpush1.msra.mxu0 %v328
        %362 = vmatprep.subr.mxu0 0.0
        %363 = vmatpush1.msra.mxu0 %v327
        %364 = vmatprep.subr.mxu0 0.0
        %365 = vmatpush2.msra.mxu0 0.0
        %366 = vmatprep.subr.mxu0 0.0
        %367 = vmatpush2.msra.mxu0 0.0
        %368 = vmatprep.subr.mxu0 0.0
        %369 = vmatpush2.msra.mxu0 0.0
        %370 = vmatprep.subr.mxu0 0.0
        %371 = vmatpush2.msra.mxu0 0.0
        %372 = vmatprep.subr.mxu0 0.0
        %373 = vmatpush2.msra.mxu0 0.0
        %374 = vmatprep.subr.mxu0 0.0
        %375 = vmatpush2.msra.mxu0 0.0
        %376 = vmatprep.subr.mxu0 0.0
        %377 = vmatpush2.msra.mxu0 0.0
        %378 = vmatprep.subr.mxu0 0.0
        %379 = vmatpush2.msra.mxu0 0.0
        %380 = vmatprep.subr.mxu0 0.0
        %381 = vmatpush2.msra.mxu0 0.0
        %382 = vmatprep.subr.mxu0 0.0
        %383 = vmatpush2.msra.mxu0 0.0
        %384 = vmatprep.subr.mxu0 0.0
        %385 = vmatpush2.msra.mxu0 0.0
        %386 = vmatprep.subr.mxu0 0.0
        %387 = vmatpush2.msra.mxu0 0.0
        %388 = vmatprep.subr.mxu0 0.0
        %389 = vmatpush2.msra.mxu0 0.0
        %390 = vmatprep.subr.mxu0 0.0
        %391 = vmatpush2.msra.mxu0 0.0
        %392 = vmatprep.subr.mxu0 0.0
        %393 = vmatpush2.msra.mxu0 0.0
        %394 = vmatprep.subr.mxu0 0.0
        %395 = vmatpush2.msra.mxu0 0.0
        %396 = vmatprep.mubr.f32.mxu0 0.0
        %397 = vmatmul.mubr.f32.gmra.mxu0 %v330
        %v398 = vpop.f32.mrf.mxu0
        %v399 = vadd.f32 0.0, %v398
        %v400 = vpop.f32.mrf.mxu0
        %401 = vdwg.mxu0
        %v402 = vadd.f32 %v323, %v399
        %v403 = vld [vmem:[%s240 + $0x8] sm:$0xff]
        %v404 = vld [vmem:[%s3 + $0x10] sm:$0xff]
        %v405 = vld [vmem:[%s3 + $0x18] sm:$0xff]
        %v407 = vsel %vm252, %v403, 0
        %409 = vmatprep.subr.mxu0 0.0
        %410 = vmatpush1.msra.mxu0 0.0
        %411 = vmatprep.subr.mxu0 0.0
        %412 = vmatpush1.msra.mxu0 0.0
        %413 = vmatprep.subr.mxu0 0.0
        %414 = vmatpush1.msra.mxu0 0.0
        %415 = vmatprep.subr.mxu0 0.0
        %416 = vmatpush1.msra.mxu0 0.0
        %417 = vmatprep.subr.mxu0 0.0
        %418 = vmatpush1.msra.mxu0 0.0
        %419 = vmatprep.subr.mxu0 0.0
        %420 = vmatpush1.msra.mxu0 0.0
        %421 = vmatprep.subr.mxu0 0.0
        %422 = vmatpush1.msra.mxu0 0.0
        %423 = vmatprep.subr.mxu0 0.0
        %424 = vmatpush1.msra.mxu0 0.0
        %425 = vmatprep.subr.mxu0 0.0
        %426 = vmatpush1.msra.mxu0 0.0
        %427 = vmatprep.subr.mxu0 0.0
        %428 = vmatpush1.msra.mxu0 0.0
        %429 = vmatprep.subr.mxu0 0.0
        %430 = vmatpush1.msra.mxu0 0.0
        %431 = vmatprep.subr.mxu0 0.0
        %432 = vmatpush1.msra.mxu0 0.0
        %433 = vmatprep.subr.mxu0 0.0
        %434 = vmatpush1.msra.mxu0 0.0
        %435 = vmatprep.subr.mxu0 0.0
        %436 = vmatpush1.msra.mxu0 0.0
        %437 = vmatprep.subr.mxu0 0.0
        %438 = vmatpush1.msra.mxu0 %v405
        %439 = vmatprep.subr.mxu0 0.0
        %440 = vmatpush1.msra.mxu0 %v404
        %441 = vmatprep.subr.mxu0 0.0
        %442 = vmatpush2.msra.mxu0 0.0
        %443 = vmatprep.subr.mxu0 0.0
        %444 = vmatpush2.msra.mxu0 0.0
        %445 = vmatprep.subr.mxu0 0.0
        %446 = vmatpush2.msra.mxu0 0.0
        %447 = vmatprep.subr.mxu0 0.0
        %448 = vmatpush2.msra.mxu0 0.0
        %449 = vmatprep.subr.mxu0 0.0
        %450 = vmatpush2.msra.mxu0 0.0
        %451 = vmatprep.subr.mxu0 0.0
        %452 = vmatpush2.msra.mxu0 0.0
        %453 = vmatprep.subr.mxu0 0.0
        %454 = vmatpush2.msra.mxu0 0.0
        %455 = vmatprep.subr.mxu0 0.0
        %456 = vmatpush2.msra.mxu0 0.0
        %457 = vmatprep.subr.mxu0 0.0
        %458 = vmatpush2.msra.mxu0 0.0
        %459 = vmatprep.subr.mxu0 0.0
        %460 = vmatpush2.msra.mxu0 0.0
        %461 = vmatprep.subr.mxu0 0.0
        %462 = vmatpush2.msra.mxu0 0.0
        %463 = vmatprep.subr.mxu0 0.0
        %464 = vmatpush2.msra.mxu0 0.0
        %465 = vmatprep.subr.mxu0 0.0
        %466 = vmatpush2.msra.mxu0 0.0
        %467 = vmatprep.subr.mxu0 0.0
        %468 = vmatpush2.msra.mxu0 0.0
        %469 = vmatprep.subr.mxu0 0.0
        %470 = vmatpush2.msra.mxu0 0.0
        %471 = vmatprep.subr.mxu0 0.0
        %472 = vmatpush2.msra.mxu0 0.0
        %473 = vmatprep.mubr.f32.mxu0 0.0
        %474 = vmatmul.mubr.f32.gmra.mxu0 %v407
        %v475 = vpop.f32.mrf.mxu0
        %v476 = vadd.f32 0.0, %v475
        %v477 = vpop.f32.mrf.mxu0
        %478 = vdwg.mxu0
        %v479 = vadd.f32 %v402, %v476
        %480 = vst.msk [vmem:[%s231] sm:$0xff] %vm252, %v479
        %s481 = sand.u32 %s142, 1
        %s482 = scalar_lea.sflag [#allocation3], %s481
        %s483 = sand.u32 %s142, 1
        %s484 = smul.addr %s483, 8
        %s485 = scalar_lea.vmem [#allocation2], %s484
        // Predicated region
        $region41: #{layer_forward.7} parent=39 // pred_check
          %p486 = pneg %p152
        $region42: #{layer_forward.7} parent=39 // pred_check_branch
          %488 = sbr.rel (%p486) target = $region44
        $region43: #{layer_forward.7} parent=39 // pred_region
          %s490 = ssub.s32 128, 128
          %491 = vsyncadd %s482, %s490
          %s492 = smul.addr %s19, 128
          %s493 = scalar_lea.hbm %s5, %s492
          %s495 = sshll.u32 %s485, 4
          %s496 = int_to_ptr.vmem [resolvable:$true] %s495
          %498 = dma.vmem_to_hbm [thread:$0]  %s496, 128, %s493, %s482
        $region44: #{layer_forward.7} parent=39 // pred_fallthru
          _
      $region40: #{layer_forward.7} parent=5 // pred_fallthru
        _
      %p499 = scmp.le.s32.totalorder 2, %s14
      // Predicated region
      $region45: #{layer_forward.7} parent=5 // pred_check
        %p500 = pneg %p499
      $region46: #{layer_forward.7} parent=5 // pred_check_branch
        %502 = sbr.rel (%p500) target = $region48
      $region47: #{layer_forward.7} parent=5 // pred_region
        %s503 = ssub.s32 %s14, 2
        // Predicated region
        $region49: #{layer_forward.7} parent=47 // pred_check
          %p504 = pneg %p158
        $region50: #{layer_forward.7} parent=47 // pred_check_branch
          %506 = sbr.rel (%p504) target = $region52
        $region51: #{layer_forward.7} parent=47 // pred_region
          %s507 = sand.u32 %s143, 1
          %s508 = scalar_lea.sflag [#allocation3], %s507
          %s509 = sand.u32 %s143, 1
          %s510 = smul.addr %s509, 8
          %s511 = scalar_lea.vmem [#allocation2], %s510
          %512 = dma.done %s508, 128
        $region52: #{layer_forward.7} parent=47 // pred_fallthru
          _
      $region48: #{layer_forward.7} parent=5 // pred_fallthru
        _
    $region6: #{layer_forward.7} parent=1 // loop_footer
      %s18 = sadd.s32 1, %s14
    $region7: #{layer_forward.7} parent=1 // loop_footer_branch
      %13 = sbr.rel target = $region3
    $region8: #{layer_forward.7} parent=1 // loop_exit
      _
    %513 = vsyncpa [#allocation3], 1
    %s514 = scalar_lea.sflag [#allocation3], 1
    %515 = vsyncpa %s514, 1

// kernel: layer_forward.4
$region0: #{layer_forward.4}
  #allocation0 [shape = 'u32[]', space=smem, size = 0x4, offset = 0x4, fixed_abs, tag = 'smem constant byte address 0x4 - core index']
  #allocation1 [shape = 'u32[144,128]{1,0:T(1,128)}', space=vmem, size = 0x12000, scoped, tag = 'internal scratch']
  %s0 = inlined_call_operand.vmem [shape: f32[128,33], index: 0, kind: input, shape index: {}]
  %s1 = inlined_call_operand.vmem [shape: f32[128,16], index: 1, kind: input, shape index: {}]
  %s2 = inlined_call_operand.hbm [shape: f32[33,112], index: 2, kind: input, shape index: {}]
  %s3 = inlined_call_operand.hbm [shape: f32[1,112], index: 3, kind: input, shape index: {}]
  %s4 = inlined_call_operand.vmem [shape: f32[112,64], index: 4, kind: input, shape index: {}]
  %s5 = inlined_call_operand.hbm [shape: f32[1,64], index: 5, kind: input, shape index: {}]
  %s6 = inlined_call_operand.vmem [shape: f32[8,16], index: 6, kind: input, shape index: {}]
  %s7 = inlined_call_operand.vmem [shape: f32[16,8], index: 7, kind: input, shape index: {}]
  %s8 = inlined_call_operand.vmem [shape: f32[8,16], index: 8, kind: input, shape index: {}]
  %s9 = inlined_call_operand.vmem [shape: f32[64,72], index: 9, kind: output, shape index: {}]
  %s10 = sld [smem:[#allocation0]]
  $region81: #{layer_forward.4} parent=0
    _
  %s12 = ssub.s32 1, %s10
  %s13 = scalar_select 0, %s12, %s10
  $region1: #{layer_forward.4} parent=0
    #allocation2 [shape = 'u8[20480]{0}', space=vmem, size = 0x5000, scoped, tag = 'input window, operand 2, single buffered']
    #allocation3 [shape = 's32[2]{0}', space=sflag, size = 0x8, scoped, tag = 'scoped memory for layer_forward.4']
    #allocation4 [shape = 'u8[512]{0}', space=vmem, size = 0x400, scoped, tag = 'input window, operand 3, single buffered']
    #allocation5 [shape = 's32[1]{0}', space=sflag, size = 0x4, scoped, tag = 'scoped memory for layer_forward.4']
    #allocation6 [shape = 'u8[512]{0}', space=vmem, size = 0x400, scoped, tag = 'input window, operand 5, single buffered']
    %14 = vsyncpa [#allocation3], 0
    %15 = vsyncpa [#allocation5], 0
    loop: start=0, step=1, limit=10
    $region2: #{layer_forward.4} parent=1 // loop_pre_header
      _
    $region3: #{layer_forward.4} parent=1 // loop_header
      %s17 = sphi 0, %s21
      %p18 = scmp.ge.s32.totalorder %s17, 10
      %s27 = sphi 0, %s29
      %s30 = sphi 0, %s27
      %s31 = sphi 0, %s30
      %s47 = sphi 0, %s31
      %s53 = sphi 0, %s55
      %s56 = sphi 0, %s53
      %s57 = sphi 0, %s56
      %s73 = sphi 0, %s57
      %s77 = sphi 0, %s77
      %s79 = sphi 0, %s77
      %s80 = sphi 0, %s79
      %s94 = sphi 0, %s80
      %s98 = sphi 0, %s98
      %s100 = sphi 0, %s98
      %s101 = sphi 0, %s100
      %s115 = sphi 0, %s101
      %s119 = sphi 0, %s119
      %s121 = sphi 0, %s119
      %s122 = sphi 0, %s121
      %s136 = sphi 0, %s122
      %s140 = sphi 0, %s140
      %s142 = sphi 0, %s140
      %s143 = sphi 0, %s142
      %s157 = sphi 0, %s143
      %s161 = sphi 0, %s161
      %s163 = sphi 0, %s161
      %s164 = sphi 0, %s163
      %s178 = sphi 0, %s164
      %s182 = sphi 0, %s182
      %s184 = sphi 0, %s182
      %s185 = sphi 0, %s184
      %s199 = sphi 0, %s185
      %s203 = sphi 0, %s203
      %s205 = sphi 0, %s203
      %s206 = sphi 0, %s205
      %s220 = sphi 0, %s206
      %s226 = sphi 0, %s228
      %s229 = sphi 0, %s226
      %s230 = sphi 0, %s229
      %s246 = sphi 0, %s230
    $region4: #{layer_forward.4} parent=1 // loop_header_branch
      %20 = sbr.rel (%p18) target = $region8
    $region5: #{layer_forward.4} parent=1 // loop_body
      %s22 = ssub.s32 %s17, 1
      %s23 = ssub.s32 %s17, 2
      %s24 = sadd.s32 %s17, 1
      %s25 = ssub.s32 %s17, %s24
      %p26 = scmp.eq.s32.totalorder %s25, 0
      %s28 = sadd.s32 %s27, 1
      %s29 = scalar_select %p26, %s27, %s28
      %p32 = pneg %p26
      %p33 = scmp.eq.s32.totalorder %s17, 7
      %p34 = por %p32, %p33
      %p35 = scmp.ne.s32.totalorder %s27, %s30
      %p36 = scmp.eq.s32.totalorder %s17, 0
      %p37 = por %p35, %p36
      %p38 = scmp.ne.s32.totalorder %s27, %s30
      %p39 = scmp.eq.s32.totalorder %s22, 7
      %p40 = por %p38, %p39
      %p41 = scmp.ne.s32.totalorder %s30, %s31
      %p42 = scmp.eq.s32.totalorder %s22, 0
      %p43 = por %p41, %p42
      %p44 = scmp.ne.s32.totalorder %s30, %s31
      %p45 = scmp.eq.s32.totalorder %s23, 7
      %p46 = por %p44, %p45
      %p48 = scmp.ne.s32.totalorder %s31, %s47
      %p49 = scmp.eq.s32.totalorder %s23, 0
      %p50 = por %p48, %p49
      %s51 = ssub.s32 %s17, %s24
      %p52 = scmp.eq.s32.totalorder %s51, 0
      %s54 = sadd.s32 %s53, 1
      %s55 = scalar_select %p52, %s53, %s54
      %p58 = pneg %p52
      %p59 = scmp.eq.s32.totalorder %s17, 7
      %p60 = por %p58, %p59
      %p61 = scmp.ne.s32.totalorder %s53, %s56
      %p62 = scmp.eq.s32.totalorder %s17, 0
      %p63 = por %p61, %p62
      %p64 = scmp.ne.s32.totalorder %s53, %s56
      %p65 = scmp.eq.s32.totalorder %s22, 7
      %p66 = por %p64, %p65
      %p67 = scmp.ne.s32.totalorder %s56, %s57
      %p68 = scmp.eq.s32.totalorder %s22, 0
      %p69 = por %p67, %p68
      %p70 = scmp.ne.s32.totalorder %s56, %s57
      %p71 = scmp.eq.s32.totalorder %s23, 7
      %p72 = por %p70, %p71
      %p74 = scmp.ne.s32.totalorder %s57, %s73
      %p75 = scmp.eq.s32.totalorder %s23, 0
      %p76 = por %p74, %p75
      %s78 = sadd.s32 %s77, 1
      %p81 = scmp.eq.s32.totalorder %s17, 7
      %p82 = scmp.ne.s32.totalorder %s77, %s79
      %p83 = scmp.eq.s32.totalorder %s17, 0
      %p84 = por %p82, %p83
      %p85 = scmp.ne.s32.totalorder %s77, %s79
      %p86 = scmp.eq.s32.totalorder %s22, 7
      %p87 = por %p85, %p86
      %p88 = scmp.ne.s32.totalorder %s79, %s80
      %p89 = scmp.eq.s32.totalorder %s22, 0
      %p90 = por %p88, %p89
      %p91 = scmp.ne.s32.totalorder %s79, %s80
      %p92 = scmp.eq.s32.totalorder %s23, 7
      %p93 = por %p91, %p92
      %p95 = scmp.ne.s32.totalorder %s80, %s94
      %p96 = scmp.eq.s32.totalorder %s23, 0
      %p97 = por %p95, %p96
      %s99 = sadd.s32 %s98, 1
      %p102 = scmp.eq.s32.totalorder %s17, 7
      %p103 = scmp.ne.s32.totalorder %s98, %s100
      %p104 = scmp.eq.s32.totalorder %s17, 0
      %p105 = por %p103, %p104
      %p106 = scmp.ne.s32.totalorder %s98, %s100
      %p107 = scmp.eq.s32.totalorder %s22, 7
      %p108 = por %p106, %p107
      %p109 = scmp.ne.s32.totalorder %s100, %s101
      %p110 = scmp.eq.s32.totalorder %s22, 0
      %p111 = por %p109, %p110
      %p112 = scmp.ne.s32.totalorder %s100, %s101
      %p113 = scmp.eq.s32.totalorder %s23, 7
      %p114 = por %p112, %p113
      %p116 = scmp.ne.s32.totalorder %s101, %s115
      %p117 = scmp.eq.s32.totalorder %s23, 0
      %p118 = por %p116, %p117
      %s120 = sadd.s32 %s119, 1
      %p123 = scmp.eq.s32.totalorder %s17, 7
      %p124 = scmp.ne.s32.totalorder %s119, %s121
      %p125 = scmp.eq.s32.totalorder %s17, 0
      %p126 = por %p124, %p125
      %p127 = scmp.ne.s32.totalorder %s119, %s121
      %p128 = scmp.eq.s32.totalorder %s22, 7
      %p129 = por %p127, %p128
      %p130 = scmp.ne.s32.totalorder %s121, %s122
      %p131 = scmp.eq.s32.totalorder %s22, 0
      %p132 = por %p130, %p131
      %p133 = scmp.ne.s32.totalorder %s121, %s122
      %p134 = scmp.eq.s32.totalorder %s23, 7
      %p135 = por %p133, %p134
      %p137 = scmp.ne.s32.totalorder %s122, %s136
      %p138 = scmp.eq.s32.totalorder %s23, 0
      %p139 = por %p137, %p138
      %s141 = sadd.s32 %s140, 1
      %p144 = scmp.eq.s32.totalorder %s17, 7
      %p145 = scmp.ne.s32.totalorder %s140, %s142
      %p146 = scmp.eq.s32.totalorder %s17, 0
      %p147 = por %p145, %p146
      %p148 = scmp.ne.s32.totalorder %s140, %s142
      %p149 = scmp.eq.s32.totalorder %s22, 7
      %p150 = por %p148, %p149
      %p151 = scmp.ne.s32.totalorder %s142, %s143
      %p152 = scmp.eq.s32.totalorder %s22, 0
      %p153 = por %p151, %p152
      %p154 = scmp.ne.s32.totalorder %s142, %s143
      %p155 = scmp.eq.s32.totalorder %s23, 7
      %p156 = por %p154, %p155
      %p158 = scmp.ne.s32.totalorder %s143, %s157
      %p159 = scmp.eq.s32.totalorder %s23, 0
      %p160 = por %p158, %p159
      %s162 = sadd.s32 %s161, 1
      %p165 = scmp.eq.s32.totalorder %s17, 7
      %p166 = scmp.ne.s32.totalorder %s161, %s163
      %p167 = scmp.eq.s32.totalorder %s17, 0
      %p168 = por %p166, %p167
      %p169 = scmp.ne.s32.totalorder %s161, %s163
      %p170 = scmp.eq.s32.totalorder %s22, 7
      %p171 = por %p169, %p170
      %p172 = scmp.ne.s32.totalorder %s163, %s164
      %p173 = scmp.eq.s32.totalorder %s22, 0
      %p174 = por %p172, %p173
      %p175 = scmp.ne.s32.totalorder %s163, %s164
      %p176 = scmp.eq.s32.totalorder %s23, 7
      %p177 = por %p175, %p176
      %p179 = scmp.ne.s32.totalorder %s164, %s178
      %p180 = scmp.eq.s32.totalorder %s23, 0
      %p181 = por %p179, %p180
      %s183 = sadd.s32 %s182, 1
      %p186 = scmp.eq.s32.totalorder %s17, 7
      %p187 = scmp.ne.s32.totalorder %s182, %s184
      %p188 = scmp.eq.s32.totalorder %s17, 0
      %p189 = por %p187, %p188
      %p190 = scmp.ne.s32.totalorder %s182, %s184
      %p191 = scmp.eq.s32.totalorder %s22, 7
      %p192 = por %p190, %p191
      %p193 = scmp.ne.s32.totalorder %s184, %s185
      %p194 = scmp.eq.s32.totalorder %s22, 0
      %p195 = por %p193, %p194
      %p196 = scmp.ne.s32.totalorder %s184, %s185
      %p197 = scmp.eq.s32.totalorder %s23, 7
      %p198 = por %p196, %p197
      %p200 = scmp.ne.s32.totalorder %s185, %s199
      %p201 = scmp.eq.s32.totalorder %s23, 0
      %p202 = por %p200, %p201
      %s204 = sadd.s32 %s203, 1
      %p207 = scmp.eq.s32.totalorder %s17, 7
      %p208 = scmp.ne.s32.totalorder %s203, %s205
      %p209 = scmp.eq.s32.totalorder %s17, 0
      %p210 = por %p208, %p209
      %p211 = scmp.ne.s32.totalorder %s203, %s205
      %p212 = scmp.eq.s32.totalorder %s22, 7
      %p213 = por %p211, %p212
      %p214 = scmp.ne.s32.totalorder %s205, %s206
      %p215 = scmp.eq.s32.totalorder %s22, 0
      %p216 = por %p214, %p215
      %p217 = scmp.ne.s32.totalorder %s205, %s206
      %p218 = scmp.eq.s32.totalorder %s23, 7
      %p219 = por %p217, %p218
      %p221 = scmp.ne.s32.totalorder %s206, %s220
      %p222 = scmp.eq.s32.totalorder %s23, 0
      %p223 = por %p221, %p222
      %s224 = ssub.s32 %s17, %s24
      %p225 = scmp.eq.s32.totalorder %s224, 0
      %s227 = sadd.s32 %s226, 1
      %s228 = scalar_select %p225, %s226, %s227
      %p231 = pneg %p225
      %p232 = scmp.eq.s32.totalorder %s17, 7
      %p233 = por %p231, %p232
      %p234 = scmp.ne.s32.totalorder %s226, %s229
      %p235 = scmp.eq.s32.totalorder %s17, 0
      %p236 = por %p234, %p235
      %p237 = scmp.ne.s32.totalorder %s226, %s229
      %p238 = scmp.eq.s32.totalorder %s22, 7
      %p239 = por %p237, %p238
      %p240 = scmp.ne.s32.totalorder %s229, %s230
      %p241 = scmp.eq.s32.totalorder %s22, 0
      %p242 = por %p240, %p241
      %p243 = scmp.ne.s32.totalorder %s229, %s230
      %p244 = scmp.eq.s32.totalorder %s23, 7
      %p245 = por %p243, %p244
      %p247 = scmp.ne.s32.totalorder %s230, %s246
      %p248 = scmp.eq.s32.totalorder %s23, 0
      %p249 = por %p247, %p248
      %p250 = scmp.le.s32.totalorder 1, %s17
      %p251 = scmp.lt.s32.totalorder %s17, 9
      %p252 = pnand %p250, %p251
      %p253 = pneg %p252
      // Predicated region
      $region9: #{layer_forward.4} parent=5 // pred_check
        _
      $region10: #{layer_forward.4} parent=5 // pred_check_branch
        %255 = sbr.rel (%p252) target = $region12
      $region11: #{layer_forward.4} parent=5 // pred_region
        %s256 = ssub.s32 %s17, 1
        // Predicated region
        $region13: #{layer_forward.4} parent=11 // pred_check
          %p257 = pneg %p90
        $region14: #{layer_forward.4} parent=11 // pred_check_branch
          %259 = sbr.rel (%p257) target = $region16
        $region15: #{layer_forward.4} parent=11 // pred_region
          %s261 = ssub.s32 640, 640
          %262 = vsyncadd [#allocation3], %s261
          %s263 = sshll.u32 [#allocation2], 4
          %s264 = int_to_ptr.vmem [resolvable:$true] %s263
          %269 = dma.hbm_to_vmem [thread:$0]  %s2, 640, %s264, [#allocation3], 128, 128, 8
        $region16: #{layer_forward.4} parent=11 // pred_fallthru
          _
        // Predicated region
        $region17: #{layer_forward.4} parent=11 // pred_check
          %p270 = pneg %p111
        $region18: #{layer_forward.4} parent=11 // pred_check_branch
          %272 = sbr.rel (%p270) target = $region20
        $region19: #{layer_forward.4} parent=11 // pred_region
          %s274 = ssub.s32 16, 16
          %275 = vsyncadd [#allocation5], %s274
          %s277 = sshll.u32 [#allocation4], 4
          %s278 = int_to_ptr.vmem [resolvable:$true] %s277
          %280 = dma.hbm_to_vmem [thread:$0]  %s3, 16, %s278, [#allocation5]
        $region20: #{layer_forward.4} parent=11 // pred_fallthru
          _
        // Predicated region
        $region21: #{layer_forward.4} parent=11 // pred_check
          %p281 = pneg %p132
        $region22: #{layer_forward.4} parent=11 // pred_check_branch
          %283 = sbr.rel (%p281) target = $region24
        $region23: #{layer_forward.4} parent=11 // pred_region
          _
        $region24: #{layer_forward.4} parent=11 // pred_fallthru
          _
        // Predicated region
        $region25: #{layer_forward.4} parent=11 // pred_check
          %p284 = pneg %p153
        $region26: #{layer_forward.4} parent=11 // pred_check_branch
          %286 = sbr.rel (%p284) target = $region28
        $region27: #{layer_forward.4} parent=11 // pred_region
          %s288 = ssub.s32 16, 16
          %289 = vsyncadd [#allocation5], %s288
          %s291 = sshll.u32 [#allocation6], 4
          %s292 = int_to_ptr.vmem [resolvable:$true] %s291
          %294 = dma.hbm_to_vmem [thread:$0]  %s5, 16, %s292, [#allocation5]
        $region28: #{layer_forward.4} parent=11 // pred_fallthru
          _
        // Predicated region
        $region29: #{layer_forward.4} parent=11 // pred_check
          %p295 = pneg %p174
        $region30: #{layer_forward.4} parent=11 // pred_check_branch
          %297 = sbr.rel (%p295) target = $region32
        $region31: #{layer_forward.4} parent=11 // pred_region
          _
        $region32: #{layer_forward.4} parent=11 // pred_fallthru
          _
        // Predicated region
        $region33: #{layer_forward.4} parent=11 // pred_check
          %p298 = pneg %p195
        $region34: #{layer_forward.4} parent=11 // pred_check_branch
          %300 = sbr.rel (%p298) target = $region36
        $region35: #{layer_forward.4} parent=11 // pred_region
          _
        $region36: #{layer_forward.4} parent=11 // pred_fallthru
          _
        // Predicated region
        $region37: #{layer_forward.4} parent=11 // pred_check
          %p301 = pneg %p216
        $region38: #{layer_forward.4} parent=11 // pred_check_branch
          %303 = sbr.rel (%p301) target = $region40
        $region39: #{layer_forward.4} parent=11 // pred_region
          _
        $region40: #{layer_forward.4} parent=11 // pred_fallthru
          _
      $region12: #{layer_forward.4} parent=5 // pred_fallthru
        _
      %p304 = scmp.lt.s32.totalorder %s17, 8
      // Predicated region
      $region41: #{layer_forward.4} parent=5 // pred_check
        %p305 = pneg %p304
      $region42: #{layer_forward.4} parent=5 // pred_check_branch
        %307 = sbr.rel (%p305) target = $region44
      $region43: #{layer_forward.4} parent=5 // pred_region
        // Predicated region
        $region45: #{layer_forward.4} parent=43 // pred_check
          %p308 = pneg %p37
        $region46: #{layer_forward.4} parent=43 // pred_check_branch
          %310 = sbr.rel (%p308) target = $region48
        $region47: #{layer_forward.4} parent=43 // pred_region
          %s311 = smul.u32 2, %s17
          %p312 = scmp.lt.s32.totalorder %s311, 15
          %s313 = scalar_select %p312, %s311, 15
          %s314 = smul.addr %s313, 8
          %s315 = scalar_lea.vmem %s0, %s314
          %s316 = smul.u32 2, %s17
        $region48: #{layer_forward.4} parent=43 // pred_fallthru
          _
        // Predicated region
        $region49: #{layer_forward.4} parent=43 // pred_check
          %p317 = pneg %p63
        $region50: #{layer_forward.4} parent=43 // pred_check_branch
          %319 = sbr.rel (%p317) target = $region52
        $region51: #{layer_forward.4} parent=43 // pred_region
          %s320 = smul.u32 2, %s17
          %p321 = scmp.lt.s32.totalorder %s320, 15
          %s322 = scalar_select %p321, %s320, 15
          %s323 = smul.addr %s322, 8
          %s324 = scalar_lea.vmem %s1, %s323
          %s325 = smul.u32 2, %s17
        $region52: #{layer_forward.4} parent=43 // pred_fallthru
          _
      $region44: #{layer_forward.4} parent=5 // pred_fallthru
        _
      %p326 = scmp.le.s32.totalorder 1, %s17
      %p327 = scmp.lt.s32.totalorder %s17, 9
      %p328 = pnand %p326, %p327
      %p329 = pneg %p328
      // Predicated region
      $region53: #{layer_forward.4} parent=5 // pred_check
        _
      $region54: #{layer_forward.4} parent=5 // pred_check_branch
        %331 = sbr.rel (%p328) target = $region56
      $region55: #{layer_forward.4} parent=5 // pred_region
        %s332 = ssub.s32 %s17, 1
        // Predicated region
        $region57: #{layer_forward.4} parent=55 // pred_check
          %p333 = pneg %p90
        $region58: #{layer_forward.4} parent=55 // pred_check_branch
          %335 = sbr.rel (%p333) target = $region60
        $region59: #{layer_forward.4} parent=55 // pred_region
          %336 = dma.done [#allocation3], 640
        $region60: #{layer_forward.4} parent=55 // pred_fallthru
          _
        // Predicated region
        $region61: #{layer_forward.4} parent=55 // pred_check
          %p337 = pneg %p111
        $region62: #{layer_forward.4} parent=55 // pred_check_branch
          %339 = sbr.rel (%p337) target = $region64
        $region63: #{layer_forward.4} parent=55 // pred_region
          %340 = dma.done [#allocation5], 16
        $region64: #{layer_forward.4} parent=55 // pred_fallthru
          _
        // Predicated region
        $region65: #{layer_forward.4} parent=55 // pred_check
          %p341 = pneg %p153
        $region66: #{layer_forward.4} parent=55 // pred_check_branch
          %343 = sbr.rel (%p341) target = $region68
        $region67: #{layer_forward.4} parent=55 // pred_region
          %344 = dma.done [#allocation5], 16
        $region68: #{layer_forward.4} parent=55 // pred_fallthru
          _
        %s345 = smul.u32 2, %s22
        %p346 = scmp.lt.s32.totalorder %s345, 15
        %s347 = scalar_select %p346, %s345, 15
        %s348 = smul.addr %s347, 8
        %s349 = scalar_lea.vmem %s0, %s348
        %p350 = pneg %p43
        %p351 = pneg %p40
        %s352 = smul.u32 2, %s22
        %p353 = scmp.lt.s32.totalorder %s352, 15
        %s354 = scalar_select %p353, %s352, 15
        %s355 = smul.addr %s354, 8
        %s356 = scalar_lea.vmem %s1, %s355
        %p357 = pneg %p69
        %p358 = pneg %p66
        %p359 = pneg %p90
        %p360 = pneg %p87
        %p361 = pneg %p111
        %p362 = pneg %p108
        %p363 = pneg %p132
        %p364 = pneg %p129
        %p365 = pneg %p153
        %p366 = pneg %p150
        %p367 = pneg %p174
        %p368 = pneg %p171
        %p369 = pneg %p195
        %p370 = pneg %p192
        %p371 = pneg %p216
        %p372 = pneg %p213
        %p373 = pneg %p242
        %p374 = pneg %p239
        %p375 = scmp.lt.s32.totalorder %s22, 7
        %s376 = scalar_select %p375, %s22, 7
        %s377 = smul.addr %s376, 8
        %s378 = scalar_lea.vmem %s9, %s377
        %s379 = smul.u32 2, %s22
        %p380 = scmp.lt.s32.totalorder %s379, 15
        %s381 = scalar_select %p380, %s379, 15
        %s382 = smul.addr %s381, 8
        %s383 = scalar_lea.vmem %s0, %s382
        %s384 = smul.u32 2, %s22
        %s385 = smul.u32 2, %s22
        %p386 = scmp.lt.s32.totalorder %s385, 15
        %s387 = scalar_select %p386, %s385, 15
        %s388 = smul.addr %s387, 8
        %s389 = scalar_lea.vmem %s1, %s388
        %s390 = smul.u32 2, %s22
        %p391 = scmp.lt.s32.totalorder %s22, 7
        %s392 = scalar_select %p391, %s22, 7
        %s393 = smul.addr %s392, 8
        %s394 = scalar_lea.vmem %s9, %s393
        %v395 = vld [vmem:[%s383] sm:$0xff]
        %v396 = vld [vmem:[%s383 + $0x8] sm:$0xff]
        %v397 = vld [vmem:[#allocation2] sm:$0xff]
        %v398 = vld [vmem:[#allocation2 + $0x8] sm:$0xff]
        %v399 = vld [vmem:[#allocation2 + $0x10] sm:$0xff]
        %v400 = vld [vmem:[#allocation2 + $0x18] sm:$0xff]
        %v401 = vld [vmem:[#allocation2 + $0x20] sm:$0x1]
        %v402 = vld [vmem:[#allocation4] sm:$0x1]
        %v404 = vlaneseq
        %v405 = vshrl.u32 %v404, 7
        %v406 = vsub.s32 0, %v405
        %v407 = vrot.slane %v402, %v406
        %vm409 = vcmask 269312
        %v411 = vsel %vm409, %v395, 0
        %v414 = vsel %vm409, %v396, 0
        %vm416 = vcmask 1040384
        %v418 = vsel %vm416, %v401, 0
        %420 = vmatprep.subr.mxu0 0.0
        %421 = vmatpush1.msra.mxu0 0.0
        %422 = vmatprep.subr.mxu0 0.0
        %423 = vmatpush1.msra.mxu0 0.0
        %424 = vmatprep.subr.mxu0 0.0
        %425 = vmatpush1.msra.mxu0 0.0
        %426 = vmatprep.subr.mxu0 0.0
        %427 = vmatpush1.msra.mxu0 0.0
        %428 = vmatprep.subr.mxu0 0.0
        %429 = vmatpush1.msra.mxu0 0.0
        %430 = vmatprep.subr.mxu0 0.0
        %431 = vmatpush1.msra.mxu0 0.0
        %432 = vmatprep.subr.mxu0 0.0
        %433 = vmatpush1.msra.mxu0 0.0
        %434 = vmatprep.subr.mxu0 0.0
        %435 = vmatpush1.msra.mxu0 0.0
        %436 = vmatprep.subr.mxu0 0.0
        %437 = vmatpush1.msra.mxu0 0.0
        %438 = vmatprep.subr.mxu0 0.0
        %439 = vmatpush1.msra.mxu0 0.0
        %440 = vmatprep.subr.mxu0 0.0
        %441 = vmatpush1.msra.mxu0 0.0
        %442 = vmatprep.subr.mxu0 0.0
        %443 = vmatpush1.msra.mxu0 %v418
        %444 = vmatprep.subr.mxu0 0.0
        %445 = vmatpush1.msra.mxu0 %v400
        %446 = vmatprep.subr.mxu0 0.0
        %447 = vmatpush1.msra.mxu0 %v399
        %448 = vmatprep.subr.mxu0 0.0
        %449 = vmatpush1.msra.mxu0 %v398
        %450 = vmatprep.subr.mxu0 0.0
        %451 = vmatpush1.msra.mxu0 %v397
        %452 = vmatprep.subr.mxu0 0.0
        %453 = vmatpush2.msra.mxu0 0.0
        %454 = vmatprep.subr.mxu0 0.0
        %455 = vmatpush2.msra.mxu0 0.0
        %456 = vmatprep.subr.mxu0 0.0
        %457 = vmatpush2.msra.mxu0 0.0
        %458 = vmatprep.subr.mxu0 0.0
        %459 = vmatpush2.msra.mxu0 0.0
        %460 = vmatprep.subr.mxu0 0.0
        %461 = vmatpush2.msra.mxu0 0.0
        %462 = vmatprep.subr.mxu0 0.0
        %463 = vmatpush2.msra.mxu0 0.0
        %464 = vmatprep.subr.mxu0 0.0
        %465 = vmatpush2.msra.mxu0 0.0
        %466 = vmatprep.subr.mxu0 0.0
        %467 = vmatpush2.msra.mxu0 0.0
        %468 = vmatprep.subr.mxu0 0.0
        %469 = vmatpush2.msra.mxu0 0.0
        %470 = vmatprep.subr.mxu0 0.0
        %471 = vmatpush2.msra.mxu0 0.0
        %472 = vmatprep.subr.mxu0 0.0
        %473 = vmatpush2.msra.mxu0 0.0
        %474 = vmatprep.subr.mxu0 0.0
        %475 = vmatpush2.msra.mxu0 0.0
        %476 = vmatprep.subr.mxu0 0.0
        %477 = vmatpush2.msra.mxu0 0.0
        %478 = vmatprep.subr.mxu0 0.0
        %479 = vmatpush2.msra.mxu0 0.0
        %480 = vmatprep.subr.mxu0 0.0
        %481 = vmatpush2.msra.mxu0 0.0
        %482 = vmatprep.subr.mxu0 0.0
        %483 = vmatpush2.msra.mxu0 0.0
        %484 = vmatprep.mubr.f32.mxu0 0.0
        %485 = vmatmul.mubr.f32.gmra.mxu0 %v411
        %v486 = vpop.f32.mrf.mxu0
        %v487 = vadd.f32 %v407, %v486
        %v488 = vpop.f32.mrf.mxu0
        %489 = vmatprep.mubr.f32.mxu0 0.0
        %490 = vmatmul.mubr.f32.gmra.mxu0 %v414
        %v491 = vpop.f32.mrf.mxu0
        %v492 = vadd.f32 %v407, %v491
        %v493 = vpop.f32.mrf.mxu0
        %494 = vdwg.mxu0
        %v495 = vmax.f32 %v487, 0.0
        %v496 = vmax.f32 %v492, 0.0
        %v497 = vld [vmem:[%s4] sm:$0xff]
        %v498 = vld [vmem:[%s4 + $0x8] sm:$0xff]
        %v499 = vld [vmem:[%s4 + $0x10] sm:$0xff]
        %v500 = vld [vmem:[%s4 + $0x18] sm:$0xff]
        %v501 = vld [vmem:[%s4 + $0x20] sm:$0xff]
        %v502 = vld [vmem:[%s4 + $0x28] sm:$0xff]
        %v503 = vld [vmem:[%s4 + $0x30] sm:$0xff]
        %v504 = vld [vmem:[%s4 + $0x38] sm:$0xff]
        %v505 = vld [vmem:[%s4 + $0x40] sm:$0xff]
        %v506 = vld [vmem:[%s4 + $0x48] sm:$0xff]
        %v507 = vld [vmem:[%s4 + $0x50] sm:$0xff]
        %v508 = vld [vmem:[%s4 + $0x58] sm:$0xff]
        %v509 = vld [vmem:[%s4 + $0x60] sm:$0xff]
        %v510 = vld [vmem:[%s4 + $0x68] sm:$0xff]
        %v511 = vld [vmem:[#allocation6] sm:$0x1]
        %v513 = vlaneseq
        %v514 = vshrl.u32 %v513, 7
        %v515 = vsub.s32 0, %v514
        %v516 = vrot.slane %v511, %v515
        %vm518 = vcmask 916480
        %v520 = vsel %vm518, %v495, 0
        %v523 = vsel %vm518, %v496, 0
        %525 = vmatprep.subr.mxu0 0.0
        %526 = vmatpush1.msra.mxu0 0.0
        %527 = vmatprep.subr.mxu0 0.0
        %528 = vmatpush1.msra.mxu0 0.0
        %529 = vmatprep.subr.mxu0 0.0
        %530 = vmatpush1.msra.mxu0 %v510
        %531 = vmatprep.subr.mxu0 0.0
        %532 = vmatpush1.msra.mxu0 %v509
        %533 = vmatprep.subr.mxu0 0.0
        %534 = vmatpush1.msra.mxu0 %v508
        %535 = vmatprep.subr.mxu0 0.0
        %536 = vmatpush1.msra.mxu0 %v507
        %537 = vmatprep.subr.mxu0 0.0
        %538 = vmatpush1.msra.mxu0 %v506
        %539 = vmatprep.subr.mxu0 0.0
        %540 = vmatpush1.msra.mxu0 %v505
        %541 = vmatprep.subr.mxu0 0.0
        %542 = vmatpush1.msra.mxu0 %v504
        %543 = vmatprep.subr.mxu0 0.0
        %544 = vmatpush1.msra.mxu0 %v503
        %545 = vmatprep.subr.mxu0 0.0
        %546 = vmatpush1.msra.mxu0 %v502
        %547 = vmatprep.subr.mxu0 0.0
        %548 = vmatpush1.msra.mxu0 %v501
        %549 = vmatprep.subr.mxu0 0.0
        %550 = vmatpush1.msra.mxu0 %v500
        %551 = vmatprep.subr.mxu0 0.0
        %552 = vmatpush1.msra.mxu0 %v499
        %553 = vmatprep.subr.mxu0 0.0
        %554 = vmatpush1.msra.mxu0 %v498
        %555 = vmatprep.subr.mxu0 0.0
        %556 = vmatpush1.msra.mxu0 %v497
        %557 = vmatprep.subr.mxu0 0.0
        %558 = vmatpush2.msra.mxu0 0.0
        %559 = vmatprep.subr.mxu0 0.0
        %560 = vmatpush2.msra.mxu0 0.0
        %561 = vmatprep.subr.mxu0 0.0
        %562 = vmatpush2.msra.mxu0 0.0
        %563 = vmatprep.subr.mxu0 0.0
        %564 = vmatpush2.msra.mxu0 0.0
        %565 = vmatprep.subr.mxu0 0.0
        %566 = vmatpush2.msra.mxu0 0.0
        %567 = vmatprep.subr.mxu0 0.0
        %568 = vmatpush2.msra.mxu0 0.0
        %569 = vmatprep.subr.mxu0 0.0
        %570 = vmatpush2.msra.mxu0 0.0
        %571 = vmatprep.subr.mxu0 0.0
        %572 = vmatpush2.msra.mxu0 0.0
        %573 = vmatprep.subr.mxu0 0.0
        %574 = vmatpush2.msra.mxu0 0.0
        %575 = vmatprep.subr.mxu0 0.0
        %576 = vmatpush2.msra.mxu0 0.0
        %577 = vmatprep.subr.mxu0 0.0
        %578 = vmatpush2.msra.mxu0 0.0
        %579 = vmatprep.subr.mxu0 0.0
        %580 = vmatpush2.msra.mxu0 0.0
        %581 = vmatprep.subr.mxu0 0.0
        %582 = vmatpush2.msra.mxu0 0.0
        %583 = vmatprep.subr.mxu0 0.0
        %584 = vmatpush2.msra.mxu0 0.0
        %585 = vmatprep.subr.mxu0 0.0
        %586 = vmatpush2.msra.mxu0 0.0
        %587 = vmatprep.subr.mxu0 0.0
        %588 = vmatpush2.msra.mxu0 0.0
        %589 = vmatprep.mubr.f32.mxu0 0.0
        %590 = vmatmul.mubr.f32.gmra.mxu0 %v520
        %v591 = vpop.f32.mrf.mxu0
        %v592 = vadd.f32 %v516, %v591
        %v593 = vpop.f32.mrf.mxu0
        %594 = vmatprep.mubr.f32.mxu0 0.0
        %595 = vmatmul.mubr.f32.gmra.mxu0 %v523
        %v596 = vpop.f32.mrf.mxu0
        %v597 = vadd.f32 %v516, %v596
        %v598 = vpop.f32.mrf.mxu0
        %599 = vdwg.mxu0
        %v600 = vmax.f32 %v592, 0.0
        %v601 = vmax.f32 %v597, 0.0
        %v602 = vld [vmem:[%s6] sm:$0xff]
        %vm603 = vcmask 130048
        %v605 = vsel %vm603, %v602, 0
        %607 = vmatprep.subr.mxu0 0.0
        %608 = vmatpush1.msra.mxu0 0.0
        %609 = vmatprep.subr.mxu0 0.0
        %610 = vmatpush1.msra.mxu0 0.0
        %611 = vmatprep.subr.mxu0 0.0
        %612 = vmatpush1.msra.mxu0 0.0
        %613 = vmatprep.subr.mxu0 0.0
        %614 = vmatpush1.msra.mxu0 0.0
        %615 = vmatprep.subr.mxu0 0.0
        %616 = vmatpush1.msra.mxu0 0.0
        %617 = vmatprep.subr.mxu0 0.0
        %618 = vmatpush1.msra.mxu0 0.0
        %619 = vmatprep.subr.mxu0 0.0
        %620 = vmatpush1.msra.mxu0 0.0
        %621 = vmatprep.subr.mxu0 0.0
        %622 = vmatpush1.msra.mxu0 0.0
        %623 = vmatprep.subr.mxu0 0.0
        %624 = vmatpush1.msra.mxu0 0.0
        %625 = vmatprep.subr.mxu0 0.0
        %626 = vmatpush1.msra.mxu0 0.0
        %627 = vmatprep.subr.mxu0 0.0
        %628 = vmatpush1.msra.mxu0 0.0
        %629 = vmatprep.subr.mxu0 0.0
        %630 = vmatpush1.msra.mxu0 0.0
        %631 = vmatprep.subr.mxu0 0.0
        %632 = vmatpush1.msra.mxu0 0.0
        %633 = vmatprep.subr.mxu0 0.0
        %634 = vmatpush1.msra.mxu0 0.0
        %635 = vmatprep.subr.mxu0 0.0
        %636 = vmatpush1.msra.mxu0 %v601
        %637 = vmatprep.subr.mxu0 0.0
        %638 = vmatpush1.msra.mxu0 %v600
        %639 = vmatprep.subr.mxu0 0.0
        %640 = vmatpush2.msra.mxu0 0.0
        %641 = vmatprep.subr.mxu0 0.0
        %642 = vmatpush2.msra.mxu0 0.0
        %643 = vmatprep.subr.mxu0 0.0
        %644 = vmatpush2.msra.mxu0 0.0
        %645 = vmatprep.subr.mxu0 0.0
        %646 = vmatpush2.msra.mxu0 0.0
        %647 = vmatprep.subr.mxu0 0.0
        %648 = vmatpush2.msra.mxu0 0.0
        %649 = vmatprep.subr.mxu0 0.0
        %650 = vmatpush2.msra.mxu0 0.0
        %651 = vmatprep.subr.mxu0 0.0
        %652 = vmatpush2.msra.mxu0 0.0
        %653 = vmatprep.subr.mxu0 0.0
        %654 = vmatpush2.msra.mxu0 0.0
        %655 = vmatprep.subr.mxu0 0.0
        %656 = vmatpush2.msra.mxu0 0.0
        %657 = vmatprep.subr.mxu0 0.0
        %658 = vmatpush2.msra.mxu0 0.0
        %659 = vmatprep.subr.mxu0 0.0
        %660 = vmatpush2.msra.mxu0 0.0
        %661 = vmatprep.subr.mxu0 0.0
        %662 = vmatpush2.msra.mxu0 0.0
        %663 = vmatprep.subr.mxu0 0.0
        %664 = vmatpush2.msra.mxu0 0.0
        %665 = vmatprep.subr.mxu0 0.0
        %666 = vmatpush2.msra.mxu0 0.0
        %667 = vmatprep.subr.mxu0 0.0
        %668 = vmatpush2.msra.mxu0 0.0
        %669 = vmatprep.subr.mxu0 0.0
        %670 = vmatpush2.msra.mxu0 0.0
        %671 = vmatprep.mubr.f32.mxu0 0.0
        %672 = vmatmul.mubr.f32.gmra.mxu0 %v605
        %v673 = vpop.f32.mrf.mxu0
        %v674 = vadd.f32 0.0, %v673
        %v675 = vpop.f32.mrf.mxu0
        %676 = vdwg.mxu0
        %v677 = vld [vmem:[%s389] sm:$0xff]
        %v678 = vld [vmem:[%s389 + $0x8] sm:$0xff]
        %v679 = vld [vmem:[%s7] sm:$0xff]
        %v680 = vld [vmem:[%s7 + $0x8] sm:$0xff]
        %v682 = vsel %vm603, %v677, 0
        %v685 = vsel %vm603, %v678, 0
        %687 = vmatprep.subr.mxu0 0.0
        %688 = vmatpush1.msra.mxu0 0.0
        %689 = vmatprep.subr.mxu0 0.0
        %690 = vmatpush1.msra.mxu0 0.0
        %691 = vmatprep.subr.mxu0 0.0
        %692 = vmatpush1.msra.mxu0 0.0
        %693 = vmatprep.subr.mxu0 0.0
        %694 = vmatpush1.msra.mxu0 0.0
        %695 = vmatprep.subr.mxu0 0.0
        %696 = vmatpush1.msra.mxu0 0.0
        %697 = vmatprep.subr.mxu0 0.0
        %698 = vmatpush1.msra.mxu0 0.0
        %699 = vmatprep.subr.mxu0 0.0
        %700 = vmatpush1.msra.mxu0 0.0
        %701 = vmatprep.subr.mxu0 0.0
        %702 = vmatpush1.msra.mxu0 0.0
        %703 = vmatprep.subr.mxu0 0.0
        %704 = vmatpush1.msra.mxu0 0.0
        %705 = vmatprep.subr.mxu0 0.0
        %706 = vmatpush1.msra.mxu0 0.0
        %707 = vmatprep.subr.mxu0 0.0
        %708 = vmatpush1.msra.mxu0 0.0
        %709 = vmatprep.subr.mxu0 0.0
        %710 = vmatpush1.msra.mxu0 0.0
        %711 = vmatprep.subr.mxu0 0.0
        %712 = vmatpush1.msra.mxu0 0.0
        %713 = vmatprep.subr.mxu0 0.0
        %714 = vmatpush1.msra.mxu0 0.0
        %715 = vmatprep.subr.mxu0 0.0
        %716 = vmatpush1.msra.mxu0 %v680
        %717 = vmatprep.subr.mxu0 0.0
        %718 = vmatpush1.msra.mxu0 %v679
        %719 = vmatprep.subr.mxu0 0.0
        %720 = vmatpush2.msra.mxu0 0.0
        %721 = vmatprep.subr.mxu0 0.0
        %722 = vmatpush2.msra.mxu0 0.0
        %723 = vmatprep.subr.mxu0 0.0
        %724 = vmatpush2.msra.mxu0 0.0
        %725 = vmatprep.subr.mxu0 0.0
        %726 = vmatpush2.msra.mxu0 0.0
        %727 = vmatprep.subr.mxu0 0.0
        %728 = vmatpush2.msra.mxu0 0.0
        %729 = vmatprep.subr.mxu0 0.0
        %730 = vmatpush2.msra.mxu0 0.0
        %731 = vmatprep.subr.mxu0 0.0
        %732 = vmatpush2.msra.mxu0 0.0
        %733 = vmatprep.subr.mxu0 0.0
        %734 = vmatpush2.msra.mxu0 0.0
        %735 = vmatprep.subr.mxu0 0.0
        %736 = vmatpush2.msra.mxu0 0.0
        %737 = vmatprep.subr.mxu0 0.0
        %738 = vmatpush2.msra.mxu0 0.0
        %739 = vmatprep.subr.mxu0 0.0
        %740 = vmatpush2.msra.mxu0 0.0
        %741 = vmatprep.subr.mxu0 0.0
        %742 = vmatpush2.msra.mxu0 0.0
        %743 = vmatprep.subr.mxu0 0.0
        %744 = vmatpush2.msra.mxu0 0.0
        %745 = vmatprep.subr.mxu0 0.0
        %746 = vmatpush2.msra.mxu0 0.0
        %747 = vmatprep.subr.mxu0 0.0
        %748 = vmatpush2.msra.mxu0 0.0
        %749 = vmatprep.subr.mxu0 0.0
        %750 = vmatpush2.msra.mxu0 0.0
        %751 = vmatprep.mubr.f32.mxu0 0.0
        %752 = vmatmul.mubr.f32.gmra.mxu0 %v682
        %v753 = vpop.f32.mrf.mxu0
        %v754 = vadd.f32 0.0, %v753
        %v755 = vpop.f32.mrf.mxu0
        %756 = vmatprep.mubr.f32.mxu0 0.0
        %757 = vmatmul.mubr.f32.gmra.mxu0 %v685
        %v758 = vpop.f32.mrf.mxu0
        %v759 = vadd.f32 0.0, %v758
        %v760 = vpop.f32.mrf.mxu0
        %761 = vdwg.mxu0
        %v762 = vld [vmem:[%s8] sm:$0xff]
        %v764 = vsel %vm603, %v762, 0
        %766 = vmatprep.subr.mxu0 0.0
        %767 = vmatpush1.msra.mxu0 0.0
        %768 = vmatprep.subr.mxu0 0.0
        %769 = vmatpush1.msra.mxu0 0.0
        %770 = vmatprep.subr.mxu0 0.0
        %771 = vmatpush1.msra.mxu0 0.0
        %772 = vmatprep.subr.mxu0 0.0
        %773 = vmatpush1.msra.mxu0 0.0
        %774 = vmatprep.subr.mxu0 0.0
        %775 = vmatpush1.msra.mxu0 0.0
        %776 = vmatprep.subr.mxu0 0.0
        %777 = vmatpush1.msra.mxu0 0.0
        %778 = vmatprep.subr.mxu0 0.0
        %779 = vmatpush1.msra.mxu0 0.0
        %780 = vmatprep.subr.mxu0 0.0
        %781 = vmatpush1.msra.mxu0 0.0
        %782 = vmatprep.subr.mxu0 0.0
        %783 = vmatpush1.msra.mxu0 0.0
        %784 = vmatprep.subr.mxu0 0.0
        %785 = vmatpush1.msra.mxu0 0.0
        %786 = vmatprep.subr.mxu0 0.0
        %787 = vmatpush1.msra.mxu0 0.0
        %788 = vmatprep.subr.mxu0 0.0
        %789 = vmatpush1.msra.mxu0 0.0
        %790 = vmatprep.subr.mxu0 0.0
        %791 = vmatpush1.msra.mxu0 0.0
        %792 = vmatprep.subr.mxu0 0.0
        %793 = vmatpush1.msra.mxu0 0.0
        %794 = vmatprep.subr.mxu0 0.0
        %795 = vmatpush1.msra.mxu0 %v759
        %796 = vmatprep.subr.mxu0 0.0
        %797 = vmatpush1.msra.mxu0 %v754
        %798 = vmatprep.subr.mxu0 0.0
        %799 = vmatpush2.msra.mxu0 0.0
        %800 = vmatprep.subr.mxu0 0.0
        %801 = vmatpush2.msra.mxu0 0.0
        %802 = vmatprep.subr.mxu0 0.0
        %803 = vmatpush2.msra.mxu0 0.0
        %804 = vmatprep.subr.mxu0 0.0
        %805 = vmatpush2.msra.mxu0 0.0
        %806 = vmatprep.subr.mxu0 0.0
        %807 = vmatpush2.msra.mxu0 0.0
        %808 = vmatprep.subr.mxu0 0.0
        %809 = vmatpush2.msra.mxu0 0.0
        %810 = vmatprep.subr.mxu0 0.0
        %811 = vmatpush2.msra.mxu0 0.0
        %812 = vmatprep.subr.mxu0 0.0
        %813 = vmatpush2.msra.mxu0 0.0
        %814 = vmatprep.subr.mxu0 0.0
        %815 = vmatpush2.msra.mxu0 0.0
        %816 = vmatprep.subr.mxu0 0.0
        %817 = vmatpush2.msra.mxu0 0.0
        %818 = vmatprep.subr.mxu0 0.0
        %819 = vmatpush2.msra.mxu0 0.0
        %820 = vmatprep.subr.mxu0 0.0
        %821 = vmatpush2.msra.mxu0 0.0
        %822 = vmatprep.subr.mxu0 0.0
        %823 = vmatpush2.msra.mxu0 0.0
        %824 = vmatprep.subr.mxu0 0.0
        %825 = vmatpush2.msra.mxu0 0.0
        %826 = vmatprep.subr.mxu0 0.0
        %827 = vmatpush2.msra.mxu0 0.0
        %828 = vmatprep.subr.mxu0 0.0
        %829 = vmatpush2.msra.mxu0 0.0
        %830 = vmatprep.mubr.f32.mxu0 0.0
        %831 = vmatmul.mubr.f32.gmra.mxu0 %v764
        %v832 = vpop.f32.mrf.mxu0
        %v833 = vadd.f32 0.0, %v832
        %v834 = vpop.f32.mrf.mxu0
        %835 = vdwg.mxu0
        %837 = vrot.lane.b32.xlu0 %v833, 64
        %v838 = vpop.permute.xlu0 %837
        %vm840 = vcmask 523264
        %v841 = vsel %vm840, %v674, %v838
        %vm842 = vcmask 588800
        %843 = vst.msk [vmem:[%s394] sm:$0xff] %vm842, %v841
        %p844 = scmp.lt.s32.totalorder %s22, 7
        %s845 = scalar_select %p844, %s22, 7
        %s846 = smul.addr %s845, 8
        %s847 = scalar_lea.vmem %s9, %s846
        // Predicated region
        $region69: #{layer_forward.4} parent=55 // pred_check
          %p848 = pneg %p239
        $region70: #{layer_forward.4} parent=55 // pred_check_branch
          %850 = sbr.rel (%p848) target = $region72
        $region71: #{layer_forward.4} parent=55 // pred_region
          _
        $region72: #{layer_forward.4} parent=55 // pred_fallthru
          _
      $region56: #{layer_forward.4} parent=5 // pred_fallthru
        _
      %p851 = scmp.le.s32.totalorder 2, %s17
      // Predicated region
      $region73: #{layer_forward.4} parent=5 // pred_check
        %p852 = pneg %p851
      $region74: #{layer_forward.4} parent=5 // pred_check_branch
        %854 = sbr.rel (%p852) target = $region76
      $region75: #{layer_forward.4} parent=5 // pred_region
        %s855 = ssub.s32 %s17, 2
        // Predicated region
        $region77: #{layer_forward.4} parent=75 // pred_check
          %p856 = pneg %p245
        $region78: #{layer_forward.4} parent=75 // pred_check_branch
          %858 = sbr.rel (%p856) target = $region80
        $region79: #{layer_forward.4} parent=75 // pred_region
          %p859 = scmp.lt.s32.totalorder %s23, 7
          %s860 = scalar_select %p859, %s23, 7
          %s861 = smul.addr %s860, 8
          %s862 = scalar_lea.vmem %s9, %s861
        $region80: #{layer_forward.4} parent=75 // pred_fallthru
          _
      $region76: #{layer_forward.4} parent=5 // pred_fallthru
        _
    $region6: #{layer_forward.4} parent=1 // loop_footer
      %s21 = sadd.s32 1, %s17
    $region7: #{layer_forward.4} parent=1 // loop_footer_branch
      %16 = sbr.rel target = $region3
    $region8: #{layer_forward.4} parent=1 // loop_exit
      _
    %863 = vsyncpa [#allocation3], 1
    %s864 = scalar_lea.sflag [#allocation3], 1
    %865 = vsyncpa %s864, 1
    %866 = vsyncpa [#allocation5], 1

// kernel: layer_forward.6
$region0: #{layer_forward.6}
  #allocation0 [shape = 'u32[]', space=smem, size = 0x4, offset = 0x4, fixed_abs, tag = 'smem constant byte address 0x4 - core index']
  #allocation1 [shape = 'u32[144,128]{1,0:T(1,128)}', space=vmem, size = 0x12000, scoped, tag = 'internal scratch']
  %s0 = inlined_call_operand.vmem [shape: f32[64,72], index: 0, kind: input, shape index: {}]
  %s1 = inlined_call_operand.vmem [shape: f32[32,16], index: 1, kind: input, shape index: {}]
  %s2 = inlined_call_operand.vmem [shape: f32[32,16], index: 2, kind: input, shape index: {}]
  %s3 = inlined_call_operand.vmem [shape: f32[64,32], index: 3, kind: input, shape index: {}]
  %s4 = inlined_call_operand.vmem [shape: f32[16,32], index: 4, kind: input, shape index: {}]
  %s5 = inlined_call_operand.vmem [shape: f32[32,64], index: 5, kind: input, shape index: {}]
  %s6 = inlined_call_operand.vmem [shape: f32[1,64], index: 6, kind: input, shape index: {}]
  %s7 = inlined_call_operand.vmem [shape: f32[32,16], index: 7, kind: output, shape index: {}]
  %s8 = sld [smem:[#allocation0]]
  $region61: #{layer_forward.6} parent=0
    _
  %s10 = ssub.s32 1, %s8
  %s11 = scalar_select 0, %s10, %s8
  loop: start=0, step=1, limit=6
  $region2: #{layer_forward.6} parent=0 // loop_pre_header
    _
  $region3: #{layer_forward.6} parent=0 // loop_header
    %s13 = sphi 0, %s17
    %p14 = scmp.ge.s32.totalorder %s13, 6
    %s20 = sphi 0, %s32
    %s21 = sphi 0, %s28
    %s22 = sphi 0, %s20
    %s23 = sphi 0, %s21
    %s24 = sphi 0, %s22
    %s25 = sphi 0, %s23
    %s35 = sphi 0, %s37
    %s38 = sphi 0, %s35
    %s39 = sphi 0, %s38
    %s55 = sphi 0, %s39
    %s65 = sphi 0, %s67
    %s68 = sphi 0, %s65
    %s69 = sphi 0, %s68
    %s85 = sphi 0, %s69
    %s95 = sphi 0, %s97
    %s98 = sphi 0, %s95
    %s99 = sphi 0, %s98
    %s115 = sphi 0, %s99
    %s119 = sphi 0, %s119
    %s121 = sphi 0, %s119
    %s122 = sphi 0, %s121
    %s136 = sphi 0, %s122
    %s140 = sphi 0, %s140
    %s142 = sphi 0, %s140
    %s143 = sphi 0, %s142
    %s157 = sphi 0, %s143
    %s161 = sphi 0, %s161
    %s163 = sphi 0, %s161
    %s164 = sphi 0, %s163
    %s178 = sphi 0, %s164
    %s182 = sphi 0, %s182
    %s184 = sphi 0, %s182
    %s185 = sphi 0, %s184
    %s199 = sphi 0, %s185
    %s209 = sphi 0, %s211
    %s212 = sphi 0, %s209
    %s213 = sphi 0, %s212
    %s229 = sphi 0, %s213
  $region4: #{layer_forward.6} parent=0 // loop_header_branch
    %16 = sbr.rel (%p14) target = $region8
  $region5: #{layer_forward.6} parent=0 // loop_body
    %s18 = ssub.s32 %s13, 1
    %s19 = ssub.s32 %s13, 2
    %s26 = sadd.s32 1, %s21
    %p27 = scmp.ge.s32.totalorder %s26, 2
    %s28 = scalar_select %p27, 0, %s26
    %s29 = sadd.s32 1, %s20
    %s30 = scalar_select %p27, %s29, %s20
    %p31 = scmp.ge.s32.totalorder %s30, 2
    %s32 = scalar_select %p31, 0, %s30
    %s33 = ssub.s32 %s20, %s32
    %p34 = scmp.eq.s32.totalorder %s33, 0
    %s36 = sadd.s32 %s35, 1
    %s37 = scalar_select %p34, %s35, %s36
    %p40 = pneg %p34
    %p41 = scmp.eq.s32.totalorder %s13, 3
    %p42 = por %p40, %p41
    %p43 = scmp.ne.s32.totalorder %s35, %s38
    %p44 = scmp.eq.s32.totalorder %s13, 0
    %p45 = por %p43, %p44
    %p46 = scmp.ne.s32.totalorder %s35, %s38
    %p47 = scmp.eq.s32.totalorder %s18, 3
    %p48 = por %p46, %p47
    %p49 = scmp.ne.s32.totalorder %s38, %s39
    %p50 = scmp.eq.s32.totalorder %s18, 0
    %p51 = por %p49, %p50
    %p52 = scmp.ne.s32.totalorder %s38, %s39
    %p53 = scmp.eq.s32.totalorder %s19, 3
    %p54 = por %p52, %p53
    %p56 = scmp.ne.s32.totalorder %s39, %s55
    %p57 = scmp.eq.s32.totalorder %s19, 0
    %p58 = por %p56, %p57
    %s59 = smul.u32 %s20, 2
    %s60 = sadd.s32 %s59, %s21
    %s61 = smul.u32 %s32, 2
    %s62 = sadd.s32 %s61, %s28
    %s63 = ssub.s32 %s60, %s62
    %p64 = scmp.eq.s32.totalorder %s63, 0
    %s66 = sadd.s32 %s65, 1
    %s67 = scalar_select %p64, %s65, %s66
    %p70 = pneg %p64
    %p71 = scmp.eq.s32.totalorder %s13, 3
    %p72 = por %p70, %p71
    %p73 = scmp.ne.s32.totalorder %s65, %s68
    %p74 = scmp.eq.s32.totalorder %s13, 0
    %p75 = por %p73, %p74
    %p76 = scmp.ne.s32.totalorder %s65, %s68
    %p77 = scmp.eq.s32.totalorder %s18, 3
    %p78 = por %p76, %p77
    %p79 = scmp.ne.s32.totalorder %s68, %s69
    %p80 = scmp.eq.s32.totalorder %s18, 0
    %p81 = por %p79, %p80
    %p82 = scmp.ne.s32.totalorder %s68, %s69
    %p83 = scmp.eq.s32.totalorder %s19, 3
    %p84 = por %p82, %p83
    %p86 = scmp.ne.s32.totalorder %s69, %s85
    %p87 = scmp.eq.s32.totalorder %s19, 0
    %p88 = por %p86, %p87
    %s89 = smul.u32 %s20, 2
    %s90 = sadd.s32 %s89, %s21
    %s91 = smul.u32 %s32, 2
    %s92 = sadd.s32 %s91, %s28
    %s93 = ssub.s32 %s90, %s92
    %p94 = scmp.eq.s32.totalorder %s93, 0
    %s96 = sadd.s32 %s95, 1
    %s97 = scalar_select %p94, %s95, %s96
    %p100 = pneg %p94
    %p101 = scmp.eq.s32.totalorder %s13, 3
    %p102 = por %p100, %p101
    %p103 = scmp.ne.s32.totalorder %s95, %s98
    %p104 = scmp.eq.s32.totalorder %s13, 0
    %p105 = por %p103, %p104
    %p106 = scmp.ne.s32.totalorder %s95, %s98
    %p107 = scmp.eq.s32.totalorder %s18, 3
    %p108 = por %p106, %p107
    %p109 = scmp.ne.s32.totalorder %s98, %s99
    %p110 = scmp.eq.s32.totalorder %s18, 0
    %p111 = por %p109, %p110
    %p112 = scmp.ne.s32.totalorder %s98, %s99
    %p113 = scmp.eq.s32.totalorder %s19, 3
    %p114 = por %p112, %p113
    %p116 = scmp.ne.s32.totalorder %s99, %s115
    %p117 = scmp.eq.s32.totalorder %s19, 0
    %p118 = por %p116, %p117
    %s120 = sadd.s32 %s119, 1
    %p123 = scmp.eq.s32.totalorder %s13, 3
    %p124 = scmp.ne.s32.totalorder %s119, %s121
    %p125 = scmp.eq.s32.totalorder %s13, 0
    %p126 = por %p124, %p125
    %p127 = scmp.ne.s32.totalorder %s119, %s121
    %p128 = scmp.eq.s32.totalorder %s18, 3
    %p129 = por %p127, %p128
    %p130 = scmp.ne.s32.totalorder %s121, %s122
    %p131 = scmp.eq.s32.totalorder %s18, 0
    %p132 = por %p130, %p131
    %p133 = scmp.ne.s32.totalorder %s121, %s122
    %p134 = scmp.eq.s32.totalorder %s19, 3
    %p135 = por %p133, %p134
    %p137 = scmp.ne.s32.totalorder %s122, %s136
    %p138 = scmp.eq.s32.totalorder %s19, 0
    %p139 = por %p137, %p138
    %s141 = sadd.s32 %s140, 1
    %p144 = scmp.eq.s32.totalorder %s13, 3
    %p145 = scmp.ne.s32.totalorder %s140, %s142
    %p146 = scmp.eq.s32.totalorder %s13, 0
    %p147 = por %p145, %p146
    %p148 = scmp.ne.s32.totalorder %s140, %s142
    %p149 = scmp.eq.s32.totalorder %s18, 3
    %p150 = por %p148, %p149
    %p151 = scmp.ne.s32.totalorder %s142, %s143
    %p152 = scmp.eq.s32.totalorder %s18, 0
    %p153 = por %p151, %p152
    %p154 = scmp.ne.s32.totalorder %s142, %s143
    %p155 = scmp.eq.s32.totalorder %s19, 3
    %p156 = por %p154, %p155
    %p158 = scmp.ne.s32.totalorder %s143, %s157
    %p159 = scmp.eq.s32.totalorder %s19, 0
    %p160 = por %p158, %p159
    %s162 = sadd.s32 %s161, 1
    %p165 = scmp.eq.s32.totalorder %s13, 3
    %p166 = scmp.ne.s32.totalorder %s161, %s163
    %p167 = scmp.eq.s32.totalorder %s13, 0
    %p168 = por %p166, %p167
    %p169 = scmp.ne.s32.totalorder %s161, %s163
    %p170 = scmp.eq.s32.totalorder %s18, 3
    %p171 = por %p169, %p170
    %p172 = scmp.ne.s32.totalorder %s163, %s164
    %p173 = scmp.eq.s32.totalorder %s18, 0
    %p174 = por %p172, %p173
    %p175 = scmp.ne.s32.totalorder %s163, %s164
    %p176 = scmp.eq.s32.totalorder %s19, 3
    %p177 = por %p175, %p176
    %p179 = scmp.ne.s32.totalorder %s164, %s178
    %p180 = scmp.eq.s32.totalorder %s19, 0
    %p181 = por %p179, %p180
    %s183 = sadd.s32 %s182, 1
    %p186 = scmp.eq.s32.totalorder %s13, 3
    %p187 = scmp.ne.s32.totalorder %s182, %s184
    %p188 = scmp.eq.s32.totalorder %s13, 0
    %p189 = por %p187, %p188
    %p190 = scmp.ne.s32.totalorder %s182, %s184
    %p191 = scmp.eq.s32.totalorder %s18, 3
    %p192 = por %p190, %p191
    %p193 = scmp.ne.s32.totalorder %s184, %s185
    %p194 = scmp.eq.s32.totalorder %s18, 0
    %p195 = por %p193, %p194
    %p196 = scmp.ne.s32.totalorder %s184, %s185
    %p197 = scmp.eq.s32.totalorder %s19, 3
    %p198 = por %p196, %p197
    %p200 = scmp.ne.s32.totalorder %s185, %s199
    %p201 = scmp.eq.s32.totalorder %s19, 0
    %p202 = por %p200, %p201
    %s203 = smul.u32 %s20, 2
    %s204 = sadd.s32 %s203, %s21
    %s205 = smul.u32 %s32, 2
    %s206 = sadd.s32 %s205, %s28
    %s207 = ssub.s32 %s204, %s206
    %p208 = scmp.eq.s32.totalorder %s207, 0
    %s210 = sadd.s32 %s209, 1
    %s211 = scalar_select %p208, %s209, %s210
    %p214 = pneg %p208
    %p215 = scmp.eq.s32.totalorder %s13, 3
    %p216 = por %p214, %p215
    %p217 = scmp.ne.s32.totalorder %s209, %s212
    %p218 = scmp.eq.s32.totalorder %s13, 0
    %p219 = por %p217, %p218
    %p220 = scmp.ne.s32.totalorder %s209, %s212
    %p221 = scmp.eq.s32.totalorder %s18, 3
    %p222 = por %p220, %p221
    %p223 = scmp.ne.s32.totalorder %s212, %s213
    %p224 = scmp.eq.s32.totalorder %s18, 0
    %p225 = por %p223, %p224
    %p226 = scmp.ne.s32.totalorder %s212, %s213
    %p227 = scmp.eq.s32.totalorder %s19, 3
    %p228 = por %p226, %p227
    %p230 = scmp.ne.s32.totalorder %s213, %s229
    %p231 = scmp.eq.s32.totalorder %s19, 0
    %p232 = por %p230, %p231
    %p233 = scmp.le.s32.totalorder 1, %s13
    %p234 = scmp.lt.s32.totalorder %s13, 5
    %p235 = pnand %p233, %p234
    %p236 = pneg %p235
    // Predicated region
    $region9: #{layer_forward.6} parent=5 // pred_check
      _
    $region10: #{layer_forward.6} parent=5 // pred_check_branch
      %238 = sbr.rel (%p235) target = $region12
    $region11: #{layer_forward.6} parent=5 // pred_region
      %s239 = ssub.s32 %s13, 1
      // Predicated region
      $region13: #{layer_forward.6} parent=11 // pred_check
        %p240 = pneg %p132
      $region14: #{layer_forward.6} parent=11 // pred_check_branch
        %242 = sbr.rel (%p240) target = $region16
      $region15: #{layer_forward.6} parent=11 // pred_region
        _
      $region16: #{layer_forward.6} parent=11 // pred_fallthru
        _
      // Predicated region
      $region17: #{layer_forward.6} parent=11 // pred_check
        %p243 = pneg %p153
      $region18: #{layer_forward.6} parent=11 // pred_check_branch
        %245 = sbr.rel (%p243) target = $region20
      $region19: #{layer_forward.6} parent=11 // pred_region
        _
      $region20: #{layer_forward.6} parent=11 // pred_fallthru
        _
      // Predicated region
      $region21: #{layer_forward.6} parent=11 // pred_check
        %p246 = pneg %p174
      $region22: #{layer_forward.6} parent=11 // pred_check_branch
        %248 = sbr.rel (%p246) target = $region24
      $region23: #{layer_forward.6} parent=11 // pred_region
        _
      $region24: #{layer_forward.6} parent=11 // pred_fallthru
        _
      // Predicated region
      $region25: #{layer_forward.6} parent=11 // pred_check
        %p249 = pneg %p195
      $region26: #{layer_forward.6} parent=11 // pred_check_branch
        %251 = sbr.rel (%p249) target = $region28
      $region27: #{layer_forward.6} parent=11 // pred_region
        _
      $region28: #{layer_forward.6} parent=11 // pred_fallthru
        _
    $region12: #{layer_forward.6} parent=5 // pred_fallthru
      _
    %p252 = scmp.lt.s32.totalorder %s13, 4
    // Predicated region
    $region29: #{layer_forward.6} parent=5 // pred_check
      %p253 = pneg %p252
    $region30: #{layer_forward.6} parent=5 // pred_check_branch
      %255 = sbr.rel (%p253) target = $region32
    $region31: #{layer_forward.6} parent=5 // pred_region
      // Predicated region
      $region33: #{layer_forward.6} parent=31 // pred_check
        %p256 = pneg %p45
      $region34: #{layer_forward.6} parent=31 // pred_check_branch
        %258 = sbr.rel (%p256) target = $region36
      $region35: #{layer_forward.6} parent=31 // pred_region
        %s259 = smul.u32 4, %s20
        %p260 = scmp.lt.s32.totalorder %s259, 7
        %s261 = scalar_select %p260, %s259, 7
        %s262 = smul.addr %s261, 8
        %s263 = scalar_lea.vmem %s0, %s262
        %s264 = smul.u32 4, %s20
      $region36: #{layer_forward.6} parent=31 // pred_fallthru
        _
      // Predicated region
      $region37: #{layer_forward.6} parent=31 // pred_check
        %p265 = pneg %p75
      $region38: #{layer_forward.6} parent=31 // pred_check_branch
        %267 = sbr.rel (%p265) target = $region40
      $region39: #{layer_forward.6} parent=31 // pred_region
        %s268 = smul.u32 %s20, 2
        %s269 = sadd.s32 %s268, %s21
        %p270 = scmp.lt.s32.totalorder %s269, 3
        %s271 = scalar_select %p270, %s269, 3
        %s272 = smul.addr %s271, 8
        %s273 = scalar_lea.vmem %s1, %s272
        %s274 = smul.u32 %s20, 2
        %s275 = sadd.s32 %s274, %s21
      $region40: #{layer_forward.6} parent=31 // pred_fallthru
        _
      // Predicated region
      $region41: #{layer_forward.6} parent=31 // pred_check
        %p276 = pneg %p105
      $region42: #{layer_forward.6} parent=31 // pred_check_branch
        %278 = sbr.rel (%p276) target = $region44
      $region43: #{layer_forward.6} parent=31 // pred_region
        %s279 = smul.u32 %s20, 2
        %s280 = sadd.s32 %s279, %s21
        %p281 = scmp.lt.s32.totalorder %s280, 3
        %s282 = scalar_select %p281, %s280, 3
        %s283 = smul.addr %s282, 8
        %s284 = scalar_lea.vmem %s2, %s283
        %s285 = smul.u32 %s20, 2
        %s286 = sadd.s32 %s285, %s21
      $region44: #{layer_forward.6} parent=31 // pred_fallthru
        _
    $region32: #{layer_forward.6} parent=5 // pred_fallthru
      _
    %p287 = scmp.le.s32.totalorder 1, %s13
    %p288 = scmp.lt.s32.totalorder %s13, 5
    %p289 = pnand %p287, %p288
    %p290 = pneg %p289
    // Predicated region
    $region45: #{layer_forward.6} parent=5 // pred_check
      _
    $region46: #{layer_forward.6} parent=5 // pred_check_branch
      %292 = sbr.rel (%p289) target = $region48
    $region47: #{layer_forward.6} parent=5 // pred_region
      %s293 = ssub.s32 %s13, 1
      %s294 = smul.u32 4, %s22
      %p295 = scmp.lt.s32.totalorder %s294, 7
      %s296 = scalar_select %p295, %s294, 7
      %s297 = smul.addr %s296, 8
      %s298 = scalar_lea.vmem %s0, %s297
      %p299 = pneg %p51
      %p300 = pneg %p48
      %s301 = smul.u32 %s22, 2
      %s302 = sadd.s32 %s301, %s23
      %p303 = scmp.lt.s32.totalorder %s302, 3
      %s304 = scalar_select %p303, %s302, 3
      %s305 = smul.addr %s304, 8
      %s306 = scalar_lea.vmem %s1, %s305
      %p307 = pneg %p81
      %p308 = pneg %p78
      %s309 = smul.u32 %s22, 2
      %s310 = sadd.s32 %s309, %s23
      %p311 = scmp.lt.s32.totalorder %s310, 3
      %s312 = scalar_select %p311, %s310, 3
      %s313 = smul.addr %s312, 8
      %s314 = scalar_lea.vmem %s2, %s313
      %p315 = pneg %p111
      %p316 = pneg %p108
      %p317 = pneg %p132
      %p318 = pneg %p129
      %p319 = pneg %p153
      %p320 = pneg %p150
      %p321 = pneg %p174
      %p322 = pneg %p171
      %p323 = pneg %p195
      %p324 = pneg %p192
      %p325 = pneg %p225
      %p326 = pneg %p222
      %s327 = smul.u32 %s22, 2
      %s328 = sadd.s32 %s327, %s23
      %p329 = scmp.lt.s32.totalorder %s328, 3
      %s330 = scalar_select %p329, %s328, 3
      %s331 = smul.addr %s330, 8
      %s332 = scalar_lea.vmem %s7, %s331
      %s333 = smul.u32 4, %s22
      %p334 = scmp.lt.s32.totalorder %s333, 7
      %s335 = scalar_select %p334, %s333, 7
      %s336 = smul.addr %s335, 8
      %s337 = scalar_lea.vmem %s0, %s336
      %s338 = smul.u32 4, %s22
      %s339 = smul.u32 %s22, 2
      %s340 = sadd.s32 %s339, %s23
      %p341 = scmp.lt.s32.totalorder %s340, 3
      %s342 = scalar_select %p341, %s340, 3
      %s343 = smul.addr %s342, 8
      %s344 = scalar_lea.vmem %s1, %s343
      %s345 = smul.u32 %s22, 2
      %s346 = sadd.s32 %s345, %s23
      %s347 = smul.u32 %s22, 2
      %s348 = sadd.s32 %s347, %s23
      %p349 = scmp.lt.s32.totalorder %s348, 3
      %s350 = scalar_select %p349, %s348, 3
      %s351 = smul.addr %s350, 8
      %s352 = scalar_lea.vmem %s2, %s351
      %s353 = smul.u32 %s22, 2
      %s354 = sadd.s32 %s353, %s23
      %s355 = smul.u32 %s22, 2
      %s356 = sadd.s32 %s355, %s23
      %p357 = scmp.lt.s32.totalorder %s356, 3
      %s358 = scalar_select %p357, %s356, 3
      %s359 = smul.addr %s358, 8
      %s360 = scalar_lea.vmem %s7, %s359
      %s361 = smul.u32 %s22, 2
      %s362 = sadd.s32 %s361, %s23
      %v363 = vld [vmem:[%s3] sm:$0xff]
      %v364 = vld [vmem:[%s3 + $0x8] sm:$0xff]
      %v365 = vld [vmem:[%s3 + $0x10] sm:$0xff]
      %v366 = vld [vmem:[%s3 + $0x18] sm:$0xff]
      %v367 = vld [vmem:[%s3 + $0x20] sm:$0xff]
      %v368 = vld [vmem:[%s3 + $0x28] sm:$0xff]
      %v369 = vld [vmem:[%s3 + $0x30] sm:$0xff]
      %v370 = vld [vmem:[%s3 + $0x38] sm:$0xff]
      %v371 = vld [vmem:[%s4] sm:$0xff]
      %v372 = vld [vmem:[%s4 + $0x8] sm:$0xff]
      %v373 = vld [vmem:[%s5] sm:$0xff]
      %v374 = vld [vmem:[%s5 + $0x8] sm:$0xff]
      %v375 = vld [vmem:[%s5 + $0x10] sm:$0xff]
      %v376 = vld [vmem:[%s5 + $0x18] sm:$0xff]
      %v377 = vld [vmem:[%s6] sm:$0x1]
      %v378 = vld [vmem:[%s344] sm:$0xff]
      %v379 = vld [vmem:[%s352] sm:$0xff]
      %s380 = smul.u32 %s23, 8
      %s381 = scalar_lea.vmem %s337, %s380
      %v382 = vld [vmem:[%s381] sm:$0xff]
      %vm383 = vcmask 130048
      %v385 = vsel %vm383, %v378, 0
      %387 = vmatprep.subr.mxu0 0.0
      %388 = vmatpush1.msra.mxu0 0.0
      %389 = vmatprep.subr.mxu0 0.0
      %390 = vmatpush1.msra.mxu0 0.0
      %391 = vmatprep.subr.mxu0 0.0
      %392 = vmatpush1.msra.mxu0 0.0
      %393 = vmatprep.subr.mxu0 0.0
      %394 = vmatpush1.msra.mxu0 0.0
      %395 = vmatprep.subr.mxu0 0.0
      %396 = vmatpush1.msra.mxu0 0.0
      %397 = vmatprep.subr.mxu0 0.0
      %398 = vmatpush1.msra.mxu0 0.0
      %399 = vmatprep.subr.mxu0 0.0
      %400 = vmatpush1.msra.mxu0 0.0
      %401 = vmatprep.subr.mxu0 0.0
      %402 = vmatpush1.msra.mxu0 0.0
      %403 = vmatprep.subr.mxu0 0.0
      %404 = vmatpush1.msra.mxu0 0.0
      %405 = vmatprep.subr.mxu0 0.0
      %406 = vmatpush1.msra.mxu0 0.0
      %407 = vmatprep.subr.mxu0 0.0
      %408 = vmatpush1.msra.mxu0 0.0
      %409 = vmatprep.subr.mxu0 0.0
      %410 = vmatpush1.msra.mxu0 0.0
      %411 = vmatprep.subr.mxu0 0.0
      %412 = vmatpush1.msra.mxu0 0.0
      %413 = vmatprep.subr.mxu0 0.0
      %414 = vmatpush1.msra.mxu0 0.0
      %415 = vmatprep.subr.mxu0 0.0
      %416 = vmatpush1.msra.mxu0 %v372
      %417 = vmatprep.subr.mxu0 0.0
      %418 = vmatpush1.msra.mxu0 %v371
      %419 = vmatprep.subr.mxu0 0.0
      %420 = vmatpush2.msra.mxu0 0.0
      %421 = vmatprep.subr.mxu0 0.0
      %422 = vmatpush2.msra.mxu0 0.0
      %423 = vmatprep.subr.mxu0 0.0
      %424 = vmatpush2.msra.mxu0 0.0
      %425 = vmatprep.subr.mxu0 0.0
      %426 = vmatpush2.msra.mxu0 0.0
      %427 = vmatprep.subr.mxu0 0.0
      %428 = vmatpush2.msra.mxu0 0.0
      %429 = vmatprep.subr.mxu0 0.0
      %430 = vmatpush2.msra.mxu0 0.0
      %431 = vmatprep.subr.mxu0 0.0
      %432 = vmatpush2.msra.mxu0 0.0
      %433 = vmatprep.subr.mxu0 0.0
      %434 = vmatpush2.msra.mxu0 0.0
      %435 = vmatprep.subr.mxu0 0.0
      %436 = vmatpush2.msra.mxu0 0.0
      %437 = vmatprep.subr.mxu0 0.0
      %438 = vmatpush2.msra.mxu0 0.0
      %439 = vmatprep.subr.mxu0 0.0
      %440 = vmatpush2.msra.mxu0 0.0
      %441 = vmatprep.subr.mxu0 0.0
      %442 = vmatpush2.msra.mxu0 0.0
      %443 = vmatprep.subr.mxu0 0.0
      %444 = vmatpush2.msra.mxu0 0.0
      %445 = vmatprep.subr.mxu0 0.0
      %446 = vmatpush2.msra.mxu0 0.0
      %447 = vmatprep.subr.mxu0 0.0
      %448 = vmatpush2.msra.mxu0 0.0
      %449 = vmatprep.subr.mxu0 0.0
      %450 = vmatpush2.msra.mxu0 0.0
      %451 = vmatprep.mubr.f32.mxu0 0.0
      %452 = vmatmul.mubr.f32.gmra.mxu0 %v385
      %v453 = vpop.f32.mrf.mxu0
      %v454 = vadd.f32 0.0, %v453
      %v455 = vpop.f32.mrf.mxu0
      %456 = vdwg.mxu0
      %vm457 = vcmask 523264
      %v459 = vsel %vm457, %v382, 0
      %461 = vmatprep.subr.mxu0 0.0
      %462 = vmatpush1.msra.mxu0 0.0
      %463 = vmatprep.subr.mxu0 0.0
      %464 = vmatpush1.msra.mxu0 0.0
      %465 = vmatprep.subr.mxu0 0.0
      %466 = vmatpush1.msra.mxu0 0.0
      %467 = vmatprep.subr.mxu0 0.0
      %468 = vmatpush1.msra.mxu0 0.0
      %469 = vmatprep.subr.mxu0 0.0
      %470 = vmatpush1.msra.mxu0 0.0
      %471 = vmatprep.subr.mxu0 0.0
      %472 = vmatpush1.msra.mxu0 0.0
      %473 = vmatprep.subr.mxu0 0.0
      %474 = vmatpush1.msra.mxu0 0.0
      %475 = vmatprep.subr.mxu0 0.0
      %476 = vmatpush1.msra.mxu0 0.0
      %477 = vmatprep.subr.mxu0 0.0
      %478 = vmatpush1.msra.mxu0 %v370
      %479 = vmatprep.subr.mxu0 0.0
      %480 = vmatpush1.msra.mxu0 %v369
      %481 = vmatprep.subr.mxu0 0.0
      %482 = vmatpush1.msra.mxu0 %v368
      %483 = vmatprep.subr.mxu0 0.0
      %484 = vmatpush1.msra.mxu0 %v367
      %485 = vmatprep.subr.mxu0 0.0
      %486 = vmatpush1.msra.mxu0 %v366
      %487 = vmatprep.subr.mxu0 0.0
      %488 = vmatpush1.msra.mxu0 %v365
      %489 = vmatprep.subr.mxu0 0.0
      %490 = vmatpush1.msra.mxu0 %v364
      %491 = vmatprep.subr.mxu0 0.0
      %492 = vmatpush1.msra.mxu0 %v363
      %493 = vmatprep.subr.mxu0 0.0
      %494 = vmatpush2.msra.mxu0 0.0
      %495 = vmatprep.subr.mxu0 0.0
      %496 = vmatpush2.msra.mxu0 0.0
      %497 = vmatprep.subr.mxu0 0.0
      %498 = vmatpush2.msra.mxu0 0.0
      %499 = vmatprep.subr.mxu0 0.0
      %500 = vmatpush2.msra.mxu0 0.0
      %501 = vmatprep.subr.mxu0 0.0
      %502 = vmatpush2.msra.mxu0 0.0
      %503 = vmatprep.subr.mxu0 0.0
      %504 = vmatpush2.msra.mxu0 0.0
      %505 = vmatprep.subr.mxu0 0.0
      %506 = vmatpush2.msra.mxu0 0.0
      %507 = vmatprep.subr.mxu0 0.0
      %508 = vmatpush2.msra.mxu0 0.0
      %509 = vmatprep.subr.mxu0 0.0
      %510 = vmatpush2.msra.mxu0 0.0
      %511 = vmatprep.subr.mxu0 0.0
      %512 = vmatpush2.msra.mxu0 0.0
      %513 = vmatprep.subr.mxu0 0.0
      %514 = vmatpush2.msra.mxu0 0.0
      %515 = vmatprep.subr.mxu0 0.0
      %516 = vmatpush2.msra.mxu0 0.0
      %517 = vmatprep.subr.mxu0 0.0
      %518 = vmatpush2.msra.mxu0 0.0
      %519 = vmatprep.subr.mxu0 0.0
      %520 = vmatpush2.msra.mxu0 0.0
      %521 = vmatprep.subr.mxu0 0.0
      %522 = vmatpush2.msra.mxu0 0.0
      %523 = vmatprep.subr.mxu0 0.0
      %524 = vmatpush2.msra.mxu0 0.0
      %525 = vmatprep.mubr.f32.mxu0 0.0
      %526 = vmatmul.mubr.f32.gmra.mxu0 %v459
      %v527 = vpop.f32.mrf.mxu0
      %v528 = vadd.f32 %v454, %v527
      %v529 = vpop.f32.mrf.mxu0
      %530 = vdwg.mxu0
      %531 = vrot.lane.b32.xlu0 %v382, 64
      %v532 = vpop.permute.xlu0 %531
      %vm533 = vcmask 64512
      %v534 = vsel %vm533, %v532, 0
      %536 = vmatprep.subr.mxu0 0.0
      %537 = vmatpush1.msra.mxu0 0.0
      %538 = vmatprep.subr.mxu0 0.0
      %539 = vmatpush1.msra.mxu0 0.0
      %540 = vmatprep.subr.mxu0 0.0
      %541 = vmatpush1.msra.mxu0 0.0
      %542 = vmatprep.subr.mxu0 0.0
      %543 = vmatpush1.msra.mxu0 0.0
      %544 = vmatprep.subr.mxu0 0.0
      %545 = vmatpush1.msra.mxu0 0.0
      %546 = vmatprep.subr.mxu0 0.0
      %547 = vmatpush1.msra.mxu0 0.0
      %548 = vmatprep.subr.mxu0 0.0
      %549 = vmatpush1.msra.mxu0 0.0
      %550 = vmatprep.subr.mxu0 0.0
      %551 = vmatpush1.msra.mxu0 0.0
      %552 = vmatprep.subr.mxu0 0.0
      %553 = vmatpush1.msra.mxu0 0.0
      %554 = vmatprep.subr.mxu0 0.0
      %555 = vmatpush1.msra.mxu0 0.0
      %556 = vmatprep.subr.mxu0 0.0
      %557 = vmatpush1.msra.mxu0 0.0
      %558 = vmatprep.subr.mxu0 0.0
      %559 = vmatpush1.msra.mxu0 0.0
      %560 = vmatprep.subr.mxu0 0.0
      %561 = vmatpush1.msra.mxu0 0.0
      %562 = vmatprep.subr.mxu0 0.0
      %563 = vmatpush1.msra.mxu0 0.0
      %564 = vmatprep.subr.mxu0 0.0
      %565 = vmatpush1.msra.mxu0 0.0
      %566 = vmatprep.subr.mxu0 0.0
      %567 = vmatpush1.msra.mxu0 %v528
      %568 = vmatprep.subr.mxu0 0.0
      %569 = vmatpush2.msra.mxu0 0.0
      %570 = vmatprep.subr.mxu0 0.0
      %571 = vmatpush2.msra.mxu0 0.0
      %572 = vmatprep.subr.mxu0 0.0
      %573 = vmatpush2.msra.mxu0 0.0
      %574 = vmatprep.subr.mxu0 0.0
      %575 = vmatpush2.msra.mxu0 0.0
      %576 = vmatprep.subr.mxu0 0.0
      %577 = vmatpush2.msra.mxu0 0.0
      %578 = vmatprep.subr.mxu0 0.0
      %579 = vmatpush2.msra.mxu0 0.0
      %580 = vmatprep.subr.mxu0 0.0
      %581 = vmatpush2.msra.mxu0 0.0
      %582 = vmatprep.subr.mxu0 0.0
      %583 = vmatpush2.msra.mxu0 0.0
      %584 = vmatprep.subr.mxu0 0.0
      %585 = vmatpush2.msra.mxu0 0.0
      %586 = vmatprep.subr.mxu0 0.0
      %587 = vmatpush2.msra.mxu0 0.0
      %588 = vmatprep.subr.mxu0 0.0
      %589 = vmatpush2.msra.mxu0 0.0
      %590 = vmatprep.subr.mxu0 0.0
      %591 = vmatpush2.msra.mxu0 0.0
      %592 = vmatprep.subr.mxu0 0.0
      %593 = vmatpush2.msra.mxu0 0.0
      %594 = vmatprep.subr.mxu0 0.0
      %595 = vmatpush2.msra.mxu0 0.0
      %596 = vmatprep.subr.mxu0 0.0
      %597 = vmatpush2.msra.mxu0 0.0
      %598 = vmatprep.subr.mxu0 0.0
      %599 = vmatpush2.msra.mxu0 0.0
      %600 = vmatprep.mubr.f32.mxu0 0.0
      %601 = vmatmul.mubr.f32.gmra.mxu0 %v534
      %v602 = vpop.f32.mrf.mxu0
      %v603 = vadd.f32 0.0, %v602
      %v604 = vpop.f32.mrf.mxu0
      %605 = vdwg.mxu0
      %v606 = vmax.f32 %v603, 0.0
      %vm607 = vcmask 261120
      %v608 = vsel %vm607, %v606, 0.0
      %v609 = vrot.slane %v608, 4
      %v610 = vadd.f32 %v608, %v609
      %v611 = vrot.slane %v610, 2
      %v612 = vadd.f32 %v610, %v611
      %v613 = vrot.slane %v612, 1
      %v614 = vadd.f32 %v612, %v613
      %v615 = vrcp.pop 8.0
      %v616 = vmul.f32 %v614, %v615
      %v617 = vadd.f32 %v616, 1e-06
      %v618 = vrcp.pop %v617
      %v619 = vmul.f32 %v606, %v618
      %v620 = vmax.f32 %v619, 0.0
      %v621 = vand.u32 2147483647, %v619
      %v622 = vsub.f32 0.0, %v621
      %v623 = vmul.f32 %v622, 1.442695
      %v624 = vpow.pop %v623
      %v625 = vadd.f32 %v624, 1.0
      %v626 = vlog2.pop %v625
      %v627 = vmul.f32 %v626, 0.6931472
      %v628 = vmul.f32 -0.5, %v624
      %v629 = vadd.f32 %v628, 1.0
      %v630 = vmul.f32 %v629, %v624
      %v631 = vand.u32 2147483647, %v624
      %vm632 = vcmp.lt.f32.partialorder %v631, 0.0004427343
      %v633 = vsel %vm632, %v630, %v627
      %v634 = vadd.f32 %v620, %v633
      %v636 = vlaneseq
      %v637 = vshrl.u32 %v636, 7
      %v638 = vsub.s32 0, %v637
      %v639 = vrot.slane %v377, %v638
      %v642 = vsel %vm607, %v634, 0
      %644 = vmatprep.subr.mxu0 0.0
      %645 = vmatpush1.msra.mxu0 0.0
      %646 = vmatprep.subr.mxu0 0.0
      %647 = vmatpush1.msra.mxu0 0.0
      %648 = vmatprep.subr.mxu0 0.0
      %649 = vmatpush1.msra.mxu0 0.0
      %650 = vmatprep.subr.mxu0 0.0
      %651 = vmatpush1.msra.mxu0 0.0
      %652 = vmatprep.subr.mxu0 0.0
      %653 = vmatpush1.msra.mxu0 0.0
      %654 = vmatprep.subr.mxu0 0.0
      %655 = vmatpush1.msra.mxu0 0.0
      %656 = vmatprep.subr.mxu0 0.0
      %657 = vmatpush1.msra.mxu0 0.0
      %658 = vmatprep.subr.mxu0 0.0
      %659 = vmatpush1.msra.mxu0 0.0
      %660 = vmatprep.subr.mxu0 0.0
      %661 = vmatpush1.msra.mxu0 0.0
      %662 = vmatprep.subr.mxu0 0.0
      %663 = vmatpush1.msra.mxu0 0.0
      %664 = vmatprep.subr.mxu0 0.0
      %665 = vmatpush1.msra.mxu0 0.0
      %666 = vmatprep.subr.mxu0 0.0
      %667 = vmatpush1.msra.mxu0 0.0
      %668 = vmatprep.subr.mxu0 0.0
      %669 = vmatpush1.msra.mxu0 %v376
      %670 = vmatprep.subr.mxu0 0.0
      %671 = vmatpush1.msra.mxu0 %v375
      %672 = vmatprep.subr.mxu0 0.0
      %673 = vmatpush1.msra.mxu0 %v374
      %674 = vmatprep.subr.mxu0 0.0
      %675 = vmatpush1.msra.mxu0 %v373
      %676 = vmatprep.subr.mxu0 0.0
      %677 = vmatpush2.msra.mxu0 0.0
      %678 = vmatprep.subr.mxu0 0.0
      %679 = vmatpush2.msra.mxu0 0.0
      %680 = vmatprep.subr.mxu0 0.0
      %681 = vmatpush2.msra.mxu0 0.0
      %682 = vmatprep.subr.mxu0 0.0
      %683 = vmatpush2.msra.mxu0 0.0
      %684 = vmatprep.subr.mxu0 0.0
      %685 = vmatpush2.msra.mxu0 0.0
      %686 = vmatprep.subr.mxu0 0.0
      %687 = vmatpush2.msra.mxu0 0.0
      %688 = vmatprep.subr.mxu0 0.0
      %689 = vmatpush2.msra.mxu0 0.0
      %690 = vmatprep.subr.mxu0 0.0
      %691 = vmatpush2.msra.mxu0 0.0
      %692 = vmatprep.subr.mxu0 0.0
      %693 = vmatpush2.msra.mxu0 0.0
      %694 = vmatprep.subr.mxu0 0.0
      %695 = vmatpush2.msra.mxu0 0.0
      %696 = vmatprep.subr.mxu0 0.0
      %697 = vmatpush2.msra.mxu0 0.0
      %698 = vmatprep.subr.mxu0 0.0
      %699 = vmatpush2.msra.mxu0 0.0
      %700 = vmatprep.subr.mxu0 0.0
      %701 = vmatpush2.msra.mxu0 0.0
      %702 = vmatprep.subr.mxu0 0.0
      %703 = vmatpush2.msra.mxu0 0.0
      %704 = vmatprep.subr.mxu0 0.0
      %705 = vmatpush2.msra.mxu0 0.0
      %706 = vmatprep.subr.mxu0 0.0
      %707 = vmatpush2.msra.mxu0 0.0
      %708 = vmatprep.mubr.f32.mxu0 0.0
      %709 = vmatmul.mubr.f32.gmra.mxu0 %v642
      %v710 = vpop.f32.mrf.mxu0
      %v711 = vadd.f32 %v639, %v710
      %v712 = vpop.f32.mrf.mxu0
      %713 = vdwg.mxu0
      %v714 = vxor.u32 %v711, 2147483648
      %v715 = vmul.f32 %v714, 1.442695
      %v716 = vpow.pop %v715
      %v717 = vadd.f32 %v716, 1.0
      %v718 = vrcp.pop %v717
      %v719 = vmul.f32 1.0, %v718
      %v720 = vmax.f32 %v711, 0.0
      %722 = vrot.lane.b32.xlu0 %v379, 16
      %v723 = vpop.permute.xlu0 %722
      %v725 = vmul.f32 %v719, %v723
      %727 = vrot.lane.b32.xlu0 %v720, 80
      %v728 = vpop.permute.xlu0 %727
      %v730 = vmul.f32 %v719, %v728
      %732 = vrot.lane.b32.xlu0 %v730, 16
      %v733 = vpop.permute.xlu0 %732
      %v735 = vadd.f32 %v725, %v733
      %v736 = vtanh.pop %v735
      %738 = vrot.lane.b32.xlu0 %v736, 16
      %v739 = vpop.permute.xlu0 %738
      %v741 = vmul.f32 %v719, %v739
      %s742 = sadd.s32 %s23, 2
      %s743 = smul.u32 %s742, 8
      %s744 = scalar_lea.vmem %s337, %s743
      %v745 = vld [vmem:[%s744] sm:$0xff]
      %747 = vrot.lane.b32.xlu0 %v741, 96
      %v748 = vpop.permute.xlu0 %747
      %v749 = vsel %vm383, %v748, 0
      %751 = vmatprep.subr.mxu0 0.0
      %752 = vmatpush1.msra.mxu0 0.0
      %753 = vmatprep.subr.mxu0 0.0
      %754 = vmatpush1.msra.mxu0 0.0
      %755 = vmatprep.subr.mxu0 0.0
      %756 = vmatpush1.msra.mxu0 0.0
      %757 = vmatprep.subr.mxu0 0.0
      %758 = vmatpush1.msra.mxu0 0.0
      %759 = vmatprep.subr.mxu0 0.0
      %760 = vmatpush1.msra.mxu0 0.0
      %761 = vmatprep.subr.mxu0 0.0
      %762 = vmatpush1.msra.mxu0 0.0
      %763 = vmatprep.subr.mxu0 0.0
      %764 = vmatpush1.msra.mxu0 0.0
      %765 = vmatprep.subr.mxu0 0.0
      %766 = vmatpush1.msra.mxu0 0.0
      %767 = vmatprep.subr.mxu0 0.0
      %768 = vmatpush1.msra.mxu0 0.0
      %769 = vmatprep.subr.mxu0 0.0
      %770 = vmatpush1.msra.mxu0 0.0
      %771 = vmatprep.subr.mxu0 0.0
      %772 = vmatpush1.msra.mxu0 0.0
      %773 = vmatprep.subr.mxu0 0.0
      %774 = vmatpush1.msra.mxu0 0.0
      %775 = vmatprep.subr.mxu0 0.0
      %776 = vmatpush1.msra.mxu0 0.0
      %777 = vmatprep.subr.mxu0 0.0
      %778 = vmatpush1.msra.mxu0 0.0
      %779 = vmatprep.subr.mxu0 0.0
      %780 = vmatpush1.msra.mxu0 %v372
      %781 = vmatprep.subr.mxu0 0.0
      %782 = vmatpush1.msra.mxu0 %v371
      %783 = vmatprep.subr.mxu0 0.0
      %784 = vmatpush2.msra.mxu0 0.0
      %785 = vmatprep.subr.mxu0 0.0
      %786 = vmatpush2.msra.mxu0 0.0
      %787 = vmatprep.subr.mxu0 0.0
      %788 = vmatpush2.msra.mxu0 0.0
      %789 = vmatprep.subr.mxu0 0.0
      %790 = vmatpush2.msra.mxu0 0.0
      %791 = vmatprep.subr.mxu0 0.0
      %792 = vmatpush2.msra.mxu0 0.0
      %793 = vmatprep.subr.mxu0 0.0
      %794 = vmatpush2.msra.mxu0 0.0
      %795 = vmatprep.subr.mxu0 0.0
      %796 = vmatpush2.msra.mxu0 0.0
      %797 = vmatprep.subr.mxu0 0.0
      %798 = vmatpush2.msra.mxu0 0.0
      %799 = vmatprep.subr.mxu0 0.0
      %800 = vmatpush2.msra.mxu0 0.0
      %801 = vmatprep.subr.mxu0 0.0
      %802 = vmatpush2.msra.mxu0 0.0
      %803 = vmatprep.subr.mxu0 0.0
      %804 = vmatpush2.msra.mxu0 0.0
      %805 = vmatprep.subr.mxu0 0.0
      %806 = vmatpush2.msra.mxu0 0.0
      %807 = vmatprep.subr.mxu0 0.0
      %808 = vmatpush2.msra.mxu0 0.0
      %809 = vmatprep.subr.mxu0 0.0
      %810 = vmatpush2.msra.mxu0 0.0
      %811 = vmatprep.subr.mxu0 0.0
      %812 = vmatpush2.msra.mxu0 0.0
      %813 = vmatprep.subr.mxu0 0.0
      %814 = vmatpush2.msra.mxu0 0.0
      %815 = vmatprep.mubr.f32.mxu0 0.0
      %816 = vmatmul.mubr.f32.gmra.mxu0 %v749
      %v817 = vpop.f32.mrf.mxu0
      %v818 = vadd.f32 0.0, %v817
      %v819 = vpop.f32.mrf.mxu0
      %820 = vdwg.mxu0
      %v822 = vsel %vm457, %v745, 0
      %824 = vmatprep.subr.mxu0 0.0
      %825 = vmatpush1.msra.mxu0 0.0
      %826 = vmatprep.subr.mxu0 0.0
      %827 = vmatpush1.msra.mxu0 0.0
      %828 = vmatprep.subr.mxu0 0.0
      %829 = vmatpush1.msra.mxu0 0.0
      %830 = vmatprep.subr.mxu0 0.0
      %831 = vmatpush1.msra.mxu0 0.0
      %832 = vmatprep.subr.mxu0 0.0
      %833 = vmatpush1.msra.mxu0 0.0
      %834 = vmatprep.subr.mxu0 0.0
      %835 = vmatpush1.msra.mxu0 0.0
      %836 = vmatprep.subr.mxu0 0.0
      %837 = vmatpush1.msra.mxu0 0.0
      %838 = vmatprep.subr.mxu0 0.0
      %839 = vmatpush1.msra.mxu0 0.0
      %840 = vmatprep.subr.mxu0 0.0
      %841 = vmatpush1.msra.mxu0 %v370
      %842 = vmatprep.subr.mxu0 0.0
      %843 = vmatpush1.msra.mxu0 %v369
      %844 = vmatprep.subr.mxu0 0.0
      %845 = vmatpush1.msra.mxu0 %v368
      %846 = vmatprep.subr.mxu0 0.0
      %847 = vmatpush1.msra.mxu0 %v367
      %848 = vmatprep.subr.mxu0 0.0
      %849 = vmatpush1.msra.mxu0 %v366
      %850 = vmatprep.subr.mxu0 0.0
      %851 = vmatpush1.msra.mxu0 %v365
      %852 = vmatprep.subr.mxu0 0.0
      %853 = vmatpush1.msra.mxu0 %v364
      %854 = vmatprep.subr.mxu0 0.0
      %855 = vmatpush1.msra.mxu0 %v363
      %856 = vmatprep.subr.mxu0 0.0
      %857 = vmatpush2.msra.mxu0 0.0
      %858 = vmatprep.subr.mxu0 0.0
      %859 = vmatpush2.msra.mxu0 0.0
      %860 = vmatprep.subr.mxu0 0.0
      %861 = vmatpush2.msra.mxu0 0.0
      %862 = vmatprep.subr.mxu0 0.0
      %863 = vmatpush2.msra.mxu0 0.0
      %864 = vmatprep.subr.mxu0 0.0
      %865 = vmatpush2.msra.mxu0 0.0
      %866 = vmatprep.subr.mxu0 0.0
      %867 = vmatpush2.msra.mxu0 0.0
      %868 = vmatprep.subr.mxu0 0.0
      %869 = vmatpush2.msra.mxu0 0.0
      %870 = vmatprep.subr.mxu0 0.0
      %871 = vmatpush2.msra.mxu0 0.0
      %872 = vmatprep.subr.mxu0 0.0
      %873 = vmatpush2.msra.mxu0 0.0
      %874 = vmatprep.subr.mxu0 0.0
      %875 = vmatpush2.msra.mxu0 0.0
      %876 = vmatprep.subr.mxu0 0.0
      %877 = vmatpush2.msra.mxu0 0.0
      %878 = vmatprep.subr.mxu0 0.0
      %879 = vmatpush2.msra.mxu0 0.0
      %880 = vmatprep.subr.mxu0 0.0
      %881 = vmatpush2.msra.mxu0 0.0
      %882 = vmatprep.subr.mxu0 0.0
      %883 = vmatpush2.msra.mxu0 0.0
      %884 = vmatprep.subr.mxu0 0.0
      %885 = vmatpush2.msra.mxu0 0.0
      %886 = vmatprep.subr.mxu0 0.0
      %887 = vmatpush2.msra.mxu0 0.0
      %888 = vmatprep.mubr.f32.mxu0 0.0
      %889 = vmatmul.mubr.f32.gmra.mxu0 %v822
      %v890 = vpop.f32.mrf.mxu0
      %v891 = vadd.f32 %v818, %v890
      %v892 = vpop.f32.mrf.mxu0
      %893 = vdwg.mxu0
      %894 = vrot.lane.b32.xlu0 %v745, 64
      %v895 = vpop.permute.xlu0 %894
      %v896 = vsel %vm533, %v895, 0
      %898 = vmatprep.subr.mxu0 0.0
      %899 = vmatpush1.msra.mxu0 0.0
      %900 = vmatprep.subr.mxu0 0.0
      %901 = vmatpush1.msra.mxu0 0.0
      %902 = vmatprep.subr.mxu0 0.0
      %903 = vmatpush1.msra.mxu0 0.0
      %904 = vmatprep.subr.mxu0 0.0
      %905 = vmatpush1.msra.mxu0 0.0
      %906 = vmatprep.subr.mxu0 0.0
      %907 = vmatpush1.msra.mxu0 0.0
      %908 = vmatprep.subr.mxu0 0.0
      %909 = vmatpush1.msra.mxu0 0.0
      %910 = vmatprep.subr.mxu0 0.0
      %911 = vmatpush1.msra.mxu0 0.0
      %912 = vmatprep.subr.mxu0 0.0
      %913 = vmatpush1.msra.mxu0 0.0
      %914 = vmatprep.subr.mxu0 0.0
      %915 = vmatpush1.msra.mxu0 0.0
      %916 = vmatprep.subr.mxu0 0.0
      %917 = vmatpush1.msra.mxu0 0.0
      %918 = vmatprep.subr.mxu0 0.0
      %919 = vmatpush1.msra.mxu0 0.0
      %920 = vmatprep.subr.mxu0 0.0
      %921 = vmatpush1.msra.mxu0 0.0
      %922 = vmatprep.subr.mxu0 0.0
      %923 = vmatpush1.msra.mxu0 0.0
      %924 = vmatprep.subr.mxu0 0.0
      %925 = vmatpush1.msra.mxu0 0.0
      %926 = vmatprep.subr.mxu0 0.0
      %927 = vmatpush1.msra.mxu0 0.0
      %928 = vmatprep.subr.mxu0 0.0
      %929 = vmatpush1.msra.mxu0 %v891
      %930 = vmatprep.subr.mxu0 0.0
      %931 = vmatpush2.msra.mxu0 0.0
      %932 = vmatprep.subr.mxu0 0.0
      %933 = vmatpush2.msra.mxu0 0.0
      %934 = vmatprep.subr.mxu0 0.0
      %935 = vmatpush2.msra.mxu0 0.0
      %936 = vmatprep.subr.mxu0 0.0
      %937 = vmatpush2.msra.mxu0 0.0
      %938 = vmatprep.subr.mxu0 0.0
      %939 = vmatpush2.msra.mxu0 0.0
      %940 = vmatprep.subr.mxu0 0.0
      %941 = vmatpush2.msra.mxu0 0.0
      %942 = vmatprep.subr.mxu0 0.0
      %943 = vmatpush2.msra.mxu0 0.0
      %944 = vmatprep.subr.mxu0 0.0
      %945 = vmatpush2.msra.mxu0 0.0
      %946 = vmatprep.subr.mxu0 0.0
      %947 = vmatpush2.msra.mxu0 0.0
      %948 = vmatprep.subr.mxu0 0.0
      %949 = vmatpush2.msra.mxu0 0.0
      %950 = vmatprep.subr.mxu0 0.0
      %951 = vmatpush2.msra.mxu0 0.0
      %952 = vmatprep.subr.mxu0 0.0
      %953 = vmatpush2.msra.mxu0 0.0
      %954 = vmatprep.subr.mxu0 0.0
      %955 = vmatpush2.msra.mxu0 0.0
      %956 = vmatprep.subr.mxu0 0.0
      %957 = vmatpush2.msra.mxu0 0.0
      %958 = vmatprep.subr.mxu0 0.0
      %959 = vmatpush2.msra.mxu0 0.0
      %960 = vmatprep.subr.mxu0 0.0
      %961 = vmatpush2.msra.mxu0 0.0
      %962 = vmatprep.mubr.f32.mxu0 0.0
      %963 = vmatmul.mubr.f32.gmra.mxu0 %v896
      %v964 = vpop.f32.mrf.mxu0
      %v965 = vadd.f32 0.0, %v964
      %v966 = vpop.f32.mrf.mxu0
      %967 = vdwg.mxu0
      %v968 = vmax.f32 %v965, 0.0
      %v969 = vsel %vm607, %v968, 0.0
      %v970 = vrot.slane %v969, 4
      %v971 = vadd.f32 %v969, %v970
      %v972 = vrot.slane %v971, 2
      %v973 = vadd.f32 %v971, %v972
      %v974 = vrot.slane %v973, 1
      %v975 = vadd.f32 %v973, %v974
      %v976 = vmul.f32 %v975, %v615
      %v977 = vadd.f32 %v976, 1e-06
      %v978 = vrcp.pop %v977
      %v979 = vmul.f32 %v968, %v978
      %v980 = vmax.f32 %v979, 0.0
      %v981 = vand.u32 2147483647, %v979
      %v982 = vsub.f32 0.0, %v981
      %v983 = vmul.f32 %v982, 1.442695
      %v984 = vpow.pop %v983
      %v985 = vadd.f32 %v984, 1.0
      %v986 = vlog2.pop %v985
      %v987 = vmul.f32 %v986, 0.6931472
      %v988 = vmul.f32 -0.5, %v984
      %v989 = vadd.f32 %v988, 1.0
      %v990 = vmul.f32 %v989, %v984
      %v991 = vand.u32 2147483647, %v984
      %vm992 = vcmp.lt.f32.partialorder %v991, 0.0004427343
      %v993 = vsel %vm992, %v990, %v987
      %v994 = vadd.f32 %v980, %v993
      %v996 = vsel %vm607, %v994, 0
      %998 = vmatprep.subr.mxu0 0.0
      %999 = vmatpush1.msra.mxu0 0.0
      %1000 = vmatprep.subr.mxu0 0.0
      %1001 = vmatpush1.msra.mxu0 0.0
      %1002 = vmatprep.subr.mxu0 0.0
      %1003 = vmatpush1.msra.mxu0 0.0
      %1004 = vmatprep.subr.mxu0 0.0
      %1005 = vmatpush1.msra.mxu0 0.0
      %1006 = vmatprep.subr.mxu0 0.0
      %1007 = vmatpush1.msra.mxu0 0.0
      %1008 = vmatprep.subr.mxu0 0.0
      %1009 = vmatpush1.msra.mxu0 0.0
      %1010 = vmatprep.subr.mxu0 0.0
      %1011 = vmatpush1.msra.mxu0 0.0
      %1012 = vmatprep.subr.mxu0 0.0
      %1013 = vmatpush1.msra.mxu0 0.0
      %1014 = vmatprep.subr.mxu0 0.0
      %1015 = vmatpush1.msra.mxu0 0.0
      %1016 = vmatprep.subr.mxu0 0.0
      %1017 = vmatpush1.msra.mxu0 0.0
      %1018 = vmatprep.subr.mxu0 0.0
      %1019 = vmatpush1.msra.mxu0 0.0
      %1020 = vmatprep.subr.mxu0 0.0
      %1021 = vmatpush1.msra.mxu0 0.0
      %1022 = vmatprep.subr.mxu0 0.0
      %1023 = vmatpush1.msra.mxu0 %v376
      %1024 = vmatprep.subr.mxu0 0.0
      %1025 = vmatpush1.msra.mxu0 %v375
      %1026 = vmatprep.subr.mxu0 0.0
      %1027 = vmatpush1.msra.mxu0 %v374
      %1028 = vmatprep.subr.mxu0 0.0
      %1029 = vmatpush1.msra.mxu0 %v373
      %1030 = vmatprep.subr.mxu0 0.0
      %1031 = vmatpush2.msra.mxu0 0.0
      %1032 = vmatprep.subr.mxu0 0.0
      %1033 = vmatpush2.msra.mxu0 0.0
      %1034 = vmatprep.subr.mxu0 0.0
      %1035 = vmatpush2.msra.mxu0 0.0
      %1036 = vmatprep.subr.mxu0 0.0
      %1037 = vmatpush2.msra.mxu0 0.0
      %1038 = vmatprep.subr.mxu0 0.0
      %1039 = vmatpush2.msra.mxu0 0.0
      %1040 = vmatprep.subr.mxu0 0.0
      %1041 = vmatpush2.msra.mxu0 0.0
      %1042 = vmatprep.subr.mxu0 0.0
      %1043 = vmatpush2.msra.mxu0 0.0
      %1044 = vmatprep.subr.mxu0 0.0
      %1045 = vmatpush2.msra.mxu0 0.0
      %1046 = vmatprep.subr.mxu0 0.0
      %1047 = vmatpush2.msra.mxu0 0.0
      %1048 = vmatprep.subr.mxu0 0.0
      %1049 = vmatpush2.msra.mxu0 0.0
      %1050 = vmatprep.subr.mxu0 0.0
      %1051 = vmatpush2.msra.mxu0 0.0
      %1052 = vmatprep.subr.mxu0 0.0
      %1053 = vmatpush2.msra.mxu0 0.0
      %1054 = vmatprep.subr.mxu0 0.0
      %1055 = vmatpush2.msra.mxu0 0.0
      %1056 = vmatprep.subr.mxu0 0.0
      %1057 = vmatpush2.msra.mxu0 0.0
      %1058 = vmatprep.subr.mxu0 0.0
      %1059 = vmatpush2.msra.mxu0 0.0
      %1060 = vmatprep.subr.mxu0 0.0
      %1061 = vmatpush2.msra.mxu0 0.0
      %1062 = vmatprep.mubr.f32.mxu0 0.0
      %1063 = vmatmul.mubr.f32.gmra.mxu0 %v996
      %v1064 = vpop.f32.mrf.mxu0
      %v1065 = vadd.f32 %v639, %v1064
      %v1066 = vpop.f32.mrf.mxu0
      %1067 = vdwg.mxu0
      %v1068 = vxor.u32 %v1065, 2147483648
      %v1069 = vmul.f32 %v1068, 1.442695
      %v1070 = vpow.pop %v1069
      %v1071 = vadd.f32 %v1070, 1.0
      %v1072 = vrcp.pop %v1071
      %v1073 = vmul.f32 1.0, %v1072
      %v1074 = vmax.f32 %v1065, 0.0
      %v1075 = vmul.f32 %v1073, %v735
      %1077 = vrot.lane.b32.xlu0 %v1074, 80
      %v1078 = vpop.permute.xlu0 %1077
      %v1080 = vmul.f32 %v1073, %v1078
      %1082 = vrot.lane.b32.xlu0 %v1080, 16
      %v1083 = vpop.permute.xlu0 %1082
      %v1085 = vadd.f32 %v1075, %v1083
      %v1086 = vtanh.pop %v1085
      %1088 = vrot.lane.b32.xlu0 %v1086, 16
      %v1089 = vpop.permute.xlu0 %1088
      %v1091 = vmul.f32 %v1073, %v1089
      %1093 = vrot.lane.b32.xlu0 %v1091, 96
      %v1094 = vpop.permute.xlu0 %1093
      %1096 = vst.msk [vmem:[%s360] sm:$0xff] %vm383, %v1094
      %s1097 = smul.u32 %s22, 2
      %s1098 = sadd.s32 %s1097, %s23
      %p1099 = scmp.lt.s32.totalorder %s1098, 3
      %s1100 = scalar_select %p1099, %s1098, 3
      %s1101 = smul.addr %s1100, 8
      %s1102 = scalar_lea.vmem %s7, %s1101
      // Predicated region
      $region49: #{layer_forward.6} parent=47 // pred_check
        %p1103 = pneg %p222
      $region50: #{layer_forward.6} parent=47 // pred_check_branch
        %1105 = sbr.rel (%p1103) target = $region52
      $region51: #{layer_forward.6} parent=47 // pred_region
        %s1106 = smul.u32 %s22, 2
        %s1107 = sadd.s32 %s1106, %s23
      $region52: #{layer_forward.6} parent=47 // pred_fallthru
        _
    $region48: #{layer_forward.6} parent=5 // pred_fallthru
      _
    %p1108 = scmp.le.s32.totalorder 2, %s13
    // Predicated region
    $region53: #{layer_forward.6} parent=5 // pred_check
      %p1109 = pneg %p1108
    $region54: #{layer_forward.6} parent=5 // pred_check_branch
      %1111 = sbr.rel (%p1109) target = $region56
    $region55: #{layer_forward.6} parent=5 // pred_region
      %s1112 = ssub.s32 %s13, 2
      // Predicated region
      $region57: #{layer_forward.6} parent=55 // pred_check
        %p1113 = pneg %p228
      $region58: #{layer_forward.6} parent=55 // pred_check_branch
        %1115 = sbr.rel (%p1113) target = $region60
      $region59: #{layer_forward.6} parent=55 // pred_region
        %s1116 = smul.u32 %s24, 2
        %s1117 = sadd.s32 %s1116, %s25
        %p1118 = scmp.lt.s32.totalorder %s1117, 3
        %s1119 = scalar_select %p1118, %s1117, 3
        %s1120 = smul.addr %s1119, 8
        %s1121 = scalar_lea.vmem %s7, %s1120
      $region60: #{layer_forward.6} parent=55 // pred_fallthru
        _
    $region56: #{layer_forward.6} parent=5 // pred_fallthru
      _
  $region6: #{layer_forward.6} parent=0 // loop_footer
    %s17 = sadd.s32 1, %s13
  $region7: #{layer_forward.6} parent=0 // loop_footer_branch
    %12 = sbr.rel target = $region3
  $region8: #{layer_forward.6} parent=0 // loop_exit
    _

// kernel: layer_forward.5
$region0: #{layer_forward.5}
  #allocation0 [shape = 'u32[]', space=smem, size = 0x4, offset = 0x4, fixed_abs, tag = 'smem constant byte address 0x4 - core index']
  #allocation1 [shape = 'u32[144,128]{1,0:T(1,128)}', space=vmem, size = 0x12000, scoped, tag = 'internal scratch']
  %s0 = inlined_call_operand.vmem [shape: f32[64,72], index: 0, kind: input, shape index: {}]
  %s1 = inlined_call_operand.vmem [shape: f32[16,16], index: 1, kind: input, shape index: {}]
  %s2 = inlined_call_operand.vmem [shape: f32[16,16], index: 2, kind: input, shape index: {}]
  %s3 = inlined_call_operand.vmem [shape: f32[64,32], index: 3, kind: input, shape index: {}]
  %s4 = inlined_call_operand.vmem [shape: f32[16,32], index: 4, kind: input, shape index: {}]
  %s5 = inlined_call_operand.vmem [shape: f32[32,64], index: 5, kind: input, shape index: {}]
  %s6 = inlined_call_operand.vmem [shape: f32[1,64], index: 6, kind: input, shape index: {}]
  %s7 = inlined_call_operand.vmem [shape: f32[16,16], index: 7, kind: output, shape index: {}]
  %s8 = sld [smem:[#allocation0]]
  $region61: #{layer_forward.5} parent=0
    _
  %s10 = ssub.s32 1, %s8
  %s11 = scalar_select 0, %s10, %s8
  loop: start=0, step=1, limit=4
  $region2: #{layer_forward.5} parent=0 // loop_pre_header
    _
  $region3: #{layer_forward.5} parent=0 // loop_header
    %s13 = sphi 0, %s17
    %p14 = scmp.ge.s32.totalorder %s13, 4
    %s20 = sphi 0, %s32
    %s21 = sphi 0, %s28
    %s22 = sphi 0, %s20
    %s23 = sphi 0, %s21
    %s24 = sphi 0, %s22
    %s25 = sphi 0, %s23
    %s35 = sphi 0, %s37
    %s38 = sphi 0, %s35
    %s39 = sphi 0, %s38
    %s55 = sphi 0, %s39
    %s63 = sphi 0, %s65
    %s66 = sphi 0, %s63
    %s67 = sphi 0, %s66
    %s83 = sphi 0, %s67
    %s91 = sphi 0, %s93
    %s94 = sphi 0, %s91
    %s95 = sphi 0, %s94
    %s111 = sphi 0, %s95
    %s115 = sphi 0, %s115
    %s117 = sphi 0, %s115
    %s118 = sphi 0, %s117
    %s132 = sphi 0, %s118
    %s136 = sphi 0, %s136
    %s138 = sphi 0, %s136
    %s139 = sphi 0, %s138
    %s153 = sphi 0, %s139
    %s157 = sphi 0, %s157
    %s159 = sphi 0, %s157
    %s160 = sphi 0, %s159
    %s174 = sphi 0, %s160
    %s178 = sphi 0, %s178
    %s180 = sphi 0, %s178
    %s181 = sphi 0, %s180
    %s195 = sphi 0, %s181
    %s203 = sphi 0, %s205
    %s206 = sphi 0, %s203
    %s207 = sphi 0, %s206
    %s223 = sphi 0, %s207
  $region4: #{layer_forward.5} parent=0 // loop_header_branch
    %16 = sbr.rel (%p14) target = $region8
  $region5: #{layer_forward.5} parent=0 // loop_body
    %s18 = ssub.s32 %s13, 1
    %s19 = ssub.s32 %s13, 2
    %s26 = sadd.s32 1, %s21
    %p27 = scmp.ge.s32.totalorder %s26, 1
    %s28 = scalar_select %p27, 0, %s26
    %s29 = sadd.s32 1, %s20
    %s30 = scalar_select %p27, %s29, %s20
    %p31 = scmp.ge.s32.totalorder %s30, 2
    %s32 = scalar_select %p31, 0, %s30
    %s33 = ssub.s32 %s20, %s32
    %p34 = scmp.eq.s32.totalorder %s33, 0
    %s36 = sadd.s32 %s35, 1
    %s37 = scalar_select %p34, %s35, %s36
    %p40 = pneg %p34
    %p41 = scmp.eq.s32.totalorder %s13, 1
    %p42 = por %p40, %p41
    %p43 = scmp.ne.s32.totalorder %s35, %s38
    %p44 = scmp.eq.s32.totalorder %s13, 0
    %p45 = por %p43, %p44
    %p46 = scmp.ne.s32.totalorder %s35, %s38
    %p47 = scmp.eq.s32.totalorder %s18, 1
    %p48 = por %p46, %p47
    %p49 = scmp.ne.s32.totalorder %s38, %s39
    %p50 = scmp.eq.s32.totalorder %s18, 0
    %p51 = por %p49, %p50
    %p52 = scmp.ne.s32.totalorder %s38, %s39
    %p53 = scmp.eq.s32.totalorder %s19, 1
    %p54 = por %p52, %p53
    %p56 = scmp.ne.s32.totalorder %s39, %s55
    %p57 = scmp.eq.s32.totalorder %s19, 0
    %p58 = por %p56, %p57
    %s59 = sadd.s32 %s20, %s21
    %s60 = sadd.s32 %s32, %s28
    %s61 = ssub.s32 %s59, %s60
    %p62 = scmp.eq.s32.totalorder %s61, 0
    %s64 = sadd.s32 %s63, 1
    %s65 = scalar_select %p62, %s63, %s64
    %p68 = pneg %p62
    %p69 = scmp.eq.s32.totalorder %s13, 1
    %p70 = por %p68, %p69
    %p71 = scmp.ne.s32.totalorder %s63, %s66
    %p72 = scmp.eq.s32.totalorder %s13, 0
    %p73 = por %p71, %p72
    %p74 = scmp.ne.s32.totalorder %s63, %s66
    %p75 = scmp.eq.s32.totalorder %s18, 1
    %p76 = por %p74, %p75
    %p77 = scmp.ne.s32.totalorder %s66, %s67
    %p78 = scmp.eq.s32.totalorder %s18, 0
    %p79 = por %p77, %p78
    %p80 = scmp.ne.s32.totalorder %s66, %s67
    %p81 = scmp.eq.s32.totalorder %s19, 1
    %p82 = por %p80, %p81
    %p84 = scmp.ne.s32.totalorder %s67, %s83
    %p85 = scmp.eq.s32.totalorder %s19, 0
    %p86 = por %p84, %p85
    %s87 = sadd.s32 %s20, %s21
    %s88 = sadd.s32 %s32, %s28
    %s89 = ssub.s32 %s87, %s88
    %p90 = scmp.eq.s32.totalorder %s89, 0
    %s92 = sadd.s32 %s91, 1
    %s93 = scalar_select %p90, %s91, %s92
    %p96 = pneg %p90
    %p97 = scmp.eq.s32.totalorder %s13, 1
    %p98 = por %p96, %p97
    %p99 = scmp.ne.s32.totalorder %s91, %s94
    %p100 = scmp.eq.s32.totalorder %s13, 0
    %p101 = por %p99, %p100
    %p102 = scmp.ne.s32.totalorder %s91, %s94
    %p103 = scmp.eq.s32.totalorder %s18, 1
    %p104 = por %p102, %p103
    %p105 = scmp.ne.s32.totalorder %s94, %s95
    %p106 = scmp.eq.s32.totalorder %s18, 0
    %p107 = por %p105, %p106
    %p108 = scmp.ne.s32.totalorder %s94, %s95
    %p109 = scmp.eq.s32.totalorder %s19, 1
    %p110 = por %p108, %p109
    %p112 = scmp.ne.s32.totalorder %s95, %s111
    %p113 = scmp.eq.s32.totalorder %s19, 0
    %p114 = por %p112, %p113
    %s116 = sadd.s32 %s115, 1
    %p119 = scmp.eq.s32.totalorder %s13, 1
    %p120 = scmp.ne.s32.totalorder %s115, %s117
    %p121 = scmp.eq.s32.totalorder %s13, 0
    %p122 = por %p120, %p121
    %p123 = scmp.ne.s32.totalorder %s115, %s117
    %p124 = scmp.eq.s32.totalorder %s18, 1
    %p125 = por %p123, %p124
    %p126 = scmp.ne.s32.totalorder %s117, %s118
    %p127 = scmp.eq.s32.totalorder %s18, 0
    %p128 = por %p126, %p127
    %p129 = scmp.ne.s32.totalorder %s117, %s118
    %p130 = scmp.eq.s32.totalorder %s19, 1
    %p131 = por %p129, %p130
    %p133 = scmp.ne.s32.totalorder %s118, %s132
    %p134 = scmp.eq.s32.totalorder %s19, 0
    %p135 = por %p133, %p134
    %s137 = sadd.s32 %s136, 1
    %p140 = scmp.eq.s32.totalorder %s13, 1
    %p141 = scmp.ne.s32.totalorder %s136, %s138
    %p142 = scmp.eq.s32.totalorder %s13, 0
    %p143 = por %p141, %p142
    %p144 = scmp.ne.s32.totalorder %s136, %s138
    %p145 = scmp.eq.s32.totalorder %s18, 1
    %p146 = por %p144, %p145
    %p147 = scmp.ne.s32.totalorder %s138, %s139
    %p148 = scmp.eq.s32.totalorder %s18, 0
    %p149 = por %p147, %p148
    %p150 = scmp.ne.s32.totalorder %s138, %s139
    %p151 = scmp.eq.s32.totalorder %s19, 1
    %p152 = por %p150, %p151
    %p154 = scmp.ne.s32.totalorder %s139, %s153
    %p155 = scmp.eq.s32.totalorder %s19, 0
    %p156 = por %p154, %p155
    %s158 = sadd.s32 %s157, 1
    %p161 = scmp.eq.s32.totalorder %s13, 1
    %p162 = scmp.ne.s32.totalorder %s157, %s159
    %p163 = scmp.eq.s32.totalorder %s13, 0
    %p164 = por %p162, %p163
    %p165 = scmp.ne.s32.totalorder %s157, %s159
    %p166 = scmp.eq.s32.totalorder %s18, 1
    %p167 = por %p165, %p166
    %p168 = scmp.ne.s32.totalorder %s159, %s160
    %p169 = scmp.eq.s32.totalorder %s18, 0
    %p170 = por %p168, %p169
    %p171 = scmp.ne.s32.totalorder %s159, %s160
    %p172 = scmp.eq.s32.totalorder %s19, 1
    %p173 = por %p171, %p172
    %p175 = scmp.ne.s32.totalorder %s160, %s174
    %p176 = scmp.eq.s32.totalorder %s19, 0
    %p177 = por %p175, %p176
    %s179 = sadd.s32 %s178, 1
    %p182 = scmp.eq.s32.totalorder %s13, 1
    %p183 = scmp.ne.s32.totalorder %s178, %s180
    %p184 = scmp.eq.s32.totalorder %s13, 0
    %p185 = por %p183, %p184
    %p186 = scmp.ne.s32.totalorder %s178, %s180
    %p187 = scmp.eq.s32.totalorder %s18, 1
    %p188 = por %p186, %p187
    %p189 = scmp.ne.s32.totalorder %s180, %s181
    %p190 = scmp.eq.s32.totalorder %s18, 0
    %p191 = por %p189, %p190
    %p192 = scmp.ne.s32.totalorder %s180, %s181
    %p193 = scmp.eq.s32.totalorder %s19, 1
    %p194 = por %p192, %p193
    %p196 = scmp.ne.s32.totalorder %s181, %s195
    %p197 = scmp.eq.s32.totalorder %s19, 0
    %p198 = por %p196, %p197
    %s199 = sadd.s32 %s20, %s21
    %s200 = sadd.s32 %s32, %s28
    %s201 = ssub.s32 %s199, %s200
    %p202 = scmp.eq.s32.totalorder %s201, 0
    %s204 = sadd.s32 %s203, 1
    %s205 = scalar_select %p202, %s203, %s204
    %p208 = pneg %p202
    %p209 = scmp.eq.s32.totalorder %s13, 1
    %p210 = por %p208, %p209
    %p211 = scmp.ne.s32.totalorder %s203, %s206
    %p212 = scmp.eq.s32.totalorder %s13, 0
    %p213 = por %p211, %p212
    %p214 = scmp.ne.s32.totalorder %s203, %s206
    %p215 = scmp.eq.s32.totalorder %s18, 1
    %p216 = por %p214, %p215
    %p217 = scmp.ne.s32.totalorder %s206, %s207
    %p218 = scmp.eq.s32.totalorder %s18, 0
    %p219 = por %p217, %p218
    %p220 = scmp.ne.s32.totalorder %s206, %s207
    %p221 = scmp.eq.s32.totalorder %s19, 1
    %p222 = por %p220, %p221
    %p224 = scmp.ne.s32.totalorder %s207, %s223
    %p225 = scmp.eq.s32.totalorder %s19, 0
    %p226 = por %p224, %p225
    %p227 = scmp.le.s32.totalorder 1, %s13
    %p228 = scmp.lt.s32.totalorder %s13, 3
    %p229 = pnand %p227, %p228
    %p230 = pneg %p229
    // Predicated region
    $region9: #{layer_forward.5} parent=5 // pred_check
      _
    $region10: #{layer_forward.5} parent=5 // pred_check_branch
      %232 = sbr.rel (%p229) target = $region12
    $region11: #{layer_forward.5} parent=5 // pred_region
      %s233 = ssub.s32 %s13, 1
      // Predicated region
      $region13: #{layer_forward.5} parent=11 // pred_check
        %p234 = pneg %p128
      $region14: #{layer_forward.5} parent=11 // pred_check_branch
        %236 = sbr.rel (%p234) target = $region16
      $region15: #{layer_forward.5} parent=11 // pred_region
        _
      $region16: #{layer_forward.5} parent=11 // pred_fallthru
        _
      // Predicated region
      $region17: #{layer_forward.5} parent=11 // pred_check
        %p237 = pneg %p149
      $region18: #{layer_forward.5} parent=11 // pred_check_branch
        %239 = sbr.rel (%p237) target = $region20
      $region19: #{layer_forward.5} parent=11 // pred_region
        _
      $region20: #{layer_forward.5} parent=11 // pred_fallthru
        _
      // Predicated region
      $region21: #{layer_forward.5} parent=11 // pred_check
        %p240 = pneg %p170
      $region22: #{layer_forward.5} parent=11 // pred_check_branch
        %242 = sbr.rel (%p240) target = $region24
      $region23: #{layer_forward.5} parent=11 // pred_region
        _
      $region24: #{layer_forward.5} parent=11 // pred_fallthru
        _
      // Predicated region
      $region25: #{layer_forward.5} parent=11 // pred_check
        %p243 = pneg %p191
      $region26: #{layer_forward.5} parent=11 // pred_check_branch
        %245 = sbr.rel (%p243) target = $region28
      $region27: #{layer_forward.5} parent=11 // pred_region
        _
      $region28: #{layer_forward.5} parent=11 // pred_fallthru
        _
    $region12: #{layer_forward.5} parent=5 // pred_fallthru
      _
    %p246 = scmp.lt.s32.totalorder %s13, 2
    // Predicated region
    $region29: #{layer_forward.5} parent=5 // pred_check
      %p247 = pneg %p246
    $region30: #{layer_forward.5} parent=5 // pred_check_branch
      %249 = sbr.rel (%p247) target = $region32
    $region31: #{layer_forward.5} parent=5 // pred_region
      // Predicated region
      $region33: #{layer_forward.5} parent=31 // pred_check
        %p250 = pneg %p45
      $region34: #{layer_forward.5} parent=31 // pred_check_branch
        %252 = sbr.rel (%p250) target = $region36
      $region35: #{layer_forward.5} parent=31 // pred_region
        %s253 = smul.u32 4, %s20
        %p254 = scmp.lt.s32.totalorder %s253, 7
        %s255 = scalar_select %p254, %s253, 7
        %s256 = smul.addr %s255, 8
        %s257 = scalar_lea.vmem %s0, %s256
        %s258 = smul.u32 4, %s20
      $region36: #{layer_forward.5} parent=31 // pred_fallthru
        _
      // Predicated region
      $region37: #{layer_forward.5} parent=31 // pred_check
        %p259 = pneg %p73
      $region38: #{layer_forward.5} parent=31 // pred_check_branch
        %261 = sbr.rel (%p259) target = $region40
      $region39: #{layer_forward.5} parent=31 // pred_region
        %s262 = sadd.s32 %s20, %s21
        %p263 = scmp.lt.s32.totalorder %s262, 1
        %s264 = scalar_select %p263, %s262, 1
        %s265 = smul.addr %s264, 8
        %s266 = scalar_lea.vmem %s1, %s265
        %s267 = sadd.s32 %s20, %s21
      $region40: #{layer_forward.5} parent=31 // pred_fallthru
        _
      // Predicated region
      $region41: #{layer_forward.5} parent=31 // pred_check
        %p268 = pneg %p101
      $region42: #{layer_forward.5} parent=31 // pred_check_branch
        %270 = sbr.rel (%p268) target = $region44
      $region43: #{layer_forward.5} parent=31 // pred_region
        %s271 = sadd.s32 %s20, %s21
        %p272 = scmp.lt.s32.totalorder %s271, 1
        %s273 = scalar_select %p272, %s271, 1
        %s274 = smul.addr %s273, 8
        %s275 = scalar_lea.vmem %s2, %s274
        %s276 = sadd.s32 %s20, %s21
      $region44: #{layer_forward.5} parent=31 // pred_fallthru
        _
    $region32: #{layer_forward.5} parent=5 // pred_fallthru
      _
    %p277 = scmp.le.s32.totalorder 1, %s13
    %p278 = scmp.lt.s32.totalorder %s13, 3
    %p279 = pnand %p277, %p278
    %p280 = pneg %p279
    // Predicated region
    $region45: #{layer_forward.5} parent=5 // pred_check
      _
    $region46: #{layer_forward.5} parent=5 // pred_check_branch
      %282 = sbr.rel (%p279) target = $region48
    $region47: #{layer_forward.5} parent=5 // pred_region
      %s283 = ssub.s32 %s13, 1
      %s284 = smul.u32 4, %s22
      %p285 = scmp.lt.s32.totalorder %s284, 7
      %s286 = scalar_select %p285, %s284, 7
      %s287 = smul.addr %s286, 8
      %s288 = scalar_lea.vmem %s0, %s287
      %p289 = pneg %p51
      %p290 = pneg %p48
      %s291 = sadd.s32 %s22, %s23
      %p292 = scmp.lt.s32.totalorder %s291, 1
      %s293 = scalar_select %p292, %s291, 1
      %s294 = smul.addr %s293, 8
      %s295 = scalar_lea.vmem %s1, %s294
      %p296 = pneg %p79
      %p297 = pneg %p76
      %s298 = sadd.s32 %s22, %s23
      %p299 = scmp.lt.s32.totalorder %s298, 1
      %s300 = scalar_select %p299, %s298, 1
      %s301 = smul.addr %s300, 8
      %s302 = scalar_lea.vmem %s2, %s301
      %p303 = pneg %p107
      %p304 = pneg %p104
      %p305 = pneg %p128
      %p306 = pneg %p125
      %p307 = pneg %p149
      %p308 = pneg %p146
      %p309 = pneg %p170
      %p310 = pneg %p167
      %p311 = pneg %p191
      %p312 = pneg %p188
      %p313 = pneg %p219
      %p314 = pneg %p216
      %s315 = sadd.s32 %s22, %s23
      %p316 = scmp.lt.s32.totalorder %s315, 1
      %s317 = scalar_select %p316, %s315, 1
      %s318 = smul.addr %s317, 8
      %s319 = scalar_lea.vmem %s7, %s318
      %s320 = smul.u32 4, %s22
      %p321 = scmp.lt.s32.totalorder %s320, 7
      %s322 = scalar_select %p321, %s320, 7
      %s323 = smul.addr %s322, 8
      %s324 = scalar_lea.vmem %s0, %s323
      %s325 = smul.u32 4, %s22
      %s326 = sadd.s32 %s22, %s23
      %p327 = scmp.lt.s32.totalorder %s326, 1
      %s328 = scalar_select %p327, %s326, 1
      %s329 = smul.addr %s328, 8
      %s330 = scalar_lea.vmem %s1, %s329
      %s331 = sadd.s32 %s22, %s23
      %s332 = sadd.s32 %s22, %s23
      %p333 = scmp.lt.s32.totalorder %s332, 1
      %s334 = scalar_select %p333, %s332, 1
      %s335 = smul.addr %s334, 8
      %s336 = scalar_lea.vmem %s2, %s335
      %s337 = sadd.s32 %s22, %s23
      %s338 = sadd.s32 %s22, %s23
      %p339 = scmp.lt.s32.totalorder %s338, 1
      %s340 = scalar_select %p339, %s338, 1
      %s341 = smul.addr %s340, 8
      %s342 = scalar_lea.vmem %s7, %s341
      %s343 = sadd.s32 %s22, %s23
      %v344 = vld [vmem:[%s3] sm:$0xff]
      %v345 = vld [vmem:[%s3 + $0x8] sm:$0xff]
      %v346 = vld [vmem:[%s3 + $0x10] sm:$0xff]
      %v347 = vld [vmem:[%s3 + $0x18] sm:$0xff]
      %v348 = vld [vmem:[%s3 + $0x20] sm:$0xff]
      %v349 = vld [vmem:[%s3 + $0x28] sm:$0xff]
      %v350 = vld [vmem:[%s3 + $0x30] sm:$0xff]
      %v351 = vld [vmem:[%s3 + $0x38] sm:$0xff]
      %v352 = vld [vmem:[%s4] sm:$0xff]
      %v353 = vld [vmem:[%s4 + $0x8] sm:$0xff]
      %v354 = vld [vmem:[%s5] sm:$0xff]
      %v355 = vld [vmem:[%s5 + $0x8] sm:$0xff]
      %v356 = vld [vmem:[%s5 + $0x10] sm:$0xff]
      %v357 = vld [vmem:[%s5 + $0x18] sm:$0xff]
      %v358 = vld [vmem:[%s6] sm:$0x1]
      %v359 = vld [vmem:[%s330] sm:$0xff]
      %v360 = vld [vmem:[%s336] sm:$0xff]
      %v361 = vld [vmem:[%s324] sm:$0xff]
      %vm362 = vcmask 130048
      %v364 = vsel %vm362, %v359, 0
      %366 = vmatprep.subr.mxu0 0.0
      %367 = vmatpush1.msra.mxu0 0.0
      %368 = vmatprep.subr.mxu0 0.0
      %369 = vmatpush1.msra.mxu0 0.0
      %370 = vmatprep.subr.mxu0 0.0
      %371 = vmatpush1.msra.mxu0 0.0
      %372 = vmatprep.subr.mxu0 0.0
      %373 = vmatpush1.msra.mxu0 0.0
      %374 = vmatprep.subr.mxu0 0.0
      %375 = vmatpush1.msra.mxu0 0.0
      %376 = vmatprep.subr.mxu0 0.0
      %377 = vmatpush1.msra.mxu0 0.0
      %378 = vmatprep.subr.mxu0 0.0
      %379 = vmatpush1.msra.mxu0 0.0
      %380 = vmatprep.subr.mxu0 0.0
      %381 = vmatpush1.msra.mxu0 0.0
      %382 = vmatprep.subr.mxu0 0.0
      %383 = vmatpush1.msra.mxu0 0.0
      %384 = vmatprep.subr.mxu0 0.0
      %385 = vmatpush1.msra.mxu0 0.0
      %386 = vmatprep.subr.mxu0 0.0
      %387 = vmatpush1.msra.mxu0 0.0
      %388 = vmatprep.subr.mxu0 0.0
      %389 = vmatpush1.msra.mxu0 0.0
      %390 = vmatprep.subr.mxu0 0.0
      %391 = vmatpush1.msra.mxu0 0.0
      %392 = vmatprep.subr.mxu0 0.0
      %393 = vmatpush1.msra.mxu0 0.0
      %394 = vmatprep.subr.mxu0 0.0
      %395 = vmatpush1.msra.mxu0 %v353
      %396 = vmatprep.subr.mxu0 0.0
      %397 = vmatpush1.msra.mxu0 %v352
      %398 = vmatprep.subr.mxu0 0.0
      %399 = vmatpush2.msra.mxu0 0.0
      %400 = vmatprep.subr.mxu0 0.0
      %401 = vmatpush2.msra.mxu0 0.0
      %402 = vmatprep.subr.mxu0 0.0
      %403 = vmatpush2.msra.mxu0 0.0
      %404 = vmatprep.subr.mxu0 0.0
      %405 = vmatpush2.msra.mxu0 0.0
      %406 = vmatprep.subr.mxu0 0.0
      %407 = vmatpush2.msra.mxu0 0.0
      %408 = vmatprep.subr.mxu0 0.0
      %409 = vmatpush2.msra.mxu0 0.0
      %410 = vmatprep.subr.mxu0 0.0
      %411 = vmatpush2.msra.mxu0 0.0
      %412 = vmatprep.subr.mxu0 0.0
      %413 = vmatpush2.msra.mxu0 0.0
      %414 = vmatprep.subr.mxu0 0.0
      %415 = vmatpush2.msra.mxu0 0.0
      %416 = vmatprep.subr.mxu0 0.0
      %417 = vmatpush2.msra.mxu0 0.0
      %418 = vmatprep.subr.mxu0 0.0
      %419 = vmatpush2.msra.mxu0 0.0
      %420 = vmatprep.subr.mxu0 0.0
      %421 = vmatpush2.msra.mxu0 0.0
      %422 = vmatprep.subr.mxu0 0.0
      %423 = vmatpush2.msra.mxu0 0.0
      %424 = vmatprep.subr.mxu0 0.0
      %425 = vmatpush2.msra.mxu0 0.0
      %426 = vmatprep.subr.mxu0 0.0
      %427 = vmatpush2.msra.mxu0 0.0
      %428 = vmatprep.subr.mxu0 0.0
      %429 = vmatpush2.msra.mxu0 0.0
      %430 = vmatprep.mubr.f32.mxu0 0.0
      %431 = vmatmul.mubr.f32.gmra.mxu0 %v364
      %v432 = vpop.f32.mrf.mxu0
      %v433 = vadd.f32 0.0, %v432
      %v434 = vpop.f32.mrf.mxu0
      %435 = vdwg.mxu0
      %vm436 = vcmask 523264
      %v438 = vsel %vm436, %v361, 0
      %440 = vmatprep.subr.mxu0 0.0
      %441 = vmatpush1.msra.mxu0 0.0
      %442 = vmatprep.subr.mxu0 0.0
      %443 = vmatpush1.msra.mxu0 0.0
      %444 = vmatprep.subr.mxu0 0.0
      %445 = vmatpush1.msra.mxu0 0.0
      %446 = vmatprep.subr.mxu0 0.0
      %447 = vmatpush1.msra.mxu0 0.0
      %448 = vmatprep.subr.mxu0 0.0
      %449 = vmatpush1.msra.mxu0 0.0
      %450 = vmatprep.subr.mxu0 0.0
      %451 = vmatpush1.msra.mxu0 0.0
      %452 = vmatprep.subr.mxu0 0.0
      %453 = vmatpush1.msra.mxu0 0.0
      %454 = vmatprep.subr.mxu0 0.0
      %455 = vmatpush1.msra.mxu0 0.0
      %456 = vmatprep.subr.mxu0 0.0
      %457 = vmatpush1.msra.mxu0 %v351
      %458 = vmatprep.subr.mxu0 0.0
      %459 = vmatpush1.msra.mxu0 %v350
      %460 = vmatprep.subr.mxu0 0.0
      %461 = vmatpush1.msra.mxu0 %v349
      %462 = vmatprep.subr.mxu0 0.0
      %463 = vmatpush1.msra.mxu0 %v348
      %464 = vmatprep.subr.mxu0 0.0
      %465 = vmatpush1.msra.mxu0 %v347
      %466 = vmatprep.subr.mxu0 0.0
      %467 = vmatpush1.msra.mxu0 %v346
      %468 = vmatprep.subr.mxu0 0.0
      %469 = vmatpush1.msra.mxu0 %v345
      %470 = vmatprep.subr.mxu0 0.0
      %471 = vmatpush1.msra.mxu0 %v344
      %472 = vmatprep.subr.mxu0 0.0
      %473 = vmatpush2.msra.mxu0 0.0
      %474 = vmatprep.subr.mxu0 0.0
      %475 = vmatpush2.msra.mxu0 0.0
      %476 = vmatprep.subr.mxu0 0.0
      %477 = vmatpush2.msra.mxu0 0.0
      %478 = vmatprep.subr.mxu0 0.0
      %479 = vmatpush2.msra.mxu0 0.0
      %480 = vmatprep.subr.mxu0 0.0
      %481 = vmatpush2.msra.mxu0 0.0
      %482 = vmatprep.subr.mxu0 0.0
      %483 = vmatpush2.msra.mxu0 0.0
      %484 = vmatprep.subr.mxu0 0.0
      %485 = vmatpush2.msra.mxu0 0.0
      %486 = vmatprep.subr.mxu0 0.0
      %487 = vmatpush2.msra.mxu0 0.0
      %488 = vmatprep.subr.mxu0 0.0
      %489 = vmatpush2.msra.mxu0 0.0
      %490 = vmatprep.subr.mxu0 0.0
      %491 = vmatpush2.msra.mxu0 0.0
      %492 = vmatprep.subr.mxu0 0.0
      %493 = vmatpush2.msra.mxu0 0.0
      %494 = vmatprep.subr.mxu0 0.0
      %495 = vmatpush2.msra.mxu0 0.0
      %496 = vmatprep.subr.mxu0 0.0
      %497 = vmatpush2.msra.mxu0 0.0
      %498 = vmatprep.subr.mxu0 0.0
      %499 = vmatpush2.msra.mxu0 0.0
      %500 = vmatprep.subr.mxu0 0.0
      %501 = vmatpush2.msra.mxu0 0.0
      %502 = vmatprep.subr.mxu0 0.0
      %503 = vmatpush2.msra.mxu0 0.0
      %504 = vmatprep.mubr.f32.mxu0 0.0
      %505 = vmatmul.mubr.f32.gmra.mxu0 %v438
      %v506 = vpop.f32.mrf.mxu0
      %v507 = vadd.f32 %v433, %v506
      %v508 = vpop.f32.mrf.mxu0
      %509 = vdwg.mxu0
      %510 = vrot.lane.b32.xlu0 %v361, 64
      %v511 = vpop.permute.xlu0 %510
      %vm512 = vcmask 64512
      %v513 = vsel %vm512, %v511, 0
      %515 = vmatprep.subr.mxu0 0.0
      %516 = vmatpush1.msra.mxu0 0.0
      %517 = vmatprep.subr.mxu0 0.0
      %518 = vmatpush1.msra.mxu0 0.0
      %519 = vmatprep.subr.mxu0 0.0
      %520 = vmatpush1.msra.mxu0 0.0
      %521 = vmatprep.subr.mxu0 0.0
      %522 = vmatpush1.msra.mxu0 0.0
      %523 = vmatprep.subr.mxu0 0.0
      %524 = vmatpush1.msra.mxu0 0.0
      %525 = vmatprep.subr.mxu0 0.0
      %526 = vmatpush1.msra.mxu0 0.0
      %527 = vmatprep.subr.mxu0 0.0
      %528 = vmatpush1.msra.mxu0 0.0
      %529 = vmatprep.subr.mxu0 0.0
      %530 = vmatpush1.msra.mxu0 0.0
      %531 = vmatprep.subr.mxu0 0.0
      %532 = vmatpush1.msra.mxu0 0.0
      %533 = vmatprep.subr.mxu0 0.0
      %534 = vmatpush1.msra.mxu0 0.0
      %535 = vmatprep.subr.mxu0 0.0
      %536 = vmatpush1.msra.mxu0 0.0
      %537 = vmatprep.subr.mxu0 0.0
      %538 = vmatpush1.msra.mxu0 0.0
      %539 = vmatprep.subr.mxu0 0.0
      %540 = vmatpush1.msra.mxu0 0.0
      %541 = vmatprep.subr.mxu0 0.0
      %542 = vmatpush1.msra.mxu0 0.0
      %543 = vmatprep.subr.mxu0 0.0
      %544 = vmatpush1.msra.mxu0 0.0
      %545 = vmatprep.subr.mxu0 0.0
      %546 = vmatpush1.msra.mxu0 %v507
      %547 = vmatprep.subr.mxu0 0.0
      %548 = vmatpush2.msra.mxu0 0.0
      %549 = vmatprep.subr.mxu0 0.0
      %550 = vmatpush2.msra.mxu0 0.0
      %551 = vmatprep.subr.mxu0 0.0
      %552 = vmatpush2.msra.mxu0 0.0
      %553 = vmatprep.subr.mxu0 0.0
      %554 = vmatpush2.msra.mxu0 0.0
      %555 = vmatprep.subr.mxu0 0.0
      %556 = vmatpush2.msra.mxu0 0.0
      %557 = vmatprep.subr.mxu0 0.0
      %558 = vmatpush2.msra.mxu0 0.0
      %559 = vmatprep.subr.mxu0 0.0
      %560 = vmatpush2.msra.mxu0 0.0
      %561 = vmatprep.subr.mxu0 0.0
      %562 = vmatpush2.msra.mxu0 0.0
      %563 = vmatprep.subr.mxu0 0.0
      %564 = vmatpush2.msra.mxu0 0.0
      %565 = vmatprep.subr.mxu0 0.0
      %566 = vmatpush2.msra.mxu0 0.0
      %567 = vmatprep.subr.mxu0 0.0
      %568 = vmatpush2.msra.mxu0 0.0
      %569 = vmatprep.subr.mxu0 0.0
      %570 = vmatpush2.msra.mxu0 0.0
      %571 = vmatprep.subr.mxu0 0.0
      %572 = vmatpush2.msra.mxu0 0.0
      %573 = vmatprep.subr.mxu0 0.0
      %574 = vmatpush2.msra.mxu0 0.0
      %575 = vmatprep.subr.mxu0 0.0
      %576 = vmatpush2.msra.mxu0 0.0
      %577 = vmatprep.subr.mxu0 0.0
      %578 = vmatpush2.msra.mxu0 0.0
      %579 = vmatprep.mubr.f32.mxu0 0.0
      %580 = vmatmul.mubr.f32.gmra.mxu0 %v513
      %v581 = vpop.f32.mrf.mxu0
      %v582 = vadd.f32 0.0, %v581
      %v583 = vpop.f32.mrf.mxu0
      %584 = vdwg.mxu0
      %v585 = vmax.f32 %v582, 0.0
      %vm586 = vcmask 261120
      %v587 = vsel %vm586, %v585, 0.0
      %v588 = vrot.slane %v587, 4
      %v589 = vadd.f32 %v587, %v588
      %v590 = vrot.slane %v589, 2
      %v591 = vadd.f32 %v589, %v590
      %v592 = vrot.slane %v591, 1
      %v593 = vadd.f32 %v591, %v592
      %v594 = vrcp.pop 8.0
      %v595 = vmul.f32 %v593, %v594
      %v596 = vadd.f32 %v595, 1e-06
      %v597 = vrcp.pop %v596
      %v598 = vmul.f32 %v585, %v597
      %v599 = vmax.f32 %v598, 0.0
      %v600 = vand.u32 2147483647, %v598
      %v601 = vsub.f32 0.0, %v600
      %v602 = vmul.f32 %v601, 1.442695
      %v603 = vpow.pop %v602
      %v604 = vadd.f32 %v603, 1.0
      %v605 = vlog2.pop %v604
      %v606 = vmul.f32 %v605, 0.6931472
      %v607 = vmul.f32 -0.5, %v603
      %v608 = vadd.f32 %v607, 1.0
      %v609 = vmul.f32 %v608, %v603
      %v610 = vand.u32 2147483647, %v603
      %vm611 = vcmp.lt.f32.partialorder %v610, 0.0004427343
      %v612 = vsel %vm611, %v609, %v606
      %v613 = vadd.f32 %v599, %v612
      %v615 = vlaneseq
      %v616 = vshrl.u32 %v615, 7
      %v617 = vsub.s32 0, %v616
      %v618 = vrot.slane %v358, %v617
      %v621 = vsel %vm586, %v613, 0
      %623 = vmatprep.subr.mxu0 0.0
      %624 = vmatpush1.msra.mxu0 0.0
      %625 = vmatprep.subr.mxu0 0.0
      %626 = vmatpush1.msra.mxu0 0.0
      %627 = vmatprep.subr.mxu0 0.0
      %628 = vmatpush1.msra.mxu0 0.0
      %629 = vmatprep.subr.mxu0 0.0
      %630 = vmatpush1.msra.mxu0 0.0
      %631 = vmatprep.subr.mxu0 0.0
      %632 = vmatpush1.msra.mxu0 0.0
      %633 = vmatprep.subr.mxu0 0.0
      %634 = vmatpush1.msra.mxu0 0.0
      %635 = vmatprep.subr.mxu0 0.0
      %636 = vmatpush1.msra.mxu0 0.0
      %637 = vmatprep.subr.mxu0 0.0
      %638 = vmatpush1.msra.mxu0 0.0
      %639 = vmatprep.subr.mxu0 0.0
      %640 = vmatpush1.msra.mxu0 0.0
      %641 = vmatprep.subr.mxu0 0.0
      %642 = vmatpush1.msra.mxu0 0.0
      %643 = vmatprep.subr.mxu0 0.0
      %644 = vmatpush1.msra.mxu0 0.0
      %645 = vmatprep.subr.mxu0 0.0
      %646 = vmatpush1.msra.mxu0 0.0
      %647 = vmatprep.subr.mxu0 0.0
      %648 = vmatpush1.msra.mxu0 %v357
      %649 = vmatprep.subr.mxu0 0.0
      %650 = vmatpush1.msra.mxu0 %v356
      %651 = vmatprep.subr.mxu0 0.0
      %652 = vmatpush1.msra.mxu0 %v355
      %653 = vmatprep.subr.mxu0 0.0
      %654 = vmatpush1.msra.mxu0 %v354
      %655 = vmatprep.subr.mxu0 0.0
      %656 = vmatpush2.msra.mxu0 0.0
      %657 = vmatprep.subr.mxu0 0.0
      %658 = vmatpush2.msra.mxu0 0.0
      %659 = vmatprep.subr.mxu0 0.0
      %660 = vmatpush2.msra.mxu0 0.0
      %661 = vmatprep.subr.mxu0 0.0
      %662 = vmatpush2.msra.mxu0 0.0
      %663 = vmatprep.subr.mxu0 0.0
      %664 = vmatpush2.msra.mxu0 0.0
      %665 = vmatprep.subr.mxu0 0.0
      %666 = vmatpush2.msra.mxu0 0.0
      %667 = vmatprep.subr.mxu0 0.0
      %668 = vmatpush2.msra.mxu0 0.0
      %669 = vmatprep.subr.mxu0 0.0
      %670 = vmatpush2.msra.mxu0 0.0
      %671 = vmatprep.subr.mxu0 0.0
      %672 = vmatpush2.msra.mxu0 0.0
      %673 = vmatprep.subr.mxu0 0.0
      %674 = vmatpush2.msra.mxu0 0.0
      %675 = vmatprep.subr.mxu0 0.0
      %676 = vmatpush2.msra.mxu0 0.0
      %677 = vmatprep.subr.mxu0 0.0
      %678 = vmatpush2.msra.mxu0 0.0
      %679 = vmatprep.subr.mxu0 0.0
      %680 = vmatpush2.msra.mxu0 0.0
      %681 = vmatprep.subr.mxu0 0.0
      %682 = vmatpush2.msra.mxu0 0.0
      %683 = vmatprep.subr.mxu0 0.0
      %684 = vmatpush2.msra.mxu0 0.0
      %685 = vmatprep.subr.mxu0 0.0
      %686 = vmatpush2.msra.mxu0 0.0
      %687 = vmatprep.mubr.f32.mxu0 0.0
      %688 = vmatmul.mubr.f32.gmra.mxu0 %v621
      %v689 = vpop.f32.mrf.mxu0
      %v690 = vadd.f32 %v618, %v689
      %v691 = vpop.f32.mrf.mxu0
      %692 = vdwg.mxu0
      %v693 = vxor.u32 %v690, 2147483648
      %v694 = vmul.f32 %v693, 1.442695
      %v695 = vpow.pop %v694
      %v696 = vadd.f32 %v695, 1.0
      %v697 = vrcp.pop %v696
      %v698 = vmul.f32 1.0, %v697
      %v699 = vmax.f32 %v690, 0.0
      %701 = vrot.lane.b32.xlu0 %v360, 16
      %v702 = vpop.permute.xlu0 %701
      %v704 = vmul.f32 %v698, %v702
      %706 = vrot.lane.b32.xlu0 %v699, 80
      %v707 = vpop.permute.xlu0 %706
      %v709 = vmul.f32 %v698, %v707
      %711 = vrot.lane.b32.xlu0 %v709, 16
      %v712 = vpop.permute.xlu0 %711
      %v714 = vadd.f32 %v704, %v712
      %v715 = vtanh.pop %v714
      %717 = vrot.lane.b32.xlu0 %v715, 16
      %v718 = vpop.permute.xlu0 %717
      %v720 = vmul.f32 %v698, %v718
      %s721 = scalar_lea.vmem %s324, 8
      %v722 = vld [vmem:[%s721] sm:$0xff]
      %724 = vrot.lane.b32.xlu0 %v720, 96
      %v725 = vpop.permute.xlu0 %724
      %v726 = vsel %vm362, %v725, 0
      %728 = vmatprep.subr.mxu0 0.0
      %729 = vmatpush1.msra.mxu0 0.0
      %730 = vmatprep.subr.mxu0 0.0
      %731 = vmatpush1.msra.mxu0 0.0
      %732 = vmatprep.subr.mxu0 0.0
      %733 = vmatpush1.msra.mxu0 0.0
      %734 = vmatprep.subr.mxu0 0.0
      %735 = vmatpush1.msra.mxu0 0.0
      %736 = vmatprep.subr.mxu0 0.0
      %737 = vmatpush1.msra.mxu0 0.0
      %738 = vmatprep.subr.mxu0 0.0
      %739 = vmatpush1.msra.mxu0 0.0
      %740 = vmatprep.subr.mxu0 0.0
      %741 = vmatpush1.msra.mxu0 0.0
      %742 = vmatprep.subr.mxu0 0.0
      %743 = vmatpush1.msra.mxu0 0.0
      %744 = vmatprep.subr.mxu0 0.0
      %745 = vmatpush1.msra.mxu0 0.0
      %746 = vmatprep.subr.mxu0 0.0
      %747 = vmatpush1.msra.mxu0 0.0
      %748 = vmatprep.subr.mxu0 0.0
      %749 = vmatpush1.msra.mxu0 0.0
      %750 = vmatprep.subr.mxu0 0.0
      %751 = vmatpush1.msra.mxu0 0.0
      %752 = vmatprep.subr.mxu0 0.0
      %753 = vmatpush1.msra.mxu0 0.0
      %754 = vmatprep.subr.mxu0 0.0
      %755 = vmatpush1.msra.mxu0 0.0
      %756 = vmatprep.subr.mxu0 0.0
      %757 = vmatpush1.msra.mxu0 %v353
      %758 = vmatprep.subr.mxu0 0.0
      %759 = vmatpush1.msra.mxu0 %v352
      %760 = vmatprep.subr.mxu0 0.0
      %761 = vmatpush2.msra.mxu0 0.0
      %762 = vmatprep.subr.mxu0 0.0
      %763 = vmatpush2.msra.mxu0 0.0
      %764 = vmatprep.subr.mxu0 0.0
      %765 = vmatpush2.msra.mxu0 0.0
      %766 = vmatprep.subr.mxu0 0.0
      %767 = vmatpush2.msra.mxu0 0.0
      %768 = vmatprep.subr.mxu0 0.0
      %769 = vmatpush2.msra.mxu0 0.0
      %770 = vmatprep.subr.mxu0 0.0
      %771 = vmatpush2.msra.mxu0 0.0
      %772 = vmatprep.subr.mxu0 0.0
      %773 = vmatpush2.msra.mxu0 0.0
      %774 = vmatprep.subr.mxu0 0.0
      %775 = vmatpush2.msra.mxu0 0.0
      %776 = vmatprep.subr.mxu0 0.0
      %777 = vmatpush2.msra.mxu0 0.0
      %778 = vmatprep.subr.mxu0 0.0
      %779 = vmatpush2.msra.mxu0 0.0
      %780 = vmatprep.subr.mxu0 0.0
      %781 = vmatpush2.msra.mxu0 0.0
      %782 = vmatprep.subr.mxu0 0.0
      %783 = vmatpush2.msra.mxu0 0.0
      %784 = vmatprep.subr.mxu0 0.0
      %785 = vmatpush2.msra.mxu0 0.0
      %786 = vmatprep.subr.mxu0 0.0
      %787 = vmatpush2.msra.mxu0 0.0
      %788 = vmatprep.subr.mxu0 0.0
      %789 = vmatpush2.msra.mxu0 0.0
      %790 = vmatprep.subr.mxu0 0.0
      %791 = vmatpush2.msra.mxu0 0.0
      %792 = vmatprep.mubr.f32.mxu0 0.0
      %793 = vmatmul.mubr.f32.gmra.mxu0 %v726
      %v794 = vpop.f32.mrf.mxu0
      %v795 = vadd.f32 0.0, %v794
      %v796 = vpop.f32.mrf.mxu0
      %797 = vdwg.mxu0
      %v799 = vsel %vm436, %v722, 0
      %801 = vmatprep.subr.mxu0 0.0
      %802 = vmatpush1.msra.mxu0 0.0
      %803 = vmatprep.subr.mxu0 0.0
      %804 = vmatpush1.msra.mxu0 0.0
      %805 = vmatprep.subr.mxu0 0.0
      %806 = vmatpush1.msra.mxu0 0.0
      %807 = vmatprep.subr.mxu0 0.0
      %808 = vmatpush1.msra.mxu0 0.0
      %809 = vmatprep.subr.mxu0 0.0
      %810 = vmatpush1.msra.mxu0 0.0
      %811 = vmatprep.subr.mxu0 0.0
      %812 = vmatpush1.msra.mxu0 0.0
      %813 = vmatprep.subr.mxu0 0.0
      %814 = vmatpush1.msra.mxu0 0.0
      %815 = vmatprep.subr.mxu0 0.0
      %816 = vmatpush1.msra.mxu0 0.0
      %817 = vmatprep.subr.mxu0 0.0
      %818 = vmatpush1.msra.mxu0 %v351
      %819 = vmatprep.subr.mxu0 0.0
      %820 = vmatpush1.msra.mxu0 %v350
      %821 = vmatprep.subr.mxu0 0.0
      %822 = vmatpush1.msra.mxu0 %v349
      %823 = vmatprep.subr.mxu0 0.0
      %824 = vmatpush1.msra.mxu0 %v348
      %825 = vmatprep.subr.mxu0 0.0
      %826 = vmatpush1.msra.mxu0 %v347
      %827 = vmatprep.subr.mxu0 0.0
      %828 = vmatpush1.msra.mxu0 %v346
      %829 = vmatprep.subr.mxu0 0.0
      %830 = vmatpush1.msra.mxu0 %v345
      %831 = vmatprep.subr.mxu0 0.0
      %832 = vmatpush1.msra.mxu0 %v344
      %833 = vmatprep.subr.mxu0 0.0
      %834 = vmatpush2.msra.mxu0 0.0
      %835 = vmatprep.subr.mxu0 0.0
      %836 = vmatpush2.msra.mxu0 0.0
      %837 = vmatprep.subr.mxu0 0.0
      %838 = vmatpush2.msra.mxu0 0.0
      %839 = vmatprep.subr.mxu0 0.0
      %840 = vmatpush2.msra.mxu0 0.0
      %841 = vmatprep.subr.mxu0 0.0
      %842 = vmatpush2.msra.mxu0 0.0
      %843 = vmatprep.subr.mxu0 0.0
      %844 = vmatpush2.msra.mxu0 0.0
      %845 = vmatprep.subr.mxu0 0.0
      %846 = vmatpush2.msra.mxu0 0.0
      %847 = vmatprep.subr.mxu0 0.0
      %848 = vmatpush2.msra.mxu0 0.0
      %849 = vmatprep.subr.mxu0 0.0
      %850 = vmatpush2.msra.mxu0 0.0
      %851 = vmatprep.subr.mxu0 0.0
      %852 = vmatpush2.msra.mxu0 0.0
      %853 = vmatprep.subr.mxu0 0.0
      %854 = vmatpush2.msra.mxu0 0.0
      %855 = vmatprep.subr.mxu0 0.0
      %856 = vmatpush2.msra.mxu0 0.0
      %857 = vmatprep.subr.mxu0 0.0
      %858 = vmatpush2.msra.mxu0 0.0
      %859 = vmatprep.subr.mxu0 0.0
      %860 = vmatpush2.msra.mxu0 0.0
      %861 = vmatprep.subr.mxu0 0.0
      %862 = vmatpush2.msra.mxu0 0.0
      %863 = vmatprep.subr.mxu0 0.0
      %864 = vmatpush2.msra.mxu0 0.0
      %865 = vmatprep.mubr.f32.mxu0 0.0
      %866 = vmatmul.mubr.f32.gmra.mxu0 %v799
      %v867 = vpop.f32.mrf.mxu0
      %v868 = vadd.f32 %v795, %v867
      %v869 = vpop.f32.mrf.mxu0
      %870 = vdwg.mxu0
      %871 = vrot.lane.b32.xlu0 %v722, 64
      %v872 = vpop.permute.xlu0 %871
      %v873 = vsel %vm512, %v872, 0
      %875 = vmatprep.subr.mxu0 0.0
      %876 = vmatpush1.msra.mxu0 0.0
      %877 = vmatprep.subr.mxu0 0.0
      %878 = vmatpush1.msra.mxu0 0.0
      %879 = vmatprep.subr.mxu0 0.0
      %880 = vmatpush1.msra.mxu0 0.0
      %881 = vmatprep.subr.mxu0 0.0
      %882 = vmatpush1.msra.mxu0 0.0
      %883 = vmatprep.subr.mxu0 0.0
      %884 = vmatpush1.msra.mxu0 0.0
      %885 = vmatprep.subr.mxu0 0.0
      %886 = vmatpush1.msra.mxu0 0.0
      %887 = vmatprep.subr.mxu0 0.0
      %888 = vmatpush1.msra.mxu0 0.0
      %889 = vmatprep.subr.mxu0 0.0
      %890 = vmatpush1.msra.mxu0 0.0
      %891 = vmatprep.subr.mxu0 0.0
      %892 = vmatpush1.msra.mxu0 0.0
      %893 = vmatprep.subr.mxu0 0.0
      %894 = vmatpush1.msra.mxu0 0.0
      %895 = vmatprep.subr.mxu0 0.0
      %896 = vmatpush1.msra.mxu0 0.0
      %897 = vmatprep.subr.mxu0 0.0
      %898 = vmatpush1.msra.mxu0 0.0
      %899 = vmatprep.subr.mxu0 0.0
      %900 = vmatpush1.msra.mxu0 0.0
      %901 = vmatprep.subr.mxu0 0.0
      %902 = vmatpush1.msra.mxu0 0.0
      %903 = vmatprep.subr.mxu0 0.0
      %904 = vmatpush1.msra.mxu0 0.0
      %905 = vmatprep.subr.mxu0 0.0
      %906 = vmatpush1.msra.mxu0 %v868
      %907 = vmatprep.subr.mxu0 0.0
      %908 = vmatpush2.msra.mxu0 0.0
      %909 = vmatprep.subr.mxu0 0.0
      %910 = vmatpush2.msra.mxu0 0.0
      %911 = vmatprep.subr.mxu0 0.0
      %912 = vmatpush2.msra.mxu0 0.0
      %913 = vmatprep.subr.mxu0 0.0
      %914 = vmatpush2.msra.mxu0 0.0
      %915 = vmatprep.subr.mxu0 0.0
      %916 = vmatpush2.msra.mxu0 0.0
      %917 = vmatprep.subr.mxu0 0.0
      %918 = vmatpush2.msra.mxu0 0.0
      %919 = vmatprep.subr.mxu0 0.0
      %920 = vmatpush2.msra.mxu0 0.0
      %921 = vmatprep.subr.mxu0 0.0
      %922 = vmatpush2.msra.mxu0 0.0
      %923 = vmatprep.subr.mxu0 0.0
      %924 = vmatpush2.msra.mxu0 0.0
      %925 = vmatprep.subr.mxu0 0.0
      %926 = vmatpush2.msra.mxu0 0.0
      %927 = vmatprep.subr.mxu0 0.0
      %928 = vmatpush2.msra.mxu0 0.0
      %929 = vmatprep.subr.mxu0 0.0
      %930 = vmatpush2.msra.mxu0 0.0
      %931 = vmatprep.subr.mxu0 0.0
      %932 = vmatpush2.msra.mxu0 0.0
      %933 = vmatprep.subr.mxu0 0.0
      %934 = vmatpush2.msra.mxu0 0.0
      %935 = vmatprep.subr.mxu0 0.0
      %936 = vmatpush2.msra.mxu0 0.0
      %937 = vmatprep.subr.mxu0 0.0
      %938 = vmatpush2.msra.mxu0 0.0
      %939 = vmatprep.mubr.f32.mxu0 0.0
      %940 = vmatmul.mubr.f32.gmra.mxu0 %v873
      %v941 = vpop.f32.mrf.mxu0
      %v942 = vadd.f32 0.0, %v941
      %v943 = vpop.f32.mrf.mxu0
      %944 = vdwg.mxu0
      %v945 = vmax.f32 %v942, 0.0
      %v946 = vsel %vm586, %v945, 0.0
      %v947 = vrot.slane %v946, 4
      %v948 = vadd.f32 %v946, %v947
      %v949 = vrot.slane %v948, 2
      %v950 = vadd.f32 %v948, %v949
      %v951 = vrot.slane %v950, 1
      %v952 = vadd.f32 %v950, %v951
      %v953 = vmul.f32 %v952, %v594
      %v954 = vadd.f32 %v953, 1e-06
      %v955 = vrcp.pop %v954
      %v956 = vmul.f32 %v945, %v955
      %v957 = vmax.f32 %v956, 0.0
      %v958 = vand.u32 2147483647, %v956
      %v959 = vsub.f32 0.0, %v958
      %v960 = vmul.f32 %v959, 1.442695
      %v961 = vpow.pop %v960
      %v962 = vadd.f32 %v961, 1.0
      %v963 = vlog2.pop %v962
      %v964 = vmul.f32 %v963, 0.6931472
      %v965 = vmul.f32 -0.5, %v961
      %v966 = vadd.f32 %v965, 1.0
      %v967 = vmul.f32 %v966, %v961
      %v968 = vand.u32 2147483647, %v961
      %vm969 = vcmp.lt.f32.partialorder %v968, 0.0004427343
      %v970 = vsel %vm969, %v967, %v964
      %v971 = vadd.f32 %v957, %v970
      %v973 = vsel %vm586, %v971, 0
      %975 = vmatprep.subr.mxu0 0.0
      %976 = vmatpush1.msra.mxu0 0.0
      %977 = vmatprep.subr.mxu0 0.0
      %978 = vmatpush1.msra.mxu0 0.0
      %979 = vmatprep.subr.mxu0 0.0
      %980 = vmatpush1.msra.mxu0 0.0
      %981 = vmatprep.subr.mxu0 0.0
      %982 = vmatpush1.msra.mxu0 0.0
      %983 = vmatprep.subr.mxu0 0.0
      %984 = vmatpush1.msra.mxu0 0.0
      %985 = vmatprep.subr.mxu0 0.0
      %986 = vmatpush1.msra.mxu0 0.0
      %987 = vmatprep.subr.mxu0 0.0
      %988 = vmatpush1.msra.mxu0 0.0
      %989 = vmatprep.subr.mxu0 0.0
      %990 = vmatpush1.msra.mxu0 0.0
      %991 = vmatprep.subr.mxu0 0.0
      %992 = vmatpush1.msra.mxu0 0.0
      %993 = vmatprep.subr.mxu0 0.0
      %994 = vmatpush1.msra.mxu0 0.0
      %995 = vmatprep.subr.mxu0 0.0
      %996 = vmatpush1.msra.mxu0 0.0
      %997 = vmatprep.subr.mxu0 0.0
      %998 = vmatpush1.msra.mxu0 0.0
      %999 = vmatprep.subr.mxu0 0.0
      %1000 = vmatpush1.msra.mxu0 %v357
      %1001 = vmatprep.subr.mxu0 0.0
      %1002 = vmatpush1.msra.mxu0 %v356
      %1003 = vmatprep.subr.mxu0 0.0
      %1004 = vmatpush1.msra.mxu0 %v355
      %1005 = vmatprep.subr.mxu0 0.0
      %1006 = vmatpush1.msra.mxu0 %v354
      %1007 = vmatprep.subr.mxu0 0.0
      %1008 = vmatpush2.msra.mxu0 0.0
      %1009 = vmatprep.subr.mxu0 0.0
      %1010 = vmatpush2.msra.mxu0 0.0
      %1011 = vmatprep.subr.mxu0 0.0
      %1012 = vmatpush2.msra.mxu0 0.0
      %1013 = vmatprep.subr.mxu0 0.0
      %1014 = vmatpush2.msra.mxu0 0.0
      %1015 = vmatprep.subr.mxu0 0.0
      %1016 = vmatpush2.msra.mxu0 0.0
      %1017 = vmatprep.subr.mxu0 0.0
      %1018 = vmatpush2.msra.mxu0 0.0
      %1019 = vmatprep.subr.mxu0 0.0
      %1020 = vmatpush2.msra.mxu0 0.0
      %1021 = vmatprep.subr.mxu0 0.0
      %1022 = vmatpush2.msra.mxu0 0.0
      %1023 = vmatprep.subr.mxu0 0.0
      %1024 = vmatpush2.msra.mxu0 0.0
      %1025 = vmatprep.subr.mxu0 0.0
      %1026 = vmatpush2.msra.mxu0 0.0
      %1027 = vmatprep.subr.mxu0 0.0
      %1028 = vmatpush2.msra.mxu0 0.0
      %1029 = vmatprep.subr.mxu0 0.0
      %1030 = vmatpush2.msra.mxu0 0.0
      %1031 = vmatprep.subr.mxu0 0.0
      %1032 = vmatpush2.msra.mxu0 0.0
      %1033 = vmatprep.subr.mxu0 0.0
      %1034 = vmatpush2.msra.mxu0 0.0
      %1035 = vmatprep.subr.mxu0 0.0
      %1036 = vmatpush2.msra.mxu0 0.0
      %1037 = vmatprep.subr.mxu0 0.0
      %1038 = vmatpush2.msra.mxu0 0.0
      %1039 = vmatprep.mubr.f32.mxu0 0.0
      %1040 = vmatmul.mubr.f32.gmra.mxu0 %v973
      %v1041 = vpop.f32.mrf.mxu0
      %v1042 = vadd.f32 %v618, %v1041
      %v1043 = vpop.f32.mrf.mxu0
      %1044 = vdwg.mxu0
      %v1045 = vxor.u32 %v1042, 2147483648
      %v1046 = vmul.f32 %v1045, 1.442695
      %v1047 = vpow.pop %v1046
      %v1048 = vadd.f32 %v1047, 1.0
      %v1049 = vrcp.pop %v1048
      %v1050 = vmul.f32 1.0, %v1049
      %v1051 = vmax.f32 %v1042, 0.0
      %v1052 = vmul.f32 %v1050, %v714
      %1054 = vrot.lane.b32.xlu0 %v1051, 80
      %v1055 = vpop.permute.xlu0 %1054
      %v1057 = vmul.f32 %v1050, %v1055
      %1059 = vrot.lane.b32.xlu0 %v1057, 16
      %v1060 = vpop.permute.xlu0 %1059
      %v1062 = vadd.f32 %v1052, %v1060
      %v1063 = vtanh.pop %v1062
      %1065 = vrot.lane.b32.xlu0 %v1063, 16
      %v1066 = vpop.permute.xlu0 %1065
      %v1068 = vmul.f32 %v1050, %v1066
      %s1069 = scalar_lea.vmem %s324, 16
      %v1070 = vld [vmem:[%s1069] sm:$0xff]
      %1072 = vrot.lane.b32.xlu0 %v1068, 96
      %v1073 = vpop.permute.xlu0 %1072
      %v1074 = vsel %vm362, %v1073, 0
      %1076 = vmatprep.subr.mxu0 0.0
      %1077 = vmatpush1.msra.mxu0 0.0
      %1078 = vmatprep.subr.mxu0 0.0
      %1079 = vmatpush1.msra.mxu0 0.0
      %1080 = vmatprep.subr.mxu0 0.0
      %1081 = vmatpush1.msra.mxu0 0.0
      %1082 = vmatprep.subr.mxu0 0.0
      %1083 = vmatpush1.msra.mxu0 0.0
      %1084 = vmatprep.subr.mxu0 0.0
      %1085 = vmatpush1.msra.mxu0 0.0
      %1086 = vmatprep.subr.mxu0 0.0
      %1087 = vmatpush1.msra.mxu0 0.0
      %1088 = vmatprep.subr.mxu0 0.0
      %1089 = vmatpush1.msra.mxu0 0.0
      %1090 = vmatprep.subr.mxu0 0.0
      %1091 = vmatpush1.msra.mxu0 0.0
      %1092 = vmatprep.subr.mxu0 0.0
      %1093 = vmatpush1.msra.mxu0 0.0
      %1094 = vmatprep.subr.mxu0 0.0
      %1095 = vmatpush1.msra.mxu0 0.0
      %1096 = vmatprep.subr.mxu0 0.0
      %1097 = vmatpush1.msra.mxu0 0.0
      %1098 = vmatprep.subr.mxu0 0.0
      %1099 = vmatpush1.msra.mxu0 0.0
      %1100 = vmatprep.subr.mxu0 0.0
      %1101 = vmatpush1.msra.mxu0 0.0
      %1102 = vmatprep.subr.mxu0 0.0
      %1103 = vmatpush1.msra.mxu0 0.0
      %1104 = vmatprep.subr.mxu0 0.0
      %1105 = vmatpush1.msra.mxu0 %v353
      %1106 = vmatprep.subr.mxu0 0.0
      %1107 = vmatpush1.msra.mxu0 %v352
      %1108 = vmatprep.subr.mxu0 0.0
      %1109 = vmatpush2.msra.mxu0 0.0
      %1110 = vmatprep.subr.mxu0 0.0
      %1111 = vmatpush2.msra.mxu0 0.0
      %1112 = vmatprep.subr.mxu0 0.0
      %1113 = vmatpush2.msra.mxu0 0.0
      %1114 = vmatprep.subr.mxu0 0.0
      %1115 = vmatpush2.msra.mxu0 0.0
      %1116 = vmatprep.subr.mxu0 0.0
      %1117 = vmatpush2.msra.mxu0 0.0
      %1118 = vmatprep.subr.mxu0 0.0
      %1119 = vmatpush2.msra.mxu0 0.0
      %1120 = vmatprep.subr.mxu0 0.0
      %1121 = vmatpush2.msra.mxu0 0.0
      %1122 = vmatprep.subr.mxu0 0.0
      %1123 = vmatpush2.msra.mxu0 0.0
      %1124 = vmatprep.subr.mxu0 0.0
      %1125 = vmatpush2.msra.mxu0 0.0
      %1126 = vmatprep.subr.mxu0 0.0
      %1127 = vmatpush2.msra.mxu0 0.0
      %1128 = vmatprep.subr.mxu0 0.0
      %1129 = vmatpush2.msra.mxu0 0.0
      %1130 = vmatprep.subr.mxu0 0.0
      %1131 = vmatpush2.msra.mxu0 0.0
      %1132 = vmatprep.subr.mxu0 0.0
      %1133 = vmatpush2.msra.mxu0 0.0
      %1134 = vmatprep.subr.mxu0 0.0
      %1135 = vmatpush2.msra.mxu0 0.0
      %1136 = vmatprep.subr.mxu0 0.0
      %1137 = vmatpush2.msra.mxu0 0.0
      %1138 = vmatprep.subr.mxu0 0.0
      %1139 = vmatpush2.msra.mxu0 0.0
      %1140 = vmatprep.mubr.f32.mxu0 0.0
      %1141 = vmatmul.mubr.f32.gmra.mxu0 %v1074
      %v1142 = vpop.f32.mrf.mxu0
      %v1143 = vadd.f32 0.0, %v1142
      %v1144 = vpop.f32.mrf.mxu0
      %1145 = vdwg.mxu0
      %v1147 = vsel %vm436, %v1070, 0
      %1149 = vmatprep.subr.mxu0 0.0
      %1150 = vmatpush1.msra.mxu0 0.0
      %1151 = vmatprep.subr.mxu0 0.0
      %1152 = vmatpush1.msra.mxu0 0.0
      %1153 = vmatprep.subr.mxu0 0.0
      %1154 = vmatpush1.msra.mxu0 0.0
      %1155 = vmatprep.subr.mxu0 0.0
      %1156 = vmatpush1.msra.mxu0 0.0
      %1157 = vmatprep.subr.mxu0 0.0
      %1158 = vmatpush1.msra.mxu0 0.0
      %1159 = vmatprep.subr.mxu0 0.0
      %1160 = vmatpush1.msra.mxu0 0.0
      %1161 = vmatprep.subr.mxu0 0.0
      %1162 = vmatpush1.msra.mxu0 0.0
      %1163 = vmatprep.subr.mxu0 0.0
      %1164 = vmatpush1.msra.mxu0 0.0
      %1165 = vmatprep.subr.mxu0 0.0
      %1166 = vmatpush1.msra.mxu0 %v351
      %1167 = vmatprep.subr.mxu0 0.0
      %1168 = vmatpush1.msra.mxu0 %v350
      %1169 = vmatprep.subr.mxu0 0.0
      %1170 = vmatpush1.msra.mxu0 %v349
      %1171 = vmatprep.subr.mxu0 0.0
      %1172 = vmatpush1.msra.mxu0 %v348
      %1173 = vmatprep.subr.mxu0 0.0
      %1174 = vmatpush1.msra.mxu0 %v347
      %1175 = vmatprep.subr.mxu0 0.0
      %1176 = vmatpush1.msra.mxu0 %v346
      %1177 = vmatprep.subr.mxu0 0.0
      %1178 = vmatpush1.msra.mxu0 %v345
      %1179 = vmatprep.subr.mxu0 0.0
      %1180 = vmatpush1.msra.mxu0 %v344
      %1181 = vmatprep.subr.mxu0 0.0
      %1182 = vmatpush2.msra.mxu0 0.0
      %1183 = vmatprep.subr.mxu0 0.0
      %1184 = vmatpush2.msra.mxu0 0.0
      %1185 = vmatprep.subr.mxu0 0.0
      %1186 = vmatpush2.msra.mxu0 0.0
      %1187 = vmatprep.subr.mxu0 0.0
      %1188 = vmatpush2.msra.mxu0 0.0
      %1189 = vmatprep.subr.mxu0 0.0
      %1190 = vmatpush2.msra.mxu0 0.0
      %1191 = vmatprep.subr.mxu0 0.0
      %1192 = vmatpush2.msra.mxu0 0.0
      %1193 = vmatprep.subr.mxu0 0.0
      %1194 = vmatpush2.msra.mxu0 0.0
      %1195 = vmatprep.subr.mxu0 0.0
      %1196 = vmatpush2.msra.mxu0 0.0
      %1197 = vmatprep.subr.mxu0 0.0
      %1198 = vmatpush2.msra.mxu0 0.0
      %1199 = vmatprep.subr.mxu0 0.0
      %1200 = vmatpush2.msra.mxu0 0.0
      %1201 = vmatprep.subr.mxu0 0.0
      %1202 = vmatpush2.msra.mxu0 0.0
      %1203 = vmatprep.subr.mxu0 0.0
      %1204 = vmatpush2.msra.mxu0 0.0
      %1205 = vmatprep.subr.mxu0 0.0
      %1206 = vmatpush2.msra.mxu0 0.0
      %1207 = vmatprep.subr.mxu0 0.0
      %1208 = vmatpush2.msra.mxu0 0.0
      %1209 = vmatprep.subr.mxu0 0.0
      %1210 = vmatpush2.msra.mxu0 0.0
      %1211 = vmatprep.subr.mxu0 0.0
      %1212 = vmatpush2.msra.mxu0 0.0
      %1213 = vmatprep.mubr.f32.mxu0 0.0
      %1214 = vmatmul.mubr.f32.gmra.mxu0 %v1147
      %v1215 = vpop.f32.mrf.mxu0
      %v1216 = vadd.f32 %v1143, %v1215
      %v1217 = vpop.f32.mrf.mxu0
      %1218 = vdwg.mxu0
      %1219 = vrot.lane.b32.xlu0 %v1070, 64
      %v1220 = vpop.permute.xlu0 %1219
      %v1221 = vsel %vm512, %v1220, 0
      %1223 = vmatprep.subr.mxu0 0.0
      %1224 = vmatpush1.msra.mxu0 0.0
      %1225 = vmatprep.subr.mxu0 0.0
      %1226 = vmatpush1.msra.mxu0 0.0
      %1227 = vmatprep.subr.mxu0 0.0
      %1228 = vmatpush1.msra.mxu0 0.0
      %1229 = vmatprep.subr.mxu0 0.0
      %1230 = vmatpush1.msra.mxu0 0.0
      %1231 = vmatprep.subr.mxu0 0.0
      %1232 = vmatpush1.msra.mxu0 0.0
      %1233 = vmatprep.subr.mxu0 0.0
      %1234 = vmatpush1.msra.mxu0 0.0
      %1235 = vmatprep.subr.mxu0 0.0
      %1236 = vmatpush1.msra.mxu0 0.0
      %1237 = vmatprep.subr.mxu0 0.0
      %1238 = vmatpush1.msra.mxu0 0.0
      %1239 = vmatprep.subr.mxu0 0.0
      %1240 = vmatpush1.msra.mxu0 0.0
      %1241 = vmatprep.subr.mxu0 0.0
      %1242 = vmatpush1.msra.mxu0 0.0
      %1243 = vmatprep.subr.mxu0 0.0
      %1244 = vmatpush1.msra.mxu0 0.0
      %1245 = vmatprep.subr.mxu0 0.0
      %1246 = vmatpush1.msra.mxu0 0.0
      %1247 = vmatprep.subr.mxu0 0.0
      %1248 = vmatpush1.msra.mxu0 0.0
      %1249 = vmatprep.subr.mxu0 0.0
      %1250 = vmatpush1.msra.mxu0 0.0
      %1251 = vmatprep.subr.mxu0 0.0
      %1252 = vmatpush1.msra.mxu0 0.0
      %1253 = vmatprep.subr.mxu0 0.0
      %1254 = vmatpush1.msra.mxu0 %v1216
      %1255 = vmatprep.subr.mxu0 0.0
      %1256 = vmatpush2.msra.mxu0 0.0
      %1257 = vmatprep.subr.mxu0 0.0
      %1258 = vmatpush2.msra.mxu0 0.0
      %1259 = vmatprep.subr.mxu0 0.0
      %1260 = vmatpush2.msra.mxu0 0.0
      %1261 = vmatprep.subr.mxu0 0.0
      %1262 = vmatpush2.msra.mxu0 0.0
      %1263 = vmatprep.subr.mxu0 0.0
      %1264 = vmatpush2.msra.mxu0 0.0
      %1265 = vmatprep.subr.mxu0 0.0
      %1266 = vmatpush2.msra.mxu0 0.0
      %1267 = vmatprep.subr.mxu0 0.0
      %1268 = vmatpush2.msra.mxu0 0.0
      %1269 = vmatprep.subr.mxu0 0.0
      %1270 = vmatpush2.msra.mxu0 0.0
      %1271 = vmatprep.subr.mxu0 0.0
      %1272 = vmatpush2.msra.mxu0 0.0
      %1273 = vmatprep.subr.mxu0 0.0
      %1274 = vmatpush2.msra.mxu0 0.0
      %1275 = vmatprep.subr.mxu0 0.0
      %1276 = vmatpush2.msra.mxu0 0.0
      %1277 = vmatprep.subr.mxu0 0.0
      %1278 = vmatpush2.msra.mxu0 0.0
      %1279 = vmatprep.subr.mxu0 0.0
      %1280 = vmatpush2.msra.mxu0 0.0
      %1281 = vmatprep.subr.mxu0 0.0
      %1282 = vmatpush2.msra.mxu0 0.0
      %1283 = vmatprep.subr.mxu0 0.0
      %1284 = vmatpush2.msra.mxu0 0.0
      %1285 = vmatprep.subr.mxu0 0.0
      %1286 = vmatpush2.msra.mxu0 0.0
      %1287 = vmatprep.mubr.f32.mxu0 0.0
      %1288 = vmatmul.mubr.f32.gmra.mxu0 %v1221
      %v1289 = vpop.f32.mrf.mxu0
      %v1290 = vadd.f32 0.0, %v1289
      %v1291 = vpop.f32.mrf.mxu0
      %1292 = vdwg.mxu0
      %v1293 = vmax.f32 %v1290, 0.0
      %v1294 = vsel %vm586, %v1293, 0.0
      %v1295 = vrot.slane %v1294, 4
      %v1296 = vadd.f32 %v1294, %v1295
      %v1297 = vrot.slane %v1296, 2
      %v1298 = vadd.f32 %v1296, %v1297
      %v1299 = vrot.slane %v1298, 1
      %v1300 = vadd.f32 %v1298, %v1299
      %v1301 = vmul.f32 %v1300, %v594
      %v1302 = vadd.f32 %v1301, 1e-06
      %v1303 = vrcp.pop %v1302
      %v1304 = vmul.f32 %v1293, %v1303
      %v1305 = vmax.f32 %v1304, 0.0
      %v1306 = vand.u32 2147483647, %v1304
      %v1307 = vsub.f32 0.0, %v1306
      %v1308 = vmul.f32 %v1307, 1.442695
      %v1309 = vpow.pop %v1308
      %v1310 = vadd.f32 %v1309, 1.0
      %v1311 = vlog2.pop %v1310
      %v1312 = vmul.f32 %v1311, 0.6931472
      %v1313 = vmul.f32 -0.5, %v1309
      %v1314 = vadd.f32 %v1313, 1.0
      %v1315 = vmul.f32 %v1314, %v1309
      %v1316 = vand.u32 2147483647, %v1309
      %vm1317 = vcmp.lt.f32.partialorder %v1316, 0.0004427343
      %v1318 = vsel %vm1317, %v1315, %v1312
      %v1319 = vadd.f32 %v1305, %v1318
      %v1321 = vsel %vm586, %v1319, 0
      %1323 = vmatprep.subr.mxu0 0.0
      %1324 = vmatpush1.msra.mxu0 0.0
      %1325 = vmatprep.subr.mxu0 0.0
      %1326 = vmatpush1.msra.mxu0 0.0
      %1327 = vmatprep.subr.mxu0 0.0
      %1328 = vmatpush1.msra.mxu0 0.0
      %1329 = vmatprep.subr.mxu0 0.0
      %1330 = vmatpush1.msra.mxu0 0.0
      %1331 = vmatprep.subr.mxu0 0.0
      %1332 = vmatpush1.msra.mxu0 0.0
      %1333 = vmatprep.subr.mxu0 0.0
      %1334 = vmatpush1.msra.mxu0 0.0
      %1335 = vmatprep.subr.mxu0 0.0
      %1336 = vmatpush1.msra.mxu0 0.0
      %1337 = vmatprep.subr.mxu0 0.0
      %1338 = vmatpush1.msra.mxu0 0.0
      %1339 = vmatprep.subr.mxu0 0.0
      %1340 = vmatpush1.msra.mxu0 0.0
      %1341 = vmatprep.subr.mxu0 0.0
      %1342 = vmatpush1.msra.mxu0 0.0
      %1343 = vmatprep.subr.mxu0 0.0
      %1344 = vmatpush1.msra.mxu0 0.0
      %1345 = vmatprep.subr.mxu0 0.0
      %1346 = vmatpush1.msra.mxu0 0.0
      %1347 = vmatprep.subr.mxu0 0.0
      %1348 = vmatpush1.msra.mxu0 %v357
      %1349 = vmatprep.subr.mxu0 0.0
      %1350 = vmatpush1.msra.mxu0 %v356
      %1351 = vmatprep.subr.mxu0 0.0
      %1352 = vmatpush1.msra.mxu0 %v355
      %1353 = vmatprep.subr.mxu0 0.0
      %1354 = vmatpush1.msra.mxu0 %v354
      %1355 = vmatprep.subr.mxu0 0.0
      %1356 = vmatpush2.msra.mxu0 0.0
      %1357 = vmatprep.subr.mxu0 0.0
      %1358 = vmatpush2.msra.mxu0 0.0
      %1359 = vmatprep.subr.mxu0 0.0
      %1360 = vmatpush2.msra.mxu0 0.0
      %1361 = vmatprep.subr.mxu0 0.0
      %1362 = vmatpush2.msra.mxu0 0.0
      %1363 = vmatprep.subr.mxu0 0.0
      %1364 = vmatpush2.msra.mxu0 0.0
      %1365 = vmatprep.subr.mxu0 0.0
      %1366 = vmatpush2.msra.mxu0 0.0
      %1367 = vmatprep.subr.mxu0 0.0
      %1368 = vmatpush2.msra.mxu0 0.0
      %1369 = vmatprep.subr.mxu0 0.0
      %1370 = vmatpush2.msra.mxu0 0.0
      %1371 = vmatprep.subr.mxu0 0.0
      %1372 = vmatpush2.msra.mxu0 0.0
      %1373 = vmatprep.subr.mxu0 0.0
      %1374 = vmatpush2.msra.mxu0 0.0
      %1375 = vmatprep.subr.mxu0 0.0
      %1376 = vmatpush2.msra.mxu0 0.0
      %1377 = vmatprep.subr.mxu0 0.0
      %1378 = vmatpush2.msra.mxu0 0.0
      %1379 = vmatprep.subr.mxu0 0.0
      %1380 = vmatpush2.msra.mxu0 0.0
      %1381 = vmatprep.subr.mxu0 0.0
      %1382 = vmatpush2.msra.mxu0 0.0
      %1383 = vmatprep.subr.mxu0 0.0
      %1384 = vmatpush2.msra.mxu0 0.0
      %1385 = vmatprep.subr.mxu0 0.0
      %1386 = vmatpush2.msra.mxu0 0.0
      %1387 = vmatprep.mubr.f32.mxu0 0.0
      %1388 = vmatmul.mubr.f32.gmra.mxu0 %v1321
      %v1389 = vpop.f32.mrf.mxu0
      %v1390 = vadd.f32 %v618, %v1389
      %v1391 = vpop.f32.mrf.mxu0
      %1392 = vdwg.mxu0
      %v1393 = vxor.u32 %v1390, 2147483648
      %v1394 = vmul.f32 %v1393, 1.442695
      %v1395 = vpow.pop %v1394
      %v1396 = vadd.f32 %v1395, 1.0
      %v1397 = vrcp.pop %v1396
      %v1398 = vmul.f32 1.0, %v1397
      %v1399 = vmax.f32 %v1390, 0.0
      %v1400 = vmul.f32 %v1398, %v1062
      %1402 = vrot.lane.b32.xlu0 %v1399, 80
      %v1403 = vpop.permute.xlu0 %1402
      %v1405 = vmul.f32 %v1398, %v1403
      %1407 = vrot.lane.b32.xlu0 %v1405, 16
      %v1408 = vpop.permute.xlu0 %1407
      %v1410 = vadd.f32 %v1400, %v1408
      %v1411 = vtanh.pop %v1410
      %1413 = vrot.lane.b32.xlu0 %v1411, 16
      %v1414 = vpop.permute.xlu0 %1413
      %v1416 = vmul.f32 %v1398, %v1414
      %s1417 = scalar_lea.vmem %s324, 24
      %v1418 = vld [vmem:[%s1417] sm:$0xff]
      %1420 = vrot.lane.b32.xlu0 %v1416, 96
      %v1421 = vpop.permute.xlu0 %1420
      %v1422 = vsel %vm362, %v1421, 0
      %1424 = vmatprep.subr.mxu0 0.0
      %1425 = vmatpush1.msra.mxu0 0.0
      %1426 = vmatprep.subr.mxu0 0.0
      %1427 = vmatpush1.msra.mxu0 0.0
      %1428 = vmatprep.subr.mxu0 0.0
      %1429 = vmatpush1.msra.mxu0 0.0
      %1430 = vmatprep.subr.mxu0 0.0
      %1431 = vmatpush1.msra.mxu0 0.0
      %1432 = vmatprep.subr.mxu0 0.0
      %1433 = vmatpush1.msra.mxu0 0.0
      %1434 = vmatprep.subr.mxu0 0.0
      %1435 = vmatpush1.msra.mxu0 0.0
      %1436 = vmatprep.subr.mxu0 0.0
      %1437 = vmatpush1.msra.mxu0 0.0
      %1438 = vmatprep.subr.mxu0 0.0
      %1439 = vmatpush1.msra.mxu0 0.0
      %1440 = vmatprep.subr.mxu0 0.0
      %1441 = vmatpush1.msra.mxu0 0.0
      %1442 = vmatprep.subr.mxu0 0.0
      %1443 = vmatpush1.msra.mxu0 0.0
      %1444 = vmatprep.subr.mxu0 0.0
      %1445 = vmatpush1.msra.mxu0 0.0
      %1446 = vmatprep.subr.mxu0 0.0
      %1447 = vmatpush1.msra.mxu0 0.0
      %1448 = vmatprep.subr.mxu0 0.0
      %1449 = vmatpush1.msra.mxu0 0.0
      %1450 = vmatprep.subr.mxu0 0.0
      %1451 = vmatpush1.msra.mxu0 0.0
      %1452 = vmatprep.subr.mxu0 0.0
      %1453 = vmatpush1.msra.mxu0 %v353
      %1454 = vmatprep.subr.mxu0 0.0
      %1455 = vmatpush1.msra.mxu0 %v352
      %1456 = vmatprep.subr.mxu0 0.0
      %1457 = vmatpush2.msra.mxu0 0.0
      %1458 = vmatprep.subr.mxu0 0.0
      %1459 = vmatpush2.msra.mxu0 0.0
      %1460 = vmatprep.subr.mxu0 0.0
      %1461 = vmatpush2.msra.mxu0 0.0
      %1462 = vmatprep.subr.mxu0 0.0
      %1463 = vmatpush2.msra.mxu0 0.0
      %1464 = vmatprep.subr.mxu0 0.0
      %1465 = vmatpush2.msra.mxu0 0.0
      %1466 = vmatprep.subr.mxu0 0.0
      %1467 = vmatpush2.msra.mxu0 0.0
      %1468 = vmatprep.subr.mxu0 0.0
      %1469 = vmatpush2.msra.mxu0 0.0
      %1470 = vmatprep.subr.mxu0 0.0
      %1471 = vmatpush2.msra.mxu0 0.0
      %1472 = vmatprep.subr.mxu0 0.0
      %1473 = vmatpush2.msra.mxu0 0.0
      %1474 = vmatprep.subr.mxu0 0.0
      %1475 = vmatpush2.msra.mxu0 0.0
      %1476 = vmatprep.subr.mxu0 0.0
      %1477 = vmatpush2.msra.mxu0 0.0
      %1478 = vmatprep.subr.mxu0 0.0
      %1479 = vmatpush2.msra.mxu0 0.0
      %1480 = vmatprep.subr.mxu0 0.0
      %1481 = vmatpush2.msra.mxu0 0.0
      %1482 = vmatprep.subr.mxu0 0.0
      %1483 = vmatpush2.msra.mxu0 0.0
      %1484 = vmatprep.subr.mxu0 0.0
      %1485 = vmatpush2.msra.mxu0 0.0
      %1486 = vmatprep.subr.mxu0 0.0
      %1487 = vmatpush2.msra.mxu0 0.0
      %1488 = vmatprep.mubr.f32.mxu0 0.0
      %1489 = vmatmul.mubr.f32.gmra.mxu0 %v1422
      %v1490 = vpop.f32.mrf.mxu0
      %v1491 = vadd.f32 0.0, %v1490
      %v1492 = vpop.f32.mrf.mxu0
      %1493 = vdwg.mxu0
      %v1495 = vsel %vm436, %v1418, 0
      %1497 = vmatprep.subr.mxu0 0.0
      %1498 = vmatpush1.msra.mxu0 0.0
      %1499 = vmatprep.subr.mxu0 0.0
      %1500 = vmatpush1.msra.mxu0 0.0
      %1501 = vmatprep.subr.mxu0 0.0
      %1502 = vmatpush1.msra.mxu0 0.0
      %1503 = vmatprep.subr.mxu0 0.0
      %1504 = vmatpush1.msra.mxu0 0.0
      %1505 = vmatprep.subr.mxu0 0.0
      %1506 = vmatpush1.msra.mxu0 0.0
      %1507 = vmatprep.subr.mxu0 0.0
      %1508 = vmatpush1.msra.mxu0 0.0
      %1509 = vmatprep.subr.mxu0 0.0
      %1510 = vmatpush1.msra.mxu0 0.0
      %1511 = vmatprep.subr.mxu0 0.0
      %1512 = vmatpush1.msra.mxu0 0.0
      %1513 = vmatprep.subr.mxu0 0.0
      %1514 = vmatpush1.msra.mxu0 %v351
      %1515 = vmatprep.subr.mxu0 0.0
      %1516 = vmatpush1.msra.mxu0 %v350
      %1517 = vmatprep.subr.mxu0 0.0
      %1518 = vmatpush1.msra.mxu0 %v349
      %1519 = vmatprep.subr.mxu0 0.0
      %1520 = vmatpush1.msra.mxu0 %v348
      %1521 = vmatprep.subr.mxu0 0.0
      %1522 = vmatpush1.msra.mxu0 %v347
      %1523 = vmatprep.subr.mxu0 0.0
      %1524 = vmatpush1.msra.mxu0 %v346
      %1525 = vmatprep.subr.mxu0 0.0
      %1526 = vmatpush1.msra.mxu0 %v345
      %1527 = vmatprep.subr.mxu0 0.0
      %1528 = vmatpush1.msra.mxu0 %v344
      %1529 = vmatprep.subr.mxu0 0.0
      %1530 = vmatpush2.msra.mxu0 0.0
      %1531 = vmatprep.subr.mxu0 0.0
      %1532 = vmatpush2.msra.mxu0 0.0
      %1533 = vmatprep.subr.mxu0 0.0
      %1534 = vmatpush2.msra.mxu0 0.0
      %1535 = vmatprep.subr.mxu0 0.0
      %1536 = vmatpush2.msra.mxu0 0.0
      %1537 = vmatprep.subr.mxu0 0.0
      %1538 = vmatpush2.msra.mxu0 0.0
      %1539 = vmatprep.subr.mxu0 0.0
      %1540 = vmatpush2.msra.mxu0 0.0
      %1541 = vmatprep.subr.mxu0 0.0
      %1542 = vmatpush2.msra.mxu0 0.0
      %1543 = vmatprep.subr.mxu0 0.0
      %1544 = vmatpush2.msra.mxu0 0.0
      %1545 = vmatprep.subr.mxu0 0.0
      %1546 = vmatpush2.msra.mxu0 0.0
      %1547 = vmatprep.subr.mxu0 0.0
      %1548 = vmatpush2.msra.mxu0 0.0
      %1549 = vmatprep.subr.mxu0 0.0
      %1550 = vmatpush2.msra.mxu0 0.0
      %1551 = vmatprep.subr.mxu0 0.0
      %1552 = vmatpush2.msra.mxu0 0.0
      %1553 = vmatprep.subr.mxu0 0.0
      %1554 = vmatpush2.msra.mxu0 0.0
      %1555 = vmatprep.subr.mxu0 0.0
      %1556 = vmatpush2.msra.mxu0 0.0
      %1557 = vmatprep.subr.mxu0 0.0
      %1558 = vmatpush2.msra.mxu0 0.0
      %1559 = vmatprep.subr.mxu0 0.0
      %1560 = vmatpush2.msra.mxu0 0.0
      %1561 = vmatprep.mubr.f32.mxu0 0.0
      %1562 = vmatmul.mubr.f32.gmra.mxu0 %v1495
      %v1563 = vpop.f32.mrf.mxu0
      %v1564 = vadd.f32 %v1491, %v1563
      %v1565 = vpop.f32.mrf.mxu0
      %1566 = vdwg.mxu0
      %1567 = vrot.lane.b32.xlu0 %v1418, 64
      %v1568 = vpop.permute.xlu0 %1567
      %v1569 = vsel %vm512, %v1568, 0
      %1571 = vmatprep.subr.mxu0 0.0
      %1572 = vmatpush1.msra.mxu0 0.0
      %1573 = vmatprep.subr.mxu0 0.0
      %1574 = vmatpush1.msra.mxu0 0.0
      %1575 = vmatprep.subr.mxu0 0.0
      %1576 = vmatpush1.msra.mxu0 0.0
      %1577 = vmatprep.subr.mxu0 0.0
      %1578 = vmatpush1.msra.mxu0 0.0
      %1579 = vmatprep.subr.mxu0 0.0
      %1580 = vmatpush1.msra.mxu0 0.0
      %1581 = vmatprep.subr.mxu0 0.0
      %1582 = vmatpush1.msra.mxu0 0.0
      %1583 = vmatprep.subr.mxu0 0.0
      %1584 = vmatpush1.msra.mxu0 0.0
      %1585 = vmatprep.subr.mxu0 0.0
      %1586 = vmatpush1.msra.mxu0 0.0
      %1587 = vmatprep.subr.mxu0 0.0
      %1588 = vmatpush1.msra.mxu0 0.0
      %1589 = vmatprep.subr.mxu0 0.0
      %1590 = vmatpush1.msra.mxu0 0.0
      %1591 = vmatprep.subr.mxu0 0.0
      %1592 = vmatpush1.msra.mxu0 0.0
      %1593 = vmatprep.subr.mxu0 0.0
      %1594 = vmatpush1.msra.mxu0 0.0
      %1595 = vmatprep.subr.mxu0 0.0
      %1596 = vmatpush1.msra.mxu0 0.0
      %1597 = vmatprep.subr.mxu0 0.0
      %1598 = vmatpush1.msra.mxu0 0.0
      %1599 = vmatprep.subr.mxu0 0.0
      %1600 = vmatpush1.msra.mxu0 0.0
      %1601 = vmatprep.subr.mxu0 0.0
      %1602 = vmatpush1.msra.mxu0 %v1564
      %1603 = vmatprep.subr.mxu0 0.0
      %1604 = vmatpush2.msra.mxu0 0.0
      %1605 = vmatprep.subr.mxu0 0.0
      %1606 = vmatpush2.msra.mxu0 0.0
      %1607 = vmatprep.subr.mxu0 0.0
      %1608 = vmatpush2.msra.mxu0 0.0
      %1609 = vmatprep.subr.mxu0 0.0
      %1610 = vmatpush2.msra.mxu0 0.0
      %1611 = vmatprep.subr.mxu0 0.0
      %1612 = vmatpush2.msra.mxu0 0.0
      %1613 = vmatprep.subr.mxu0 0.0
      %1614 = vmatpush2.msra.mxu0 0.0
      %1615 = vmatprep.subr.mxu0 0.0
      %1616 = vmatpush2.msra.mxu0 0.0
      %1617 = vmatprep.subr.mxu0 0.0
      %1618 = vmatpush2.msra.mxu0 0.0
      %1619 = vmatprep.subr.mxu0 0.0
      %1620 = vmatpush2.msra.mxu0 0.0
      %1621 = vmatprep.subr.mxu0 0.0
      %1622 = vmatpush2.msra.mxu0 0.0
      %1623 = vmatprep.subr.mxu0 0.0
      %1624 = vmatpush2.msra.mxu0 0.0
      %1625 = vmatprep.subr.mxu0 0.0
      %1626 = vmatpush2.msra.mxu0 0.0
      %1627 = vmatprep.subr.mxu0 0.0
      %1628 = vmatpush2.msra.mxu0 0.0
      %1629 = vmatprep.subr.mxu0 0.0
      %1630 = vmatpush2.msra.mxu0 0.0
      %1631 = vmatprep.subr.mxu0 0.0
      %1632 = vmatpush2.msra.mxu0 0.0
      %1633 = vmatprep.subr.mxu0 0.0
      %1634 = vmatpush2.msra.mxu0 0.0
      %1635 = vmatprep.mubr.f32.mxu0 0.0
      %1636 = vmatmul.mubr.f32.gmra.mxu0 %v1569
      %v1637 = vpop.f32.mrf.mxu0
      %v1638 = vadd.f32 0.0, %v1637
      %v1639 = vpop.f32.mrf.mxu0
      %1640 = vdwg.mxu0
      %v1641 = vmax.f32 %v1638, 0.0
      %v1642 = vsel %vm586, %v1641, 0.0
      %v1643 = vrot.slane %v1642, 4
      %v1644 = vadd.f32 %v1642, %v1643
      %v1645 = vrot.slane %v1644, 2
      %v1646 = vadd.f32 %v1644, %v1645
      %v1647 = vrot.slane %v1646, 1
      %v1648 = vadd.f32 %v1646, %v1647
      %v1649 = vmul.f32 %v1648, %v594
      %v1650 = vadd.f32 %v1649, 1e-06
      %v1651 = vrcp.pop %v1650
      %v1652 = vmul.f32 %v1641, %v1651
      %v1653 = vmax.f32 %v1652, 0.0
      %v1654 = vand.u32 2147483647, %v1652
      %v1655 = vsub.f32 0.0, %v1654
      %v1656 = vmul.f32 %v1655, 1.442695
      %v1657 = vpow.pop %v1656
      %v1658 = vadd.f32 %v1657, 1.0
      %v1659 = vlog2.pop %v1658
      %v1660 = vmul.f32 %v1659, 0.6931472
      %v1661 = vmul.f32 -0.5, %v1657
      %v1662 = vadd.f32 %v1661, 1.0
      %v1663 = vmul.f32 %v1662, %v1657
      %v1664 = vand.u32 2147483647, %v1657
      %vm1665 = vcmp.lt.f32.partialorder %v1664, 0.0004427343
      %v1666 = vsel %vm1665, %v1663, %v1660
      %v1667 = vadd.f32 %v1653, %v1666
      %v1669 = vsel %vm586, %v1667, 0
      %1671 = vmatprep.subr.mxu0 0.0
      %1672 = vmatpush1.msra.mxu0 0.0
      %1673 = vmatprep.subr.mxu0 0.0
      %1674 = vmatpush1.msra.mxu0 0.0
      %1675 = vmatprep.subr.mxu0 0.0
      %1676 = vmatpush1.msra.mxu0 0.0
      %1677 = vmatprep.subr.mxu0 0.0
      %1678 = vmatpush1.msra.mxu0 0.0
      %1679 = vmatprep.subr.mxu0 0.0
      %1680 = vmatpush1.msra.mxu0 0.0
      %1681 = vmatprep.subr.mxu0 0.0
      %1682 = vmatpush1.msra.mxu0 0.0
      %1683 = vmatprep.subr.mxu0 0.0
      %1684 = vmatpush1.msra.mxu0 0.0
      %1685 = vmatprep.subr.mxu0 0.0
      %1686 = vmatpush1.msra.mxu0 0.0
      %1687 = vmatprep.subr.mxu0 0.0
      %1688 = vmatpush1.msra.mxu0 0.0
      %1689 = vmatprep.subr.mxu0 0.0
      %1690 = vmatpush1.msra.mxu0 0.0
      %1691 = vmatprep.subr.mxu0 0.0
      %1692 = vmatpush1.msra.mxu0 0.0
      %1693 = vmatprep.subr.mxu0 0.0
      %1694 = vmatpush1.msra.mxu0 0.0
      %1695 = vmatprep.subr.mxu0 0.0
      %1696 = vmatpush1.msra.mxu0 %v357
      %1697 = vmatprep.subr.mxu0 0.0
      %1698 = vmatpush1.msra.mxu0 %v356
      %1699 = vmatprep.subr.mxu0 0.0
      %1700 = vmatpush1.msra.mxu0 %v355
      %1701 = vmatprep.subr.mxu0 0.0
      %1702 = vmatpush1.msra.mxu0 %v354
      %1703 = vmatprep.subr.mxu0 0.0
      %1704 = vmatpush2.msra.mxu0 0.0
      %1705 = vmatprep.subr.mxu0 0.0
      %1706 = vmatpush2.msra.mxu0 0.0
      %1707 = vmatprep.subr.mxu0 0.0
      %1708 = vmatpush2.msra.mxu0 0.0
      %1709 = vmatprep.subr.mxu0 0.0
      %1710 = vmatpush2.msra.mxu0 0.0
      %1711 = vmatprep.subr.mxu0 0.0
      %1712 = vmatpush2.msra.mxu0 0.0
      %1713 = vmatprep.subr.mxu0 0.0
      %1714 = vmatpush2.msra.mxu0 0.0
      %1715 = vmatprep.subr.mxu0 0.0
      %1716 = vmatpush2.msra.mxu0 0.0
      %1717 = vmatprep.subr.mxu0 0.0
      %1718 = vmatpush2.msra.mxu0 0.0
      %1719 = vmatprep.subr.mxu0 0.0
      %1720 = vmatpush2.msra.mxu0 0.0
      %1721 = vmatprep.subr.mxu0 0.0
      %1722 = vmatpush2.msra.mxu0 0.0
      %1723 = vmatprep.subr.mxu0 0.0
      %1724 = vmatpush2.msra.mxu0 0.0
      %1725 = vmatprep.subr.mxu0 0.0
      %1726 = vmatpush2.msra.mxu0 0.0
      %1727 = vmatprep.subr.mxu0 0.0
      %1728 = vmatpush2.msra.mxu0 0.0
      %1729 = vmatprep.subr.mxu0 0.0
      %1730 = vmatpush2.msra.mxu0 0.0
      %1731 = vmatprep.subr.mxu0 0.0
      %1732 = vmatpush2.msra.mxu0 0.0
      %1733 = vmatprep.subr.mxu0 0.0
      %1734 = vmatpush2.msra.mxu0 0.0
      %1735 = vmatprep.mubr.f32.mxu0 0.0
      %1736 = vmatmul.mubr.f32.gmra.mxu0 %v1669
      %v1737 = vpop.f32.mrf.mxu0
      %v1738 = vadd.f32 %v618, %v1737
      %v1739 = vpop.f32.mrf.mxu0
      %1740 = vdwg.mxu0
      %v1741 = vxor.u32 %v1738, 2147483648
      %v1742 = vmul.f32 %v1741, 1.442695
      %v1743 = vpow.pop %v1742
      %v1744 = vadd.f32 %v1743, 1.0
      %v1745 = vrcp.pop %v1744
      %v1746 = vmul.f32 1.0, %v1745
      %v1747 = vmax.f32 %v1738, 0.0
      %v1748 = vmul.f32 %v1746, %v1410
      %1750 = vrot.lane.b32.xlu0 %v1747, 80
      %v1751 = vpop.permute.xlu0 %1750
      %v1753 = vmul.f32 %v1746, %v1751
      %1755 = vrot.lane.b32.xlu0 %v1753, 16
      %v1756 = vpop.permute.xlu0 %1755
      %v1758 = vadd.f32 %v1748, %v1756
      %v1759 = vtanh.pop %v1758
      %1761 = vrot.lane.b32.xlu0 %v1759, 16
      %v1762 = vpop.permute.xlu0 %1761
      %v1764 = vmul.f32 %v1746, %v1762
      %1766 = vrot.lane.b32.xlu0 %v1764, 96
      %v1767 = vpop.permute.xlu0 %1766
      %1769 = vst.msk [vmem:[%s342] sm:$0xff] %vm362, %v1767
      %s1770 = sadd.s32 %s22, %s23
      %p1771 = scmp.lt.s32.totalorder %s1770, 1
      %s1772 = scalar_select %p1771, %s1770, 1
      %s1773 = smul.addr %s1772, 8
      %s1774 = scalar_lea.vmem %s7, %s1773
      // Predicated region
      $region49: #{layer_forward.5} parent=47 // pred_check
        %p1775 = pneg %p216
      $region50: #{layer_forward.5} parent=47 // pred_check_branch
        %1777 = sbr.rel (%p1775) target = $region52
      $region51: #{layer_forward.5} parent=47 // pred_region
        %s1778 = sadd.s32 %s22, %s23
      $region52: #{layer_forward.5} parent=47 // pred_fallthru
        _
    $region48: #{layer_forward.5} parent=5 // pred_fallthru
      _
    %p1779 = scmp.le.s32.totalorder 2, %s13
    // Predicated region
    $region53: #{layer_forward.5} parent=5 // pred_check
      %p1780 = pneg %p1779
    $region54: #{layer_forward.5} parent=5 // pred_check_branch
      %1782 = sbr.rel (%p1780) target = $region56
    $region55: #{layer_forward.5} parent=5 // pred_region
      %s1783 = ssub.s32 %s13, 2
      // Predicated region
      $region57: #{layer_forward.5} parent=55 // pred_check
        %p1784 = pneg %p222
      $region58: #{layer_forward.5} parent=55 // pred_check_branch
        %1786 = sbr.rel (%p1784) target = $region60
      $region59: #{layer_forward.5} parent=55 // pred_region
        %s1787 = sadd.s32 %s24, %s25
        %p1788 = scmp.lt.s32.totalorder %s1787, 1
        %s1789 = scalar_select %p1788, %s1787, 1
        %s1790 = smul.addr %s1789, 8
        %s1791 = scalar_lea.vmem %s7, %s1790
      $region60: #{layer_forward.5} parent=55 // pred_fallthru
        _
    $region56: #{layer_forward.5} parent=5 // pred_fallthru
      _
  $region6: #{layer_forward.5} parent=0 // loop_footer
    %s17 = sadd.s32 1, %s13
  $region7: #{layer_forward.5} parent=0 // loop_footer_branch
    %12 = sbr.rel target = $region3
  $region8: #{layer_forward.5} parent=0 // loop_exit
    _

</llo_original>
